<compile_context>
chip_gen: v7x
topology: tpu7x:2x2x1
jax: 0.10.0
libtpu: 0.0.40
codegen_flags: <defaults>
</compile_context>

<pallas_src>
import functools

import jax
import jax.numpy as jnp
from jax import lax
from jax.experimental import pallas as pl
from jax.experimental.pallas import tpu as pltpu

KSIZE = 5
STRIDE = 2
C_MID = 32        # per-parity / per-layer channel slot width (covers cout = 16 / 32)
C_OUT_PAD = 128   # lane-dense width of the kernel's output slab


def conv2d_size_out(size, kernel_size=KSIZE, stride=STRIDE):
    return (size - (kernel_size - 1) - 1) // stride + 1


def _round_up(x, m):
    return ((x + m - 1) // m) * m


def _patch_pad(c_in):
    return _round_up(KSIZE * KSIZE * c_in, 128)


# ----------------------------------------------------------------------------
# Fused forward kernel (single pallas_call)
# ----------------------------------------------------------------------------
def _fused_forward(x_packed, w1p, b1p, w2p, b2p, w3p, b3p, whp, bhp,
                   *, h, w, n_pad):
    h1, w1 = conv2d_size_out(h), conv2d_size_out(w)
    h2, w2 = conv2d_size_out(h1), conv2d_size_out(w1)
    h3, w3 = conv2d_size_out(h2), conv2d_size_out(w2)
    sw1 = w1 // 2   # width of the s2d grid of conv1's output

    def kernel(x_ref, w1_ref, b1_ref, w2_ref, b2_ref, w3_ref, b3_ref,
               wh_ref, bh_ref, o_ref):
        # ---- conv1 + bn1 + relu : one full-K dot, output already in s2d layout ----
        a1 = jnp.dot(x_ref[...], w1_ref[...], preferred_element_type=jnp.float32)
        act1 = jnp.maximum(a1 + b1_ref[...], 0.0)          # [sh1*sw1*n_pad, 4*C_MID] f32

        # ---- conv2 + bn2 + relu : 9 s2d-window matmuls, each full 128-lane K ------
        acc = None
        for a in range(3):
            for b in range(3):
                rows = []
                for yy in range(h2):
                    start = ((yy + a) * sw1 + b) * n_pad
                    rows.append(act1[start:start + w2 * n_pad, :])
                lhs = jnp.concatenate(rows, axis=0) if h2 > 1 else rows[0]
                part = jnp.dot(lhs.astype(jnp.bfloat16), w2_ref[a * 3 + b],
                               preferred_element_type=jnp.float32)
                acc = part if acc is None else acc + part
        act2 = jnp.maximum(acc + b2_ref[...], 0.0)          # [h2*w2*n_pad, C_MID] f32

        # ---- conv3 + bn3 + relu : single full-K (25 taps x C_MID) dot --------------
        pos = []
        for yy in range(h3):
            for xx in range(w3):
                taps = []
                for i in range(KSIZE):
                    for j in range(KSIZE):
                        r = ((STRIDE * yy + i) * w2 + (STRIDE * xx + j)) * n_pad
                        taps.append(act2[r:r + n_pad, :])
                pos.append(jnp.concatenate(taps, axis=1))   # [n_pad, 25*C_MID]
        lhs3 = jnp.concatenate(pos, axis=0) if len(pos) > 1 else pos[0]
        a3 = jnp.dot(lhs3.astype(jnp.bfloat16), w3_ref[...],
                     preferred_element_type=jnp.float32)
        act3 = jnp.maximum(a3 + b3_ref[...], 0.0)           # [h3*w3*n_pad, C_MID] f32

        # ---- linear head (single dot here since h3*w3 == 1) ------------------------
        hacc = None
        for p in range(h3 * w3):
            part = jnp.dot(act3[p * n_pad:(p + 1) * n_pad, :].astype(jnp.bfloat16),
                           wh_ref[p], preferred_element_type=jnp.float32)
            hacc = part if hacc is None else hacc + part
        o_ref[...] = hacc + bh_ref[...]                     # [n_pad, 128] lane-dense

    args = (x_packed, w1p, b1p, w2p, b2p, w3p, b3p, whp, bhp)

    def _full_spec(arr):
        nd = arr.ndim
        return pl.BlockSpec(arr.shape, lambda i, _nd=nd: (0,) * _nd)

    return pl.pallas_call(
        kernel,
        out_shape=jax.ShapeDtypeStruct((n_pad, C_OUT_PAD), jnp.float32),
        grid=(1,),
        in_specs=[_full_spec(a) for a in args],
        out_specs=pl.BlockSpec((n_pad, C_OUT_PAD), lambda i: (0, 0)),
        compiler_params=pltpu.CompilerParams(
            dimension_semantics=("arbitrary",),
        ),
    )(*args)


# ----------------------------------------------------------------------------
# Layout plumbing (outside the kernel)
# ----------------------------------------------------------------------------
def pack_input(x_nchw, n_pad):
    """NCHW image -> conv1 im2col, ordered by the 2x2 s2d grid of conv1's output.

    Rows:  (y', x', n) over the (h1/2, w1/2) grid, batch padded to n_pad.
    Lanes: 4 blocks of PATCH_PAD, one per output parity (ph, pw); each block is the
           5x5xC input patch of conv1 output position (2y'+ph, 2x'+pw), order (i, j, c).
    """
    n, c, h, w = x_nchw.shape
    h1, w1 = conv2d_size_out(h), conv2d_size_out(w)
    sh1, sw1 = h1 // 2, w1 // 2
    ppad = _patch_pad(c)
    x = jnp.pad(x_nchw.astype(jnp.float32),
                ((0, n_pad - n), (0, 0), (0, 0), (0, 0)))
    taps = []
    for i in range(KSIZE):
        for j in range(KSIZE):
            taps.append(x[:, :, i::STRIDE, j::STRIDE][:, :, :h1, :w1])
    patches = jnp.stack(taps, axis=1)                        # [n, 25, c, h1, w1]
    p = patches.reshape(n_pad, KSIZE * KSIZE, c, sh1, 2, sw1, 2)
    p = jnp.transpose(p, (3, 5, 0, 4, 6, 1, 2))              # [sh1, sw1, n, ph, pw, 25, c]
    p = p.reshape(sh1 * sw1 * n_pad, 4, KSIZE * KSIZE * c)
    p = jnp.pad(p, ((0, 0), (0, 0), (0, ppad - KSIZE * KSIZE * c)))
    return p.reshape(sh1 * sw1 * n_pad, 4 * ppad).astype(jnp.bfloat16)


def prepare_params(params, h, w, outputs, eps=1e-5):
    """Fold BatchNorm into conv weights and pack into kernel layouts (runs once)."""
    h1, w1 = conv2d_size_out(h), conv2d_size_out(w)
    h2, w2 = conv2d_size_out(h1), conv2d_size_out(w1)
    h3, w3 = conv2d_size_out(h2), conv2d_size_out(w2)

    def fold(p):
        inv_std = 1.0 / jnp.sqrt(p["var"] + eps)
        scale = p["gamma"] * inv_std
        bias = p["beta"] + (p["b"] - p["mean"]) * scale
        wf = p["w"] * scale[:, None, None, None]             # [cout, cin, 5, 5]
        return wf.astype(jnp.float32), bias.astype(jnp.float32)

    # conv1: block-diagonal [4*PATCH_PAD, 4*C_MID]; a single dot then produces the
    # space-to-depth activation directly (lanes = (parity, channel)).
    w1f, bias1 = fold(params["conv1"])
    cout1, cin1 = w1f.shape[0], w1f.shape[1]
    ppad = _patch_pad(cin1)
    w1_core = jnp.transpose(w1f, (2, 3, 1, 0)).reshape(KSIZE * KSIZE * cin1, cout1)
    w1p = jnp.zeros((4 * ppad, 4 * C_MID), jnp.float32)
    for par in range(4):
        w1p = w1p.at[par * ppad:par * ppad + KSIZE * KSIZE * cin1,
                     par * C_MID:par * C_MID + cout1].set(w1_core)
    b1p = jnp.tile(jnp.pad(bias1, (0, C_MID - cout1))[None, :], (1, 4))   # [1, 128]

    # conv2: 9 s2d "window" weights, each contracting 4*C_MID = 128 lanes
    # (window (a,b), parity (ph,pw) <-> tap (2a+ph, 2b+pw); out-of-range taps are 0).
    w2f, bias2 = fold(params["conv2"])
    cout2, cin2 = w2f.shape[0], w2f.shape[1]
    w2p = jnp.zeros((9, 4 * C_MID, C_MID), jnp.float32)
    for a in range(3):
        for b in range(3):
            for ph in range(2):
                for pw in range(2):
                    i, j = 2 * a + ph, 2 * b + pw
                    if i < KSIZE and j < KSIZE:
                        w2p = w2p.at[a * 3 + b,
                                     (ph * 2 + pw) * C_MID:(ph * 2 + pw) * C_MID + cin2,
                                     :cout2].set(w2f[:, :, i, j].T)
    b2p = jnp.pad(bias2[None, :], ((0, 0), (0, C_MID - cout2)))

    # conv3: single full-K weight [25*C_MID, C_MID]; im2col lane order is (i, j, c).
    w3f, bias3 = fold(params["conv3"])
    cout3, cin3 = w3f.shape[0], w3f.shape[1]
    w3t = jnp.transpose(w3f, (2, 3, 1, 0))                   # [5, 5, cin, cout]
    w3t = jnp.pad(w3t, ((0, 0), (0, 0), (0, C_MID - cin3), (0, C_MID - cout3)))
    w3p = w3t.reshape(KSIZE * KSIZE * C_MID, C_MID)
    b3p = jnp.pad(bias3[None, :], ((0, 0), (0, C_MID - cout3)))

    # head: PyTorch flattens (C, H, W) -> one (C_MID, 128) slice per spatial position.
    hw = params["head"]["w"].astype(jnp.float32)             # [outputs, cout3*h3*w3]
    hb = params["head"]["b"].astype(jnp.float32)
    hw_r = hw.reshape(outputs, cout3, h3 * w3)
    whp = jnp.zeros((h3 * w3, C_MID, C_OUT_PAD), jnp.float32)
    whp = whp.at[:, :cout3, :outputs].set(jnp.transpose(hw_r, (2, 1, 0)))
    bhp = jnp.zeros((1, C_OUT_PAD), jnp.float32).at[0, :outputs].set(hb)

    return {"w1": w1p.astype(jnp.bfloat16), "b1": b1p,
            "w2": w2p.astype(jnp.bfloat16), "b2": b2p,
            "w3": w3p.astype(jnp.bfloat16), "b3": b3p,
            "wh": whp.astype(jnp.bfloat16), "bh": bhp}


def value_net_forward(packed, x_nchw, *, n_outputs):
    n, c, h, w = x_nchw.shape
    h1, w1 = conv2d_size_out(h), conv2d_size_out(w)
    assert h1 % 2 == 0 and w1 % 2 == 0, "conv1 output H/W must be even for s2d packing"
    n_pad = _round_up(n, 8)
    x_packed = pack_input(x_nchw, n_pad)
    out = _fused_forward(x_packed, packed["w1"], packed["b1"], packed["w2"],
                         packed["b2"], packed["w3"], packed["b3"],
                         packed["wh"], packed["bh"],
                         h=h, w=w, n_pad=n_pad)
    # Padded batch rows (n..n_pad) carry bias garbage but never mix with real rows
    # (all contractions are over channels/taps); slice them off here.
    return out[:n, :n_outputs]


# ----------------------------------------------------------------------------
# Deterministic synthetic parameters + pure-JAX reference
# ----------------------------------------------------------------------------
def init_params(key, h, w, outputs):
    convw = conv2d_size_out(conv2d_size_out(conv2d_size_out(w)))
    convh = conv2d_size_out(conv2d_size_out(conv2d_size_out(h)))
    linear_input_size = convw * convh * 32

    def conv_bn(key, cin, cout, k=5):
        ks = jax.random.split(key, 6)
        return {
            "w": 0.05 * jax.random.normal(ks[0], (cout, cin, k, k), jnp.float32),
            "b": 0.05 * jax.random.normal(ks[1], (cout,), jnp.float32),
            "gamma": 1.0 + 0.1 * jax.random.normal(ks[2], (cout,), jnp.float32),
            "beta": 0.1 * jax.random.normal(ks[3], (cout,), jnp.float32),
            "mean": 0.1 * jax.random.normal(ks[4], (cout,), jnp.float32),
            "var": 1.0 + 0.1 * jnp.abs(jax.random.normal(ks[5], (cout,), jnp.float32)),
        }

    k1, k2, k3, k4, k5 = jax.random.split(key, 5)
    return {
        "conv1": conv_bn(k1, 3, 16),
        "conv2": conv_bn(k2, 16, 32),
        "conv3": conv_bn(k3, 32, 32),
        "head": {
            "w": 0.05 * jax.random.normal(k4, (outputs, linear_input_size), jnp.float32),
            "b": 0.05 * jax.random.normal(k5, (outputs,), jnp.float32),
        },
    }


def reference_forward(params, x_nchw, eps=1e-5):
    def block(x, p):
        y = lax.conv_general_dilated(
            x, p["w"], window_strides=(STRIDE, STRIDE), padding="VALID",
            dimension_numbers=("NCHW", "OIHW", "NCHW"),
            precision=lax.Precision.HIGHEST)
        y = y + p["b"][None, :, None, None]
        inv_std = 1.0 / jnp.sqrt(p["var"] + eps)
        scale = p["gamma"] * inv_std
        shift = p["beta"] - p["mean"] * scale
        y = y * scale[None, :, None, None] + shift[None, :, None, None]
        return jnp.maximum(y, 0.0)

    x = block(x_nchw, params["conv1"])
    x = block(x, params["conv2"])
    x = block(x, params["conv3"])
    flat = x.reshape(x.shape[0], -1)
    return jnp.dot(flat, params["head"]["w"].T,
                   precision=lax.Precision.HIGHEST) + params["head"]["b"]


if __name__ == "__main__":
    H, W, OUTPUTS, BATCH = 32, 32, 4, 2
    key = jax.random.PRNGKey(0)
    pkey, xkey = jax.random.split(key)
    params = init_params(pkey, H, W, OUTPUTS)
    packed = prepare_params(params, H, W, OUTPUTS)   # folded/packed once, outside forward
    x = jax.random.normal(xkey, (BATCH, 3, H, W), jnp.float32)   # NCHW like PyTorch

    fwd = jax.jit(functools.partial(value_net_forward, n_outputs=OUTPUTS))
    out = jax.block_until_ready(fwd(packed, x))

    assert out.shape == (BATCH, OUTPUTS), out.shape
    assert out.dtype == jnp.float32

    ref = reference_forward(params, x)
    assert jnp.allclose(out, ref, rtol=1e-2, atol=1e-2), (out, ref)
    print("KERNEL_OK")
</pallas_src>

<mosaic_0001>
module attributes {stable_mosaic.version = 11 : i64} {
  func.func @kernel(%arg0: i32, %arg1: memref<392x512xbf16, #tpu.memory_space<vmem>>, %arg2: memref<512x128xbf16, #tpu.memory_space<vmem>>, %arg3: memref<1x128xf32, #tpu.memory_space<vmem>>, %arg4: memref<9x128x32xbf16, #tpu.memory_space<vmem>>, %arg5: memref<1x32xf32, #tpu.memory_space<vmem>>, %arg6: memref<800x32xbf16, #tpu.memory_space<vmem>>, %arg7: memref<1x32xf32, #tpu.memory_space<vmem>>, %arg8: memref<1x32x128xbf16, #tpu.memory_space<vmem>>, %arg9: memref<1x128xf32, #tpu.memory_space<vmem>>, %arg10: memref<8x128xf32, #tpu.memory_space<vmem>>) attributes {dimension_semantics = [#tpu.dimension_semantics<arbitrary>], iteration_bounds = array<i64: 1>, scalar_prefetch = 0 : i64, scratch_operands = 0 : i64, tpu.core_type = #tpu.core_type<tc>, window_params = [{pipeline_mode = #tpu.pipeline_mode<synchronous>, transform_indices = @transform_0, window_bounds = array<i64: 392, 512>}, {pipeline_mode = #tpu.pipeline_mode<synchronous>, transform_indices = @transform_1, window_bounds = array<i64: 512, 128>}, {pipeline_mode = #tpu.pipeline_mode<synchronous>, transform_indices = @transform_2, window_bounds = array<i64: 1, 128>}, {pipeline_mode = #tpu.pipeline_mode<synchronous>, transform_indices = @transform_3, window_bounds = array<i64: 9, 128, 32>}, {pipeline_mode = #tpu.pipeline_mode<synchronous>, transform_indices = @transform_4, window_bounds = array<i64: 1, 32>}, {pipeline_mode = #tpu.pipeline_mode<synchronous>, transform_indices = @transform_5, window_bounds = array<i64: 800, 32>}, {pipeline_mode = #tpu.pipeline_mode<synchronous>, transform_indices = @transform_6, window_bounds = array<i64: 1, 32>}, {pipeline_mode = #tpu.pipeline_mode<synchronous>, transform_indices = @transform_7, window_bounds = array<i64: 1, 32, 128>}, {pipeline_mode = #tpu.pipeline_mode<synchronous>, transform_indices = @transform_8, window_bounds = array<i64: 1, 128>}, {pipeline_mode = #tpu.pipeline_mode<synchronous>, transform_indices = @transform_9, window_bounds = array<i64: 8, 128>}]} {
    %c0 = arith.constant 0 : index
    %c0_0 = arith.constant 0 : index
    %0 = vector.load %arg1[%c0, %c0_0] : memref<392x512xbf16, #tpu.memory_space<vmem>>, vector<392x512xbf16>
    %c0_1 = arith.constant 0 : index
    %c0_2 = arith.constant 0 : index
    %1 = vector.load %arg2[%c0_1, %c0_2] : memref<512x128xbf16, #tpu.memory_space<vmem>>, vector<512x128xbf16>
    %cst = arith.constant dense<0.000000e+00> : vector<392x128xf32>
    %2 = tpu.matmul %0, %1, %cst {dimension_numbers = #tpu.dot_dimension_numbers<[1], [0], [0], [1], [0, 0, 1, 1], [], []>} : vector<392x512xbf16>, vector<512x128xbf16>, vector<392x128xf32> -> vector<392x128xf32>
    %c0_3 = arith.constant 0 : index
    %c0_4 = arith.constant 0 : index
    %3 = vector.load %arg3[%c0_3, %c0_4] : memref<1x128xf32, #tpu.memory_space<vmem>>, vector<1x128xf32>
    %4 = vector.broadcast %3 : vector<1x128xf32> to vector<392x128xf32>
    %5 = arith.addf %2, %4 : vector<392x128xf32>
    %cst_5 = arith.constant 0.000000e+00 : f32
    %6 = vector.broadcast %cst_5 : f32 to vector<392x128xf32>
    %7 = arith.maximumf %5, %6 : vector<392x128xf32>
    %8 = vector.extract_strided_slice %7 {offsets = [0, 0], sizes = [40, 128], strides = [1, 1]} : vector<392x128xf32> to vector<40x128xf32>
    %9 = vector.extract_strided_slice %7 {offsets = [56, 0], sizes = [40, 128], strides = [1, 1]} : vector<392x128xf32> to vector<40x128xf32>
    %10 = vector.extract_strided_slice %7 {offsets = [112, 0], sizes = [40, 128], strides = [1, 1]} : vector<392x128xf32> to vector<40x128xf32>
    %11 = vector.extract_strided_slice %7 {offsets = [168, 0], sizes = [40, 128], strides = [1, 1]} : vector<392x128xf32> to vector<40x128xf32>
    %12 = vector.extract_strided_slice %7 {offsets = [224, 0], sizes = [40, 128], strides = [1, 1]} : vector<392x128xf32> to vector<40x128xf32>
    %13 = tpu.concatenate %8, %9, %10, %11, %12 in 0 : vector<40x128xf32>, vector<40x128xf32>, vector<40x128xf32>, vector<40x128xf32>, vector<40x128xf32> -> vector<200x128xf32>
    %14 = arith.truncf %13 : vector<200x128xf32> to vector<200x128xbf16>
    %c0_6 = arith.constant 0 : index
    %c0_7 = arith.constant 0 : index
    %c0_8 = arith.constant 0 : index
    %15 = vector.load %arg4[%c0_6, %c0_7, %c0_8] : memref<9x128x32xbf16, #tpu.memory_space<vmem>>, vector<1x128x32xbf16>
    %16 = vector.shape_cast %15 : vector<1x128x32xbf16> to vector<128x32xbf16>
    %cst_9 = arith.constant dense<0.000000e+00> : vector<200x32xf32>
    %17 = tpu.matmul %14, %16, %cst_9 {dimension_numbers = #tpu.dot_dimension_numbers<[1], [0], [0], [1], [0, 0, 1, 1], [], []>} : vector<200x128xbf16>, vector<128x32xbf16>, vector<200x32xf32> -> vector<200x32xf32>
    %18 = vector.extract_strided_slice %7 {offsets = [8, 0], sizes = [40, 128], strides = [1, 1]} : vector<392x128xf32> to vector<40x128xf32>
    %19 = vector.extract_strided_slice %7 {offsets = [64, 0], sizes = [40, 128], strides = [1, 1]} : vector<392x128xf32> to vector<40x128xf32>
    %20 = vector.extract_strided_slice %7 {offsets = [120, 0], sizes = [40, 128], strides = [1, 1]} : vector<392x128xf32> to vector<40x128xf32>
    %21 = vector.extract_strided_slice %7 {offsets = [176, 0], sizes = [40, 128], strides = [1, 1]} : vector<392x128xf32> to vector<40x128xf32>
    %22 = vector.extract_strided_slice %7 {offsets = [232, 0], sizes = [40, 128], strides = [1, 1]} : vector<392x128xf32> to vector<40x128xf32>
    %23 = tpu.concatenate %18, %19, %20, %21, %22 in 0 : vector<40x128xf32>, vector<40x128xf32>, vector<40x128xf32>, vector<40x128xf32>, vector<40x128xf32> -> vector<200x128xf32>
    %24 = arith.truncf %23 : vector<200x128xf32> to vector<200x128xbf16>
    %c1 = arith.constant 1 : index
    %c0_10 = arith.constant 0 : index
    %c0_11 = arith.constant 0 : index
    %25 = vector.load %arg4[%c1, %c0_10, %c0_11] : memref<9x128x32xbf16, #tpu.memory_space<vmem>>, vector<1x128x32xbf16>
    %26 = vector.shape_cast %25 : vector<1x128x32xbf16> to vector<128x32xbf16>
    %cst_12 = arith.constant dense<0.000000e+00> : vector<200x32xf32>
    %27 = tpu.matmul %24, %26, %cst_12 {dimension_numbers = #tpu.dot_dimension_numbers<[1], [0], [0], [1], [0, 0, 1, 1], [], []>} : vector<200x128xbf16>, vector<128x32xbf16>, vector<200x32xf32> -> vector<200x32xf32>
    %28 = arith.addf %17, %27 : vector<200x32xf32>
    %29 = vector.extract_strided_slice %7 {offsets = [16, 0], sizes = [40, 128], strides = [1, 1]} : vector<392x128xf32> to vector<40x128xf32>
    %30 = vector.extract_strided_slice %7 {offsets = [72, 0], sizes = [40, 128], strides = [1, 1]} : vector<392x128xf32> to vector<40x128xf32>
    %31 = vector.extract_strided_slice %7 {offsets = [128, 0], sizes = [40, 128], strides = [1, 1]} : vector<392x128xf32> to vector<40x128xf32>
    %32 = vector.extract_strided_slice %7 {offsets = [184, 0], sizes = [40, 128], strides = [1, 1]} : vector<392x128xf32> to vector<40x128xf32>
    %33 = vector.extract_strided_slice %7 {offsets = [240, 0], sizes = [40, 128], strides = [1, 1]} : vector<392x128xf32> to vector<40x128xf32>
    %34 = tpu.concatenate %29, %30, %31, %32, %33 in 0 : vector<40x128xf32>, vector<40x128xf32>, vector<40x128xf32>, vector<40x128xf32>, vector<40x128xf32> -> vector<200x128xf32>
    %35 = arith.truncf %34 : vector<200x128xf32> to vector<200x128xbf16>
    %c2 = arith.constant 2 : index
    %c0_13 = arith.constant 0 : index
    %c0_14 = arith.constant 0 : index
    %36 = vector.load %arg4[%c2, %c0_13, %c0_14] : memref<9x128x32xbf16, #tpu.memory_space<vmem>>, vector<1x128x32xbf16>
    %37 = vector.shape_cast %36 : vector<1x128x32xbf16> to vector<128x32xbf16>
    %cst_15 = arith.constant dense<0.000000e+00> : vector<200x32xf32>
    %38 = tpu.matmul %35, %37, %cst_15 {dimension_numbers = #tpu.dot_dimension_numbers<[1], [0], [0], [1], [0, 0, 1, 1], [], []>} : vector<200x128xbf16>, vector<128x32xbf16>, vector<200x32xf32> -> vector<200x32xf32>
    %39 = arith.addf %28, %38 : vector<200x32xf32>
    %40 = vector.extract_strided_slice %7 {offsets = [56, 0], sizes = [40, 128], strides = [1, 1]} : vector<392x128xf32> to vector<40x128xf32>
    %41 = vector.extract_strided_slice %7 {offsets = [112, 0], sizes = [40, 128], strides = [1, 1]} : vector<392x128xf32> to vector<40x128xf32>
    %42 = vector.extract_strided_slice %7 {offsets = [168, 0], sizes = [40, 128], strides = [1, 1]} : vector<392x128xf32> to vector<40x128xf32>
    %43 = vector.extract_strided_slice %7 {offsets = [224, 0], sizes = [40, 128], strides = [1, 1]} : vector<392x128xf32> to vector<40x128xf32>
    %44 = vector.extract_strided_slice %7 {offsets = [280, 0], sizes = [40, 128], strides = [1, 1]} : vector<392x128xf32> to vector<40x128xf32>
    %45 = tpu.concatenate %40, %41, %42, %43, %44 in 0 : vector<40x128xf32>, vector<40x128xf32>, vector<40x128xf32>, vector<40x128xf32>, vector<40x128xf32> -> vector<200x128xf32>
    %46 = arith.truncf %45 : vector<200x128xf32> to vector<200x128xbf16>
    %c3 = arith.constant 3 : index
    %c0_16 = arith.constant 0 : index
    %c0_17 = arith.constant 0 : index
    %47 = vector.load %arg4[%c3, %c0_16, %c0_17] : memref<9x128x32xbf16, #tpu.memory_space<vmem>>, vector<1x128x32xbf16>
    %48 = vector.shape_cast %47 : vector<1x128x32xbf16> to vector<128x32xbf16>
    %cst_18 = arith.constant dense<0.000000e+00> : vector<200x32xf32>
    %49 = tpu.matmul %46, %48, %cst_18 {dimension_numbers = #tpu.dot_dimension_numbers<[1], [0], [0], [1], [0, 0, 1, 1], [], []>} : vector<200x128xbf16>, vector<128x32xbf16>, vector<200x32xf32> -> vector<200x32xf32>
    %50 = arith.addf %39, %49 : vector<200x32xf32>
    %51 = vector.extract_strided_slice %7 {offsets = [64, 0], sizes = [40, 128], strides = [1, 1]} : vector<392x128xf32> to vector<40x128xf32>
    %52 = vector.extract_strided_slice %7 {offsets = [120, 0], sizes = [40, 128], strides = [1, 1]} : vector<392x128xf32> to vector<40x128xf32>
    %53 = vector.extract_strided_slice %7 {offsets = [176, 0], sizes = [40, 128], strides = [1, 1]} : vector<392x128xf32> to vector<40x128xf32>
    %54 = vector.extract_strided_slice %7 {offsets = [232, 0], sizes = [40, 128], strides = [1, 1]} : vector<392x128xf32> to vector<40x128xf32>
    %55 = vector.extract_strided_slice %7 {offsets = [288, 0], sizes = [40, 128], strides = [1, 1]} : vector<392x128xf32> to vector<40x128xf32>
    %56 = tpu.concatenate %51, %52, %53, %54, %55 in 0 : vector<40x128xf32>, vector<40x128xf32>, vector<40x128xf32>, vector<40x128xf32>, vector<40x128xf32> -> vector<200x128xf32>
    %57 = arith.truncf %56 : vector<200x128xf32> to vector<200x128xbf16>
    %c4 = arith.constant 4 : index
    %c0_19 = arith.constant 0 : index
    %c0_20 = arith.constant 0 : index
    %58 = vector.load %arg4[%c4, %c0_19, %c0_20] : memref<9x128x32xbf16, #tpu.memory_space<vmem>>, vector<1x128x32xbf16>
    %59 = vector.shape_cast %58 : vector<1x128x32xbf16> to vector<128x32xbf16>
    %cst_21 = arith.constant dense<0.000000e+00> : vector<200x32xf32>
    %60 = tpu.matmul %57, %59, %cst_21 {dimension_numbers = #tpu.dot_dimension_numbers<[1], [0], [0], [1], [0, 0, 1, 1], [], []>} : vector<200x128xbf16>, vector<128x32xbf16>, vector<200x32xf32> -> vector<200x32xf32>
    %61 = arith.addf %50, %60 : vector<200x32xf32>
    %62 = vector.extract_strided_slice %7 {offsets = [72, 0], sizes = [40, 128], strides = [1, 1]} : vector<392x128xf32> to vector<40x128xf32>
    %63 = vector.extract_strided_slice %7 {offsets = [128, 0], sizes = [40, 128], strides = [1, 1]} : vector<392x128xf32> to vector<40x128xf32>
    %64 = vector.extract_strided_slice %7 {offsets = [184, 0], sizes = [40, 128], strides = [1, 1]} : vector<392x128xf32> to vector<40x128xf32>
    %65 = vector.extract_strided_slice %7 {offsets = [240, 0], sizes = [40, 128], strides = [1, 1]} : vector<392x128xf32> to vector<40x128xf32>
    %66 = vector.extract_strided_slice %7 {offsets = [296, 0], sizes = [40, 128], strides = [1, 1]} : vector<392x128xf32> to vector<40x128xf32>
    %67 = tpu.concatenate %62, %63, %64, %65, %66 in 0 : vector<40x128xf32>, vector<40x128xf32>, vector<40x128xf32>, vector<40x128xf32>, vector<40x128xf32> -> vector<200x128xf32>
    %68 = arith.truncf %67 : vector<200x128xf32> to vector<200x128xbf16>
    %c5 = arith.constant 5 : index
    %c0_22 = arith.constant 0 : index
    %c0_23 = arith.constant 0 : index
    %69 = vector.load %arg4[%c5, %c0_22, %c0_23] : memref<9x128x32xbf16, #tpu.memory_space<vmem>>, vector<1x128x32xbf16>
    %70 = vector.shape_cast %69 : vector<1x128x32xbf16> to vector<128x32xbf16>
    %cst_24 = arith.constant dense<0.000000e+00> : vector<200x32xf32>
    %71 = tpu.matmul %68, %70, %cst_24 {dimension_numbers = #tpu.dot_dimension_numbers<[1], [0], [0], [1], [0, 0, 1, 1], [], []>} : vector<200x128xbf16>, vector<128x32xbf16>, vector<200x32xf32> -> vector<200x32xf32>
    %72 = arith.addf %61, %71 : vector<200x32xf32>
    %73 = vector.extract_strided_slice %7 {offsets = [112, 0], sizes = [40, 128], strides = [1, 1]} : vector<392x128xf32> to vector<40x128xf32>
    %74 = vector.extract_strided_slice %7 {offsets = [168, 0], sizes = [40, 128], strides = [1, 1]} : vector<392x128xf32> to vector<40x128xf32>
    %75 = vector.extract_strided_slice %7 {offsets = [224, 0], sizes = [40, 128], strides = [1, 1]} : vector<392x128xf32> to vector<40x128xf32>
    %76 = vector.extract_strided_slice %7 {offsets = [280, 0], sizes = [40, 128], strides = [1, 1]} : vector<392x128xf32> to vector<40x128xf32>
    %77 = vector.extract_strided_slice %7 {offsets = [336, 0], sizes = [40, 128], strides = [1, 1]} : vector<392x128xf32> to vector<40x128xf32>
    %78 = tpu.concatenate %73, %74, %75, %76, %77 in 0 : vector<40x128xf32>, vector<40x128xf32>, vector<40x128xf32>, vector<40x128xf32>, vector<40x128xf32> -> vector<200x128xf32>
    %79 = arith.truncf %78 : vector<200x128xf32> to vector<200x128xbf16>
    %c6 = arith.constant 6 : index
    %c0_25 = arith.constant 0 : index
    %c0_26 = arith.constant 0 : index
    %80 = vector.load %arg4[%c6, %c0_25, %c0_26] : memref<9x128x32xbf16, #tpu.memory_space<vmem>>, vector<1x128x32xbf16>
    %81 = vector.shape_cast %80 : vector<1x128x32xbf16> to vector<128x32xbf16>
    %cst_27 = arith.constant dense<0.000000e+00> : vector<200x32xf32>
    %82 = tpu.matmul %79, %81, %cst_27 {dimension_numbers = #tpu.dot_dimension_numbers<[1], [0], [0], [1], [0, 0, 1, 1], [], []>} : vector<200x128xbf16>, vector<128x32xbf16>, vector<200x32xf32> -> vector<200x32xf32>
    %83 = arith.addf %72, %82 : vector<200x32xf32>
    %84 = vector.extract_strided_slice %7 {offsets = [120, 0], sizes = [40, 128], strides = [1, 1]} : vector<392x128xf32> to vector<40x128xf32>
    %85 = vector.extract_strided_slice %7 {offsets = [176, 0], sizes = [40, 128], strides = [1, 1]} : vector<392x128xf32> to vector<40x128xf32>
    %86 = vector.extract_strided_slice %7 {offsets = [232, 0], sizes = [40, 128], strides = [1, 1]} : vector<392x128xf32> to vector<40x128xf32>
    %87 = vector.extract_strided_slice %7 {offsets = [288, 0], sizes = [40, 128], strides = [1, 1]} : vector<392x128xf32> to vector<40x128xf32>
    %88 = vector.extract_strided_slice %7 {offsets = [344, 0], sizes = [40, 128], strides = [1, 1]} : vector<392x128xf32> to vector<40x128xf32>
    %89 = tpu.concatenate %84, %85, %86, %87, %88 in 0 : vector<40x128xf32>, vector<40x128xf32>, vector<40x128xf32>, vector<40x128xf32>, vector<40x128xf32> -> vector<200x128xf32>
    %90 = arith.truncf %89 : vector<200x128xf32> to vector<200x128xbf16>
    %c7 = arith.constant 7 : index
    %c0_28 = arith.constant 0 : index
    %c0_29 = arith.constant 0 : index
    %91 = vector.load %arg4[%c7, %c0_28, %c0_29] : memref<9x128x32xbf16, #tpu.memory_space<vmem>>, vector<1x128x32xbf16>
    %92 = vector.shape_cast %91 : vector<1x128x32xbf16> to vector<128x32xbf16>
    %cst_30 = arith.constant dense<0.000000e+00> : vector<200x32xf32>
    %93 = tpu.matmul %90, %92, %cst_30 {dimension_numbers = #tpu.dot_dimension_numbers<[1], [0], [0], [1], [0, 0, 1, 1], [], []>} : vector<200x128xbf16>, vector<128x32xbf16>, vector<200x32xf32> -> vector<200x32xf32>
    %94 = arith.addf %83, %93 : vector<200x32xf32>
    %95 = vector.extract_strided_slice %7 {offsets = [128, 0], sizes = [40, 128], strides = [1, 1]} : vector<392x128xf32> to vector<40x128xf32>
    %96 = vector.extract_strided_slice %7 {offsets = [184, 0], sizes = [40, 128], strides = [1, 1]} : vector<392x128xf32> to vector<40x128xf32>
    %97 = vector.extract_strided_slice %7 {offsets = [240, 0], sizes = [40, 128], strides = [1, 1]} : vector<392x128xf32> to vector<40x128xf32>
    %98 = vector.extract_strided_slice %7 {offsets = [296, 0], sizes = [40, 128], strides = [1, 1]} : vector<392x128xf32> to vector<40x128xf32>
    %99 = vector.extract_strided_slice %7 {offsets = [352, 0], sizes = [40, 128], strides = [1, 1]} : vector<392x128xf32> to vector<40x128xf32>
    %100 = tpu.concatenate %95, %96, %97, %98, %99 in 0 : vector<40x128xf32>, vector<40x128xf32>, vector<40x128xf32>, vector<40x128xf32>, vector<40x128xf32> -> vector<200x128xf32>
    %101 = arith.truncf %100 : vector<200x128xf32> to vector<200x128xbf16>
    %c8 = arith.constant 8 : index
    %c0_31 = arith.constant 0 : index
    %c0_32 = arith.constant 0 : index
    %102 = vector.load %arg4[%c8, %c0_31, %c0_32] : memref<9x128x32xbf16, #tpu.memory_space<vmem>>, vector<1x128x32xbf16>
    %103 = vector.shape_cast %102 : vector<1x128x32xbf16> to vector<128x32xbf16>
    %cst_33 = arith.constant dense<0.000000e+00> : vector<200x32xf32>
    %104 = tpu.matmul %101, %103, %cst_33 {dimension_numbers = #tpu.dot_dimension_numbers<[1], [0], [0], [1], [0, 0, 1, 1], [], []>} : vector<200x128xbf16>, vector<128x32xbf16>, vector<200x32xf32> -> vector<200x32xf32>
    %105 = arith.addf %94, %104 : vector<200x32xf32>
    %c0_34 = arith.constant 0 : index
    %c0_35 = arith.constant 0 : index
    %106 = vector.load %arg5[%c0_34, %c0_35] : memref<1x32xf32, #tpu.memory_space<vmem>>, vector<1x32xf32>
    %107 = vector.broadcast %106 : vector<1x32xf32> to vector<200x32xf32>
    %108 = arith.addf %105, %107 : vector<200x32xf32>
    %cst_36 = arith.constant 0.000000e+00 : f32
    %109 = vector.broadcast %cst_36 : f32 to vector<200x32xf32>
    %110 = arith.maximumf %108, %109 : vector<200x32xf32>
    %111 = vector.extract_strided_slice %110 {offsets = [0, 0], sizes = [8, 32], strides = [1, 1]} : vector<200x32xf32> to vector<8x32xf32>
    %112 = vector.extract_strided_slice %110 {offsets = [8, 0], sizes = [8, 32], strides = [1, 1]} : vector<200x32xf32> to vector<8x32xf32>
    %113 = vector.extract_strided_slice %110 {offsets = [16, 0], sizes = [8, 32], strides = [1, 1]} : vector<200x32xf32> to vector<8x32xf32>
    %114 = vector.extract_strided_slice %110 {offsets = [24, 0], sizes = [8, 32], strides = [1, 1]} : vector<200x32xf32> to vector<8x32xf32>
    %115 = vector.extract_strided_slice %110 {offsets = [32, 0], sizes = [8, 32], strides = [1, 1]} : vector<200x32xf32> to vector<8x32xf32>
    %116 = vector.extract_strided_slice %110 {offsets = [40, 0], sizes = [8, 32], strides = [1, 1]} : vector<200x32xf32> to vector<8x32xf32>
    %117 = vector.extract_strided_slice %110 {offsets = [48, 0], sizes = [8, 32], strides = [1, 1]} : vector<200x32xf32> to vector<8x32xf32>
    %118 = vector.extract_strided_slice %110 {offsets = [56, 0], sizes = [8, 32], strides = [1, 1]} : vector<200x32xf32> to vector<8x32xf32>
    %119 = vector.extract_strided_slice %110 {offsets = [64, 0], sizes = [8, 32], strides = [1, 1]} : vector<200x32xf32> to vector<8x32xf32>
    %120 = vector.extract_strided_slice %110 {offsets = [72, 0], sizes = [8, 32], strides = [1, 1]} : vector<200x32xf32> to vector<8x32xf32>
    %121 = vector.extract_strided_slice %110 {offsets = [80, 0], sizes = [8, 32], strides = [1, 1]} : vector<200x32xf32> to vector<8x32xf32>
    %122 = vector.extract_strided_slice %110 {offsets = [88, 0], sizes = [8, 32], strides = [1, 1]} : vector<200x32xf32> to vector<8x32xf32>
    %123 = vector.extract_strided_slice %110 {offsets = [96, 0], sizes = [8, 32], strides = [1, 1]} : vector<200x32xf32> to vector<8x32xf32>
    %124 = vector.extract_strided_slice %110 {offsets = [104, 0], sizes = [8, 32], strides = [1, 1]} : vector<200x32xf32> to vector<8x32xf32>
    %125 = vector.extract_strided_slice %110 {offsets = [112, 0], sizes = [8, 32], strides = [1, 1]} : vector<200x32xf32> to vector<8x32xf32>
    %126 = vector.extract_strided_slice %110 {offsets = [120, 0], sizes = [8, 32], strides = [1, 1]} : vector<200x32xf32> to vector<8x32xf32>
    %127 = vector.extract_strided_slice %110 {offsets = [128, 0], sizes = [8, 32], strides = [1, 1]} : vector<200x32xf32> to vector<8x32xf32>
    %128 = vector.extract_strided_slice %110 {offsets = [136, 0], sizes = [8, 32], strides = [1, 1]} : vector<200x32xf32> to vector<8x32xf32>
    %129 = vector.extract_strided_slice %110 {offsets = [144, 0], sizes = [8, 32], strides = [1, 1]} : vector<200x32xf32> to vector<8x32xf32>
    %130 = vector.extract_strided_slice %110 {offsets = [152, 0], sizes = [8, 32], strides = [1, 1]} : vector<200x32xf32> to vector<8x32xf32>
    %131 = vector.extract_strided_slice %110 {offsets = [160, 0], sizes = [8, 32], strides = [1, 1]} : vector<200x32xf32> to vector<8x32xf32>
    %132 = vector.extract_strided_slice %110 {offsets = [168, 0], sizes = [8, 32], strides = [1, 1]} : vector<200x32xf32> to vector<8x32xf32>
    %133 = vector.extract_strided_slice %110 {offsets = [176, 0], sizes = [8, 32], strides = [1, 1]} : vector<200x32xf32> to vector<8x32xf32>
    %134 = vector.extract_strided_slice %110 {offsets = [184, 0], sizes = [8, 32], strides = [1, 1]} : vector<200x32xf32> to vector<8x32xf32>
    %135 = vector.extract_strided_slice %110 {offsets = [192, 0], sizes = [8, 32], strides = [1, 1]} : vector<200x32xf32> to vector<8x32xf32>
    %136 = tpu.concatenate %111, %112, %113, %114, %115, %116, %117, %118, %119, %120, %121, %122, %123, %124, %125, %126 in 1 : vector<8x32xf32>, vector<8x32xf32>, vector<8x32xf32>, vector<8x32xf32>, vector<8x32xf32>, vector<8x32xf32>, vector<8x32xf32>, vector<8x32xf32>, vector<8x32xf32>, vector<8x32xf32>, vector<8x32xf32>, vector<8x32xf32>, vector<8x32xf32>, vector<8x32xf32>, vector<8x32xf32>, vector<8x32xf32> -> vector<8x512xf32>
    %137 = tpu.concatenate %127, %128, %129, %130, %131, %132, %133, %134, %135 in 1 : vector<8x32xf32>, vector<8x32xf32>, vector<8x32xf32>, vector<8x32xf32>, vector<8x32xf32>, vector<8x32xf32>, vector<8x32xf32>, vector<8x32xf32>, vector<8x32xf32> -> vector<8x288xf32>
    %138 = tpu.concatenate %136, %137 in 1 : vector<8x512xf32>, vector<8x288xf32> -> vector<8x800xf32>
    %139 = arith.truncf %138 : vector<8x800xf32> to vector<8x800xbf16>
    %c0_37 = arith.constant 0 : index
    %c0_38 = arith.constant 0 : index
    %140 = vector.load %arg6[%c0_37, %c0_38] : memref<800x32xbf16, #tpu.memory_space<vmem>>, vector<800x32xbf16>
    %cst_39 = arith.constant dense<0.000000e+00> : vector<8x32xf32>
    %141 = tpu.matmul %139, %140, %cst_39 {dimension_numbers = #tpu.dot_dimension_numbers<[1], [0], [0], [1], [0, 0, 1, 1], [], []>} : vector<8x800xbf16>, vector<800x32xbf16>, vector<8x32xf32> -> vector<8x32xf32>
    %c0_40 = arith.constant 0 : index
    %c0_41 = arith.constant 0 : index
    %142 = vector.load %arg7[%c0_40, %c0_41] : memref<1x32xf32, #tpu.memory_space<vmem>>, vector<1x32xf32>
    %143 = vector.broadcast %142 : vector<1x32xf32> to vector<8x32xf32>
    %144 = arith.addf %141, %143 : vector<8x32xf32>
    %cst_42 = arith.constant 0.000000e+00 : f32
    %145 = vector.broadcast %cst_42 : f32 to vector<8x32xf32>
    %146 = arith.maximumf %144, %145 : vector<8x32xf32>
    %147 = arith.truncf %146 : vector<8x32xf32> to vector<8x32xbf16>
    %c0_43 = arith.constant 0 : index
    %c0_44 = arith.constant 0 : index
    %c0_45 = arith.constant 0 : index
    %148 = vector.load %arg8[%c0_43, %c0_44, %c0_45] : memref<1x32x128xbf16, #tpu.memory_space<vmem>>, vector<1x32x128xbf16>
    %149 = vector.shape_cast %148 : vector<1x32x128xbf16> to vector<32x128xbf16>
    %cst_46 = arith.constant dense<0.000000e+00> : vector<8x128xf32>
    %150 = tpu.matmul %147, %149, %cst_46 {dimension_numbers = #tpu.dot_dimension_numbers<[1], [0], [0], [1], [0, 0, 1, 1], [], []>} : vector<8x32xbf16>, vector<32x128xbf16>, vector<8x128xf32> -> vector<8x128xf32>
    %c0_47 = arith.constant 0 : index
    %c0_48 = arith.constant 0 : index
    %151 = vector.load %arg9[%c0_47, %c0_48] : memref<1x128xf32, #tpu.memory_space<vmem>>, vector<1x128xf32>
    %152 = vector.broadcast %151 : vector<1x128xf32> to vector<8x128xf32>
    %153 = arith.addf %150, %152 : vector<8x128xf32>
    %c0_49 = arith.constant 0 : index
    %c0_50 = arith.constant 0 : index
    %154 = vector.load %arg10[%c0_49, %c0_50] : memref<8x128xf32, #tpu.memory_space<vmem>>, vector<8x128xf32>
    tpu.vector_store %arg10[%c0_49, %c0_50], %153 {strides = array<i32>} : memref<8x128xf32, #tpu.memory_space<vmem>>, vector<8x128xf32>,
    return
  }
  func.func @transform_0(%arg0: i32) -> (i32, i32) {
    %c0_i32 = arith.constant 0 : i32
    %c0_i32_0 = arith.constant 0 : i32
    %c0_i32_1 = arith.constant 0 : i32
    return %c0_i32, %c0_i32_0 : i32, i32
  }
  func.func @transform_1(%arg0: i32) -> (i32, i32) {
    %c0_i32 = arith.constant 0 : i32
    %c0_i32_0 = arith.constant 0 : i32
    %c0_i32_1 = arith.constant 0 : i32
    return %c0_i32, %c0_i32_0 : i32, i32
  }
  func.func @transform_2(%arg0: i32) -> (i32, i32) {
    %c0_i32 = arith.constant 0 : i32
    %c0_i32_0 = arith.constant 0 : i32
    %c0_i32_1 = arith.constant 0 : i32
    return %c0_i32, %c0_i32_0 : i32, i32
  }
  func.func @transform_3(%arg0: i32) -> (i32, i32, i32) {
    %c0_i32 = arith.constant 0 : i32
    %c0_i32_0 = arith.constant 0 : i32
    %c0_i32_1 = arith.constant 0 : i32
    %c0_i32_2 = arith.constant 0 : i32
    return %c0_i32, %c0_i32_0, %c0_i32_1 : i32, i32, i32
  }
  func.func @transform_4(%arg0: i32) -> (i32, i32) {
    %c0_i32 = arith.constant 0 : i32
    %c0_i32_0 = arith.constant 0 : i32
    %c0_i32_1 = arith.constant 0 : i32
    return %c0_i32, %c0_i32_0 : i32, i32
  }
  func.func @transform_5(%arg0: i32) -> (i32, i32) {
    %c0_i32 = arith.constant 0 : i32
    %c0_i32_0 = arith.constant 0 : i32
    %c0_i32_1 = arith.constant 0 : i32
    return %c0_i32, %c0_i32_0 : i32, i32
  }
  func.func @transform_6(%arg0: i32) -> (i32, i32) {
    %c0_i32 = arith.constant 0 : i32
    %c0_i32_0 = arith.constant 0 : i32
    %c0_i32_1 = arith.constant 0 : i32
    return %c0_i32, %c0_i32_0 : i32, i32
  }
  func.func @transform_7(%arg0: i32) -> (i32, i32, i32) {
    %c0_i32 = arith.constant 0 : i32
    %c0_i32_0 = arith.constant 0 : i32
    %c0_i32_1 = arith.constant 0 : i32
    %c0_i32_2 = arith.constant 0 : i32
    return %c0_i32, %c0_i32_0, %c0_i32_1 : i32, i32, i32
  }
  func.func @transform_8(%arg0: i32) -> (i32, i32) {
    %c0_i32 = arith.constant 0 : i32
    %c0_i32_0 = arith.constant 0 : i32
    %c0_i32_1 = arith.constant 0 : i32
    return %c0_i32, %c0_i32_0 : i32, i32
  }
  func.func @transform_9(%arg0: i32) -> (i32, i32) {
    %c0_i32 = arith.constant 0 : i32
    %c0_i32_0 = arith.constant 0 : i32
    %c0_i32_1 = arith.constant 0 : i32
    return %c0_i32, %c0_i32_0 : i32, i32
  }
}

</mosaic_0001>

<llo_original>
// kernel: value_net_forward.1
$region0: #{value_net_forward.1}
  #allocation0 [shape = 'u32[]', space=smem, size = 0x4, offset = 0x4, fixed_abs, tag = 'smem constant byte address 0x4 - core index']
  #allocation1 [shape = 'u32[144,128]{1,0:T(1,128)}', space=vmem, size = 0x12000, scoped, tag = 'internal scratch']
  %s0 = inlined_call_operand.vmem [shape: bf16[392,512], index: 0, kind: input, shape index: {}]
  %s1 = inlined_call_operand.vmem [shape: bf16[512,128], index: 1, kind: input, shape index: {}]
  %s2 = inlined_call_operand.vmem [shape: f32[1,128], index: 2, kind: input, shape index: {}]
  %s3 = inlined_call_operand.vmem [shape: bf16[9,128,32], index: 3, kind: input, shape index: {}]
  %s4 = inlined_call_operand.vmem [shape: f32[1,32], index: 4, kind: input, shape index: {}]
  %s5 = inlined_call_operand.vmem [shape: bf16[800,32], index: 5, kind: input, shape index: {}]
  %s6 = inlined_call_operand.vmem [shape: f32[1,32], index: 6, kind: input, shape index: {}]
  %s7 = inlined_call_operand.vmem [shape: bf16[1,32,128], index: 7, kind: input, shape index: {}]
  %s8 = inlined_call_operand.vmem [shape: f32[1,128], index: 8, kind: input, shape index: {}]
  %s9 = inlined_call_operand.vmem [shape: f32[8,128], index: 9, kind: output, shape index: {}]
  %s10 = sld [smem:[#allocation0]]
  $region46: #{value_net_forward.1} parent=0
    _
  %s12 = ssub.s32 1, %s10
  %s13 = scalar_select 0, %s12, %s10
  // Predicated region
  $region2: #{value_net_forward.1} parent=0 // pred_check
    _
  $region3: #{value_net_forward.1} parent=0 // pred_check_branch
    %15 = sbr.rel (0) target = $region5
  $region4: #{value_net_forward.1} parent=0 // pred_region
    _
  $region5: #{value_net_forward.1} parent=0 // pred_fallthru
    _
  // Predicated region
  $region6: #{value_net_forward.1} parent=0 // pred_check
    _
  $region7: #{value_net_forward.1} parent=0 // pred_check_branch
    %17 = sbr.rel (0) target = $region9
  $region8: #{value_net_forward.1} parent=0 // pred_region
    _
  $region9: #{value_net_forward.1} parent=0 // pred_fallthru
    _
  // Predicated region
  $region10: #{value_net_forward.1} parent=0 // pred_check
    _
  $region11: #{value_net_forward.1} parent=0 // pred_check_branch
    %19 = sbr.rel (0) target = $region13
  $region12: #{value_net_forward.1} parent=0 // pred_region
    _
  $region13: #{value_net_forward.1} parent=0 // pred_fallthru
    _
  // Predicated region
  $region14: #{value_net_forward.1} parent=0 // pred_check
    _
  $region15: #{value_net_forward.1} parent=0 // pred_check_branch
    %21 = sbr.rel (0) target = $region17
  $region16: #{value_net_forward.1} parent=0 // pred_region
    _
  $region17: #{value_net_forward.1} parent=0 // pred_fallthru
    _
  // Predicated region
  $region18: #{value_net_forward.1} parent=0 // pred_check
    _
  $region19: #{value_net_forward.1} parent=0 // pred_check_branch
    %23 = sbr.rel (0) target = $region21
  $region20: #{value_net_forward.1} parent=0 // pred_region
    _
  $region21: #{value_net_forward.1} parent=0 // pred_fallthru
    _
  // Predicated region
  $region22: #{value_net_forward.1} parent=0 // pred_check
    _
  $region23: #{value_net_forward.1} parent=0 // pred_check_branch
    %25 = sbr.rel (0) target = $region25
  $region24: #{value_net_forward.1} parent=0 // pred_region
    _
  $region25: #{value_net_forward.1} parent=0 // pred_fallthru
    _
  // Predicated region
  $region26: #{value_net_forward.1} parent=0 // pred_check
    _
  $region27: #{value_net_forward.1} parent=0 // pred_check_branch
    %27 = sbr.rel (0) target = $region29
  $region28: #{value_net_forward.1} parent=0 // pred_region
    _
  $region29: #{value_net_forward.1} parent=0 // pred_fallthru
    _
  // Predicated region
  $region30: #{value_net_forward.1} parent=0 // pred_check
    _
  $region31: #{value_net_forward.1} parent=0 // pred_check_branch
    %29 = sbr.rel (0) target = $region33
  $region32: #{value_net_forward.1} parent=0 // pred_region
    _
  $region33: #{value_net_forward.1} parent=0 // pred_fallthru
    _
  // Predicated region
  $region34: #{value_net_forward.1} parent=0 // pred_check
    _
  $region35: #{value_net_forward.1} parent=0 // pred_check_branch
    %31 = sbr.rel (0) target = $region37
  $region36: #{value_net_forward.1} parent=0 // pred_region
    _
  $region37: #{value_net_forward.1} parent=0 // pred_fallthru
    _
  %v33 = vld [vmem:[%s0] sm:$0xff]
  %v34 = vld [vmem:[%s0 + $0x8] sm:$0xff]
  %v35 = vld [vmem:[%s0 + $0x10] sm:$0xff]
  %v36 = vld [vmem:[%s0 + $0x18] sm:$0xff]
  %v37 = vld [vmem:[%s0 + $0x20] sm:$0xff]
  %v38 = vld [vmem:[%s0 + $0x28] sm:$0xff]
  %v39 = vld [vmem:[%s0 + $0x30] sm:$0xff]
  %v40 = vld [vmem:[%s0 + $0x38] sm:$0xff]
  %v41 = vld [vmem:[%s0 + $0x40] sm:$0xff]
  %v42 = vld [vmem:[%s0 + $0x48] sm:$0xff]
  %v43 = vld [vmem:[%s0 + $0x50] sm:$0xff]
  %v44 = vld [vmem:[%s0 + $0x58] sm:$0xff]
  %v45 = vld [vmem:[%s0 + $0x60] sm:$0xff]
  %v46 = vld [vmem:[%s0 + $0x68] sm:$0xff]
  %v47 = vld [vmem:[%s0 + $0x70] sm:$0xff]
  %v48 = vld [vmem:[%s0 + $0x78] sm:$0xff]
  %v49 = vld [vmem:[%s0 + $0x80] sm:$0xff]
  %v50 = vld [vmem:[%s0 + $0x88] sm:$0xff]
  %v51 = vld [vmem:[%s0 + $0x90] sm:$0xff]
  %v52 = vld [vmem:[%s0 + $0x98] sm:$0xff]
  %v53 = vld [vmem:[%s0 + $0xa0] sm:$0xff]
  %v54 = vld [vmem:[%s0 + $0xa8] sm:$0xff]
  %v55 = vld [vmem:[%s0 + $0xb0] sm:$0xff]
  %v56 = vld [vmem:[%s0 + $0xb8] sm:$0xff]
  %v57 = vld [vmem:[%s0 + $0xc0] sm:$0xff]
  %v58 = vld [vmem:[%s0 + $0xc8] sm:$0xff]
  %v59 = vld [vmem:[%s0 + $0xd0] sm:$0xff]
  %v60 = vld [vmem:[%s0 + $0xd8] sm:$0xff]
  %v61 = vld [vmem:[%s0 + $0xe0] sm:$0xff]
  %v62 = vld [vmem:[%s0 + $0xe8] sm:$0xff]
  %v63 = vld [vmem:[%s0 + $0xf0] sm:$0xff]
  %v64 = vld [vmem:[%s0 + $0xf8] sm:$0xff]
  %v65 = vld [vmem:[%s0 + $0x100] sm:$0xff]
  %v66 = vld [vmem:[%s0 + $0x108] sm:$0xff]
  %v67 = vld [vmem:[%s0 + $0x110] sm:$0xff]
  %v68 = vld [vmem:[%s0 + $0x118] sm:$0xff]
  %v69 = vld [vmem:[%s0 + $0x120] sm:$0xff]
  %v70 = vld [vmem:[%s0 + $0x128] sm:$0xff]
  %v71 = vld [vmem:[%s0 + $0x130] sm:$0xff]
  %v72 = vld [vmem:[%s0 + $0x138] sm:$0xff]
  %v73 = vld [vmem:[%s0 + $0x140] sm:$0xff]
  %v74 = vld [vmem:[%s0 + $0x148] sm:$0xff]
  %v75 = vld [vmem:[%s0 + $0x150] sm:$0xff]
  %v76 = vld [vmem:[%s0 + $0x158] sm:$0xff]
  %v77 = vld [vmem:[%s0 + $0x160] sm:$0xff]
  %v78 = vld [vmem:[%s0 + $0x168] sm:$0xff]
  %v79 = vld [vmem:[%s0 + $0x170] sm:$0xff]
  %v80 = vld [vmem:[%s0 + $0x178] sm:$0xff]
  %v81 = vld [vmem:[%s0 + $0x180] sm:$0xff]
  %v82 = vld [vmem:[%s0 + $0x188] sm:$0xff]
  %v83 = vld [vmem:[%s0 + $0x190] sm:$0xff]
  %v84 = vld [vmem:[%s0 + $0x198] sm:$0xff]
  %v85 = vld [vmem:[%s0 + $0x1a0] sm:$0xff]
  %v86 = vld [vmem:[%s0 + $0x1a8] sm:$0xff]
  %v87 = vld [vmem:[%s0 + $0x1b0] sm:$0xff]
  %v88 = vld [vmem:[%s0 + $0x1b8] sm:$0xff]
  %v89 = vld [vmem:[%s0 + $0x1c0] sm:$0xff]
  %v90 = vld [vmem:[%s0 + $0x1c8] sm:$0xff]
  %v91 = vld [vmem:[%s0 + $0x1d0] sm:$0xff]
  %v92 = vld [vmem:[%s0 + $0x1d8] sm:$0xff]
  %v93 = vld [vmem:[%s0 + $0x1e0] sm:$0xff]
  %v94 = vld [vmem:[%s0 + $0x1e8] sm:$0xff]
  %v95 = vld [vmem:[%s0 + $0x1f0] sm:$0xff]
  %v96 = vld [vmem:[%s0 + $0x1f8] sm:$0xff]
  %v97 = vld [vmem:[%s0 + $0x200] sm:$0xff]
  %v98 = vld [vmem:[%s0 + $0x208] sm:$0xff]
  %v99 = vld [vmem:[%s0 + $0x210] sm:$0xff]
  %v100 = vld [vmem:[%s0 + $0x218] sm:$0xff]
  %v101 = vld [vmem:[%s0 + $0x220] sm:$0xff]
  %v102 = vld [vmem:[%s0 + $0x228] sm:$0xff]
  %v103 = vld [vmem:[%s0 + $0x230] sm:$0xff]
  %v104 = vld [vmem:[%s0 + $0x238] sm:$0xff]
  %v105 = vld [vmem:[%s0 + $0x240] sm:$0xff]
  %v106 = vld [vmem:[%s0 + $0x248] sm:$0xff]
  %v107 = vld [vmem:[%s0 + $0x250] sm:$0xff]
  %v108 = vld [vmem:[%s0 + $0x258] sm:$0xff]
  %v109 = vld [vmem:[%s0 + $0x260] sm:$0xff]
  %v110 = vld [vmem:[%s0 + $0x268] sm:$0xff]
  %v111 = vld [vmem:[%s0 + $0x270] sm:$0xff]
  %v112 = vld [vmem:[%s0 + $0x278] sm:$0xff]
  %v113 = vld [vmem:[%s0 + $0x280] sm:$0xff]
  %v114 = vld [vmem:[%s0 + $0x288] sm:$0xff]
  %v115 = vld [vmem:[%s0 + $0x290] sm:$0xff]
  %v116 = vld [vmem:[%s0 + $0x298] sm:$0xff]
  %v117 = vld [vmem:[%s0 + $0x2a0] sm:$0xff]
  %v118 = vld [vmem:[%s0 + $0x2a8] sm:$0xff]
  %v119 = vld [vmem:[%s0 + $0x2b0] sm:$0xff]
  %v120 = vld [vmem:[%s0 + $0x2b8] sm:$0xff]
  %v121 = vld [vmem:[%s0 + $0x2c0] sm:$0xff]
  %v122 = vld [vmem:[%s0 + $0x2c8] sm:$0xff]
  %v123 = vld [vmem:[%s0 + $0x2d0] sm:$0xff]
  %v124 = vld [vmem:[%s0 + $0x2d8] sm:$0xff]
  %v125 = vld [vmem:[%s0 + $0x2e0] sm:$0xff]
  %v126 = vld [vmem:[%s0 + $0x2e8] sm:$0xff]
  %v127 = vld [vmem:[%s0 + $0x2f0] sm:$0xff]
  %v128 = vld [vmem:[%s0 + $0x2f8] sm:$0xff]
  %v129 = vld [vmem:[%s0 + $0x300] sm:$0xff]
  %v130 = vld [vmem:[%s0 + $0x308] sm:$0xff]
  %v131 = vld [vmem:[%s1] sm:$0xf]
  %v132 = vld [vmem:[%s1 + $0x4] sm:$0xf]
  %v133 = vld [vmem:[%s1 + $0x8] sm:$0xf]
  %v134 = vld [vmem:[%s1 + $0xc] sm:$0xf]
  %v135 = vld [vmem:[%s1 + $0x10] sm:$0xf]
  %v136 = vld [vmem:[%s1 + $0x14] sm:$0xf]
  %v137 = vld [vmem:[%s1 + $0x18] sm:$0xf]
  %v138 = vld [vmem:[%s1 + $0x1c] sm:$0xf]
  %v139 = vld [vmem:[%s1 + $0x20] sm:$0xf]
  %v140 = vld [vmem:[%s1 + $0x24] sm:$0xf]
  %v141 = vld [vmem:[%s1 + $0x28] sm:$0xf]
  %v142 = vld [vmem:[%s1 + $0x2c] sm:$0xf]
  %v143 = vld [vmem:[%s1 + $0x30] sm:$0xf]
  %v144 = vld [vmem:[%s1 + $0x34] sm:$0xf]
  %v145 = vld [vmem:[%s1 + $0x38] sm:$0xf]
  %v146 = vld [vmem:[%s1 + $0x3c] sm:$0xf]
  %v147 = vld [vmem:[%s1 + $0x40] sm:$0xf]
  %v148 = vld [vmem:[%s1 + $0x44] sm:$0xf]
  %v149 = vld [vmem:[%s1 + $0x48] sm:$0xf]
  %v150 = vld [vmem:[%s1 + $0x4c] sm:$0xf]
  %v151 = vld [vmem:[%s1 + $0x50] sm:$0xf]
  %v152 = vld [vmem:[%s1 + $0x54] sm:$0xf]
  %v153 = vld [vmem:[%s1 + $0x58] sm:$0xf]
  %v154 = vld [vmem:[%s1 + $0x5c] sm:$0xf]
  %v155 = vld [vmem:[%s1 + $0x60] sm:$0xf]
  %v156 = vld [vmem:[%s1 + $0x64] sm:$0xf]
  %v157 = vld [vmem:[%s1 + $0x68] sm:$0xf]
  %v158 = vld [vmem:[%s1 + $0x6c] sm:$0xf]
  %v159 = vld [vmem:[%s1 + $0x70] sm:$0xf]
  %v160 = vld [vmem:[%s1 + $0x74] sm:$0xf]
  %v161 = vld [vmem:[%s1 + $0x78] sm:$0xf]
  %v162 = vld [vmem:[%s1 + $0x7c] sm:$0xf]
  %v163 = vld [vmem:[%s1 + $0x80] sm:$0xf]
  %v164 = vld [vmem:[%s1 + $0x84] sm:$0xf]
  %v165 = vld [vmem:[%s1 + $0x88] sm:$0xf]
  %v166 = vld [vmem:[%s1 + $0x8c] sm:$0xf]
  %v167 = vld [vmem:[%s1 + $0x90] sm:$0xf]
  %v168 = vld [vmem:[%s1 + $0x94] sm:$0xf]
  %v169 = vld [vmem:[%s1 + $0x98] sm:$0xf]
  %v170 = vld [vmem:[%s1 + $0x9c] sm:$0xf]
  %v171 = vld [vmem:[%s1 + $0xa0] sm:$0xf]
  %v172 = vld [vmem:[%s1 + $0xa4] sm:$0xf]
  %v173 = vld [vmem:[%s1 + $0xa8] sm:$0xf]
  %v174 = vld [vmem:[%s1 + $0xac] sm:$0xf]
  %v175 = vld [vmem:[%s1 + $0xb0] sm:$0xf]
  %v176 = vld [vmem:[%s1 + $0xb4] sm:$0xf]
  %v177 = vld [vmem:[%s1 + $0xb8] sm:$0xf]
  %v178 = vld [vmem:[%s1 + $0xbc] sm:$0xf]
  %v179 = vld [vmem:[%s1 + $0xc0] sm:$0xf]
  %v180 = vld [vmem:[%s1 + $0xc4] sm:$0xf]
  %v181 = vld [vmem:[%s1 + $0xc8] sm:$0xf]
  %v182 = vld [vmem:[%s1 + $0xcc] sm:$0xf]
  %v183 = vld [vmem:[%s1 + $0xd0] sm:$0xf]
  %v184 = vld [vmem:[%s1 + $0xd4] sm:$0xf]
  %v185 = vld [vmem:[%s1 + $0xd8] sm:$0xf]
  %v186 = vld [vmem:[%s1 + $0xdc] sm:$0xf]
  %v187 = vld [vmem:[%s1 + $0xe0] sm:$0xf]
  %v188 = vld [vmem:[%s1 + $0xe4] sm:$0xf]
  %v189 = vld [vmem:[%s1 + $0xe8] sm:$0xf]
  %v190 = vld [vmem:[%s1 + $0xec] sm:$0xf]
  %v191 = vld [vmem:[%s1 + $0xf0] sm:$0xf]
  %v192 = vld [vmem:[%s1 + $0xf4] sm:$0xf]
  %v193 = vld [vmem:[%s1 + $0xf8] sm:$0xf]
  %v194 = vld [vmem:[%s1 + $0xfc] sm:$0xf]
  %v195 = vld [vmem:[%s2] sm:$0x1]
  %v197 = vlaneseq
  %v198 = vshrl.u32 %v197, 7
  %v199 = vsub.s32 0, %v198
  %v200 = vrot.slane %v195, %v199
  %v300 = vunpack.c.l.b16 %v33
  %v301 = vunpack.c.h.b16 %v33
  %v302 = vunpack.c.l.b16 %v34
  %v303 = vunpack.c.h.b16 %v34
  %v304 = vunpack.c.l.b16 %v35
  %v305 = vunpack.c.h.b16 %v35
  %v306 = vunpack.c.l.b16 %v36
  %v307 = vunpack.c.h.b16 %v36
  %v308 = vunpack.c.l.b16 %v37
  %v309 = vunpack.c.h.b16 %v37
  %v310 = vunpack.c.l.b16 %v38
  %v311 = vunpack.c.h.b16 %v38
  %v312 = vunpack.c.l.b16 %v39
  %v313 = vunpack.c.h.b16 %v39
  %v314 = vunpack.c.l.b16 %v40
  %v315 = vunpack.c.h.b16 %v40
  %v316 = vunpack.c.l.b16 %v41
  %v317 = vunpack.c.h.b16 %v41
  %v318 = vunpack.c.l.b16 %v42
  %v319 = vunpack.c.h.b16 %v42
  %v320 = vunpack.c.l.b16 %v43
  %v321 = vunpack.c.h.b16 %v43
  %v322 = vunpack.c.l.b16 %v44
  %v323 = vunpack.c.h.b16 %v44
  %v324 = vunpack.c.l.b16 %v45
  %v325 = vunpack.c.h.b16 %v45
  %v326 = vunpack.c.l.b16 %v46
  %v327 = vunpack.c.h.b16 %v46
  %v328 = vunpack.c.l.b16 %v47
  %v329 = vunpack.c.h.b16 %v47
  %v330 = vunpack.c.l.b16 %v48
  %v331 = vunpack.c.h.b16 %v48
  %v332 = vunpack.c.l.b16 %v49
  %v333 = vunpack.c.h.b16 %v49
  %v334 = vunpack.c.l.b16 %v50
  %v335 = vunpack.c.h.b16 %v50
  %v336 = vunpack.c.l.b16 %v51
  %v337 = vunpack.c.h.b16 %v51
  %v338 = vunpack.c.l.b16 %v52
  %v339 = vunpack.c.h.b16 %v52
  %v340 = vunpack.c.l.b16 %v53
  %v341 = vunpack.c.h.b16 %v53
  %v342 = vunpack.c.l.b16 %v54
  %v343 = vunpack.c.h.b16 %v54
  %v344 = vunpack.c.l.b16 %v55
  %v345 = vunpack.c.h.b16 %v55
  %v346 = vunpack.c.l.b16 %v56
  %v347 = vunpack.c.h.b16 %v56
  %v348 = vunpack.c.l.b16 %v57
  %v349 = vunpack.c.h.b16 %v57
  %v350 = vunpack.c.l.b16 %v58
  %v351 = vunpack.c.h.b16 %v58
  %v352 = vunpack.c.l.b16 %v59
  %v353 = vunpack.c.h.b16 %v59
  %v354 = vunpack.c.l.b16 %v60
  %v355 = vunpack.c.h.b16 %v60
  %v356 = vunpack.c.l.b16 %v61
  %v357 = vunpack.c.h.b16 %v61
  %v358 = vunpack.c.l.b16 %v62
  %v359 = vunpack.c.h.b16 %v62
  %v360 = vunpack.c.l.b16 %v63
  %v361 = vunpack.c.h.b16 %v63
  %v362 = vunpack.c.l.b16 %v64
  %v363 = vunpack.c.h.b16 %v64
  %v364 = vunpack.c.l.b16 %v65
  %v365 = vunpack.c.h.b16 %v65
  %v366 = vunpack.c.l.b16 %v66
  %v367 = vunpack.c.h.b16 %v66
  %v368 = vunpack.c.l.b16 %v67
  %v369 = vunpack.c.h.b16 %v67
  %v370 = vunpack.c.l.b16 %v68
  %v371 = vunpack.c.h.b16 %v68
  %v372 = vunpack.c.l.b16 %v69
  %v373 = vunpack.c.h.b16 %v69
  %v374 = vunpack.c.l.b16 %v70
  %v375 = vunpack.c.h.b16 %v70
  %v376 = vunpack.c.l.b16 %v71
  %v377 = vunpack.c.h.b16 %v71
  %v378 = vunpack.c.l.b16 %v72
  %v379 = vunpack.c.h.b16 %v72
  %v380 = vunpack.c.l.b16 %v73
  %v381 = vunpack.c.h.b16 %v73
  %v382 = vunpack.c.l.b16 %v74
  %v383 = vunpack.c.h.b16 %v74
  %v384 = vunpack.c.l.b16 %v75
  %v385 = vunpack.c.h.b16 %v75
  %v386 = vunpack.c.l.b16 %v76
  %v387 = vunpack.c.h.b16 %v76
  %v388 = vunpack.c.l.b16 %v77
  %v389 = vunpack.c.h.b16 %v77
  %v390 = vunpack.c.l.b16 %v78
  %v391 = vunpack.c.h.b16 %v78
  %v392 = vunpack.c.l.b16 %v79
  %v393 = vunpack.c.h.b16 %v79
  %v394 = vunpack.c.l.b16 %v80
  %v395 = vunpack.c.h.b16 %v80
  %v396 = vunpack.c.l.b16 %v81
  %v397 = vunpack.c.h.b16 %v81
  %v398 = vunpack.c.l.b16 %v82
  %v399 = vunpack.c.h.b16 %v82
  %v400 = vunpack.c.l.b16 %v83
  %v401 = vunpack.c.h.b16 %v83
  %v402 = vunpack.c.l.b16 %v84
  %v403 = vunpack.c.h.b16 %v84
  %v404 = vunpack.c.l.b16 %v85
  %v405 = vunpack.c.h.b16 %v85
  %v406 = vunpack.c.l.b16 %v86
  %v407 = vunpack.c.h.b16 %v86
  %v408 = vunpack.c.l.b16 %v87
  %v409 = vunpack.c.h.b16 %v87
  %v410 = vunpack.c.l.b16 %v88
  %v411 = vunpack.c.h.b16 %v88
  %v412 = vunpack.c.l.b16 %v89
  %v413 = vunpack.c.h.b16 %v89
  %v414 = vunpack.c.l.b16 %v90
  %v415 = vunpack.c.h.b16 %v90
  %v416 = vunpack.c.l.b16 %v91
  %v417 = vunpack.c.h.b16 %v91
  %v418 = vunpack.c.l.b16 %v92
  %v419 = vunpack.c.h.b16 %v92
  %v420 = vunpack.c.l.b16 %v93
  %v421 = vunpack.c.h.b16 %v93
  %v422 = vunpack.c.l.b16 %v94
  %v423 = vunpack.c.h.b16 %v94
  %v424 = vunpack.c.l.b16 %v95
  %v425 = vunpack.c.h.b16 %v95
  %v426 = vunpack.c.l.b16 %v96
  %v427 = vunpack.c.h.b16 %v96
  %v428 = vunpack.c.l.b16 %v97
  %v429 = vunpack.c.h.b16 %v97
  %v430 = vunpack.c.l.b16 %v98
  %v431 = vunpack.c.h.b16 %v98
  %v432 = vunpack.c.l.b16 %v99
  %v433 = vunpack.c.h.b16 %v99
  %v434 = vunpack.c.l.b16 %v100
  %v435 = vunpack.c.h.b16 %v100
  %v436 = vunpack.c.l.b16 %v101
  %v437 = vunpack.c.h.b16 %v101
  %v438 = vunpack.c.l.b16 %v102
  %v439 = vunpack.c.h.b16 %v102
  %v440 = vunpack.c.l.b16 %v103
  %v441 = vunpack.c.h.b16 %v103
  %v442 = vunpack.c.l.b16 %v104
  %v443 = vunpack.c.h.b16 %v104
  %v444 = vunpack.c.l.b16 %v105
  %v445 = vunpack.c.h.b16 %v105
  %v446 = vunpack.c.l.b16 %v106
  %v447 = vunpack.c.h.b16 %v106
  %v448 = vunpack.c.l.b16 %v107
  %v449 = vunpack.c.h.b16 %v107
  %v450 = vunpack.c.l.b16 %v108
  %v451 = vunpack.c.h.b16 %v108
  %v452 = vunpack.c.l.b16 %v109
  %v453 = vunpack.c.h.b16 %v109
  %v454 = vunpack.c.l.b16 %v110
  %v455 = vunpack.c.h.b16 %v110
  %v456 = vunpack.c.l.b16 %v111
  %v457 = vunpack.c.h.b16 %v111
  %v458 = vunpack.c.l.b16 %v112
  %v459 = vunpack.c.h.b16 %v112
  %v460 = vunpack.c.l.b16 %v113
  %v461 = vunpack.c.h.b16 %v113
  %v462 = vunpack.c.l.b16 %v114
  %v463 = vunpack.c.h.b16 %v114
  %v464 = vunpack.c.l.b16 %v115
  %v465 = vunpack.c.h.b16 %v115
  %v466 = vunpack.c.l.b16 %v116
  %v467 = vunpack.c.h.b16 %v116
  %v468 = vunpack.c.l.b16 %v117
  %v469 = vunpack.c.h.b16 %v117
  %v470 = vunpack.c.l.b16 %v118
  %v471 = vunpack.c.h.b16 %v118
  %v472 = vunpack.c.l.b16 %v119
  %v473 = vunpack.c.h.b16 %v119
  %v474 = vunpack.c.l.b16 %v120
  %v475 = vunpack.c.h.b16 %v120
  %v476 = vunpack.c.l.b16 %v121
  %v477 = vunpack.c.h.b16 %v121
  %v478 = vunpack.c.l.b16 %v122
  %v479 = vunpack.c.h.b16 %v122
  %v480 = vunpack.c.l.b16 %v123
  %v481 = vunpack.c.h.b16 %v123
  %v482 = vunpack.c.l.b16 %v124
  %v483 = vunpack.c.h.b16 %v124
  %v484 = vunpack.c.l.b16 %v125
  %v485 = vunpack.c.h.b16 %v125
  %v486 = vunpack.c.l.b16 %v126
  %v487 = vunpack.c.h.b16 %v126
  %v488 = vunpack.c.l.b16 %v127
  %v489 = vunpack.c.h.b16 %v127
  %v490 = vunpack.c.l.b16 %v128
  %v491 = vunpack.c.h.b16 %v128
  %v492 = vunpack.c.l.b16 %v129
  %v493 = vunpack.c.h.b16 %v129
  %v494 = vunpack.c.l.b16 %v130
  %v495 = vunpack.c.h.b16 %v130
  %v496 = vpack.c.b16 %v304, %v300
  %v497 = vpack.c.b16 %v305, %v301
  %v498 = vpack.c.b16 %v306, %v302
  %v499 = vpack.c.b16 %v307, %v303
  %v500 = vpack.c.b16 %v312, %v308
  %v501 = vpack.c.b16 %v313, %v309
  %v502 = vpack.c.b16 %v314, %v310
  %v503 = vpack.c.b16 %v315, %v311
  %v504 = vpack.c.b16 %v320, %v316
  %v505 = vpack.c.b16 %v321, %v317
  %v506 = vpack.c.b16 %v322, %v318
  %v507 = vpack.c.b16 %v323, %v319
  %v508 = vpack.c.b16 %v328, %v324
  %v509 = vpack.c.b16 %v329, %v325
  %v510 = vpack.c.b16 %v330, %v326
  %v511 = vpack.c.b16 %v331, %v327
  %v512 = vpack.c.b16 %v336, %v332
  %v513 = vpack.c.b16 %v337, %v333
  %v514 = vpack.c.b16 %v338, %v334
  %v515 = vpack.c.b16 %v339, %v335
  %v516 = vpack.c.b16 %v344, %v340
  %v517 = vpack.c.b16 %v345, %v341
  %v518 = vpack.c.b16 %v346, %v342
  %v519 = vpack.c.b16 %v347, %v343
  %v520 = vpack.c.b16 %v352, %v348
  %v521 = vpack.c.b16 %v353, %v349
  %v522 = vpack.c.b16 %v354, %v350
  %v523 = vpack.c.b16 %v355, %v351
  %v524 = vpack.c.b16 %v360, %v356
  %v525 = vpack.c.b16 %v361, %v357
  %v526 = vpack.c.b16 %v362, %v358
  %v527 = vpack.c.b16 %v363, %v359
  %v528 = vpack.c.b16 %v368, %v364
  %v529 = vpack.c.b16 %v369, %v365
  %v530 = vpack.c.b16 %v370, %v366
  %v531 = vpack.c.b16 %v371, %v367
  %v532 = vpack.c.b16 %v376, %v372
  %v533 = vpack.c.b16 %v377, %v373
  %v534 = vpack.c.b16 %v378, %v374
  %v535 = vpack.c.b16 %v379, %v375
  %v536 = vpack.c.b16 %v384, %v380
  %v537 = vpack.c.b16 %v385, %v381
  %v538 = vpack.c.b16 %v386, %v382
  %v539 = vpack.c.b16 %v387, %v383
  %v540 = vpack.c.b16 %v392, %v388
  %v541 = vpack.c.b16 %v393, %v389
  %v542 = vpack.c.b16 %v394, %v390
  %v543 = vpack.c.b16 %v395, %v391
  %v544 = vpack.c.b16 %v400, %v396
  %v545 = vpack.c.b16 %v401, %v397
  %v546 = vpack.c.b16 %v402, %v398
  %v547 = vpack.c.b16 %v403, %v399
  %v548 = vpack.c.b16 %v408, %v404
  %v549 = vpack.c.b16 %v409, %v405
  %v550 = vpack.c.b16 %v410, %v406
  %v551 = vpack.c.b16 %v411, %v407
  %v552 = vpack.c.b16 %v416, %v412
  %v553 = vpack.c.b16 %v417, %v413
  %v554 = vpack.c.b16 %v418, %v414
  %v555 = vpack.c.b16 %v419, %v415
  %v556 = vpack.c.b16 %v424, %v420
  %v557 = vpack.c.b16 %v425, %v421
  %v558 = vpack.c.b16 %v426, %v422
  %v559 = vpack.c.b16 %v427, %v423
  %v560 = vpack.c.b16 %v432, %v428
  %v561 = vpack.c.b16 %v433, %v429
  %v562 = vpack.c.b16 %v434, %v430
  %v563 = vpack.c.b16 %v435, %v431
  %v564 = vpack.c.b16 %v440, %v436
  %v565 = vpack.c.b16 %v441, %v437
  %v566 = vpack.c.b16 %v442, %v438
  %v567 = vpack.c.b16 %v443, %v439
  %v568 = vpack.c.b16 %v448, %v444
  %v569 = vpack.c.b16 %v449, %v445
  %v570 = vpack.c.b16 %v450, %v446
  %v571 = vpack.c.b16 %v451, %v447
  %v572 = vpack.c.b16 %v456, %v452
  %v573 = vpack.c.b16 %v457, %v453
  %v574 = vpack.c.b16 %v458, %v454
  %v575 = vpack.c.b16 %v459, %v455
  %v576 = vpack.c.b16 %v464, %v460
  %v577 = vpack.c.b16 %v465, %v461
  %v578 = vpack.c.b16 %v466, %v462
  %v579 = vpack.c.b16 %v467, %v463
  %v580 = vpack.c.b16 %v472, %v468
  %v581 = vpack.c.b16 %v473, %v469
  %v582 = vpack.c.b16 %v474, %v470
  %v583 = vpack.c.b16 %v475, %v471
  %v584 = vpack.c.b16 %v480, %v476
  %v585 = vpack.c.b16 %v481, %v477
  %v586 = vpack.c.b16 %v482, %v478
  %v587 = vpack.c.b16 %v483, %v479
  %v588 = vpack.c.b16 %v488, %v484
  %v589 = vpack.c.b16 %v489, %v485
  %v590 = vpack.c.b16 %v490, %v486
  %v591 = vpack.c.b16 %v491, %v487
  %v592 = vpack.c.b16 %v492, %v492
  %v593 = vpack.c.b16 %v493, %v493
  %v594 = vpack.c.b16 %v494, %v494
  %v595 = vpack.c.b16 %v495, %v495
  %v760 = vunpack.c.l.b16 %v131
  %v761 = vunpack.c.l.b16 %v132
  %v762 = vunpack.c.l.b16 %v133
  %v763 = vunpack.c.l.b16 %v134
  %v764 = vunpack.c.l.b16 %v135
  %v765 = vunpack.c.l.b16 %v136
  %v766 = vunpack.c.l.b16 %v137
  %v767 = vunpack.c.l.b16 %v138
  %v768 = vunpack.c.l.b16 %v139
  %v769 = vunpack.c.l.b16 %v140
  %v770 = vunpack.c.l.b16 %v141
  %v771 = vunpack.c.l.b16 %v142
  %v772 = vunpack.c.l.b16 %v143
  %v773 = vunpack.c.l.b16 %v144
  %v774 = vunpack.c.l.b16 %v145
  %v775 = vunpack.c.l.b16 %v146
  %v776 = vunpack.c.l.b16 %v147
  %v777 = vunpack.c.l.b16 %v148
  %v778 = vunpack.c.l.b16 %v149
  %v779 = vunpack.c.l.b16 %v150
  %v780 = vunpack.c.l.b16 %v151
  %v781 = vunpack.c.l.b16 %v152
  %v782 = vunpack.c.l.b16 %v153
  %v783 = vunpack.c.l.b16 %v154
  %v784 = vunpack.c.l.b16 %v155
  %v785 = vunpack.c.l.b16 %v156
  %v786 = vunpack.c.l.b16 %v157
  %v787 = vunpack.c.l.b16 %v158
  %v788 = vunpack.c.l.b16 %v159
  %v789 = vunpack.c.l.b16 %v160
  %v790 = vunpack.c.l.b16 %v161
  %v791 = vunpack.c.l.b16 %v162
  %v792 = vunpack.c.l.b16 %v163
  %v793 = vunpack.c.l.b16 %v164
  %v794 = vunpack.c.l.b16 %v165
  %v795 = vunpack.c.l.b16 %v166
  %v796 = vunpack.c.l.b16 %v167
  %v797 = vunpack.c.l.b16 %v168
  %v798 = vunpack.c.l.b16 %v169
  %v799 = vunpack.c.l.b16 %v170
  %v800 = vunpack.c.l.b16 %v171
  %v801 = vunpack.c.l.b16 %v172
  %v802 = vunpack.c.l.b16 %v173
  %v803 = vunpack.c.l.b16 %v174
  %v804 = vunpack.c.l.b16 %v175
  %v805 = vunpack.c.l.b16 %v176
  %v806 = vunpack.c.l.b16 %v177
  %v807 = vunpack.c.l.b16 %v178
  %v808 = vunpack.c.l.b16 %v179
  %v809 = vunpack.c.l.b16 %v180
  %v810 = vunpack.c.l.b16 %v181
  %v811 = vunpack.c.l.b16 %v182
  %v812 = vunpack.c.l.b16 %v183
  %v813 = vunpack.c.l.b16 %v184
  %v814 = vunpack.c.l.b16 %v185
  %v815 = vunpack.c.l.b16 %v186
  %v816 = vunpack.c.l.b16 %v187
  %v817 = vunpack.c.l.b16 %v188
  %v818 = vunpack.c.l.b16 %v189
  %v819 = vunpack.c.l.b16 %v190
  %v820 = vunpack.c.l.b16 %v191
  %v821 = vunpack.c.l.b16 %v192
  %v822 = vunpack.c.l.b16 %v193
  %v823 = vunpack.c.l.b16 %v194
  %v824 = vpack.c.b16 %v761, %v760
  %v825 = vpack.c.b16 %v763, %v762
  %v826 = vpack.c.b16 %v765, %v764
  %v827 = vpack.c.b16 %v767, %v766
  %v828 = vpack.c.b16 %v769, %v768
  %v829 = vpack.c.b16 %v771, %v770
  %v830 = vpack.c.b16 %v773, %v772
  %v831 = vpack.c.b16 %v775, %v774
  %v832 = vpack.c.b16 %v777, %v776
  %v833 = vpack.c.b16 %v779, %v778
  %v834 = vpack.c.b16 %v781, %v780
  %v835 = vpack.c.b16 %v783, %v782
  %v836 = vpack.c.b16 %v785, %v784
  %v837 = vpack.c.b16 %v787, %v786
  %v838 = vpack.c.b16 %v789, %v788
  %v839 = vpack.c.b16 %v791, %v790
  %v840 = vpack.c.b16 %v793, %v792
  %v841 = vpack.c.b16 %v795, %v794
  %v842 = vpack.c.b16 %v797, %v796
  %v843 = vpack.c.b16 %v799, %v798
  %v844 = vpack.c.b16 %v801, %v800
  %v845 = vpack.c.b16 %v803, %v802
  %v846 = vpack.c.b16 %v805, %v804
  %v847 = vpack.c.b16 %v807, %v806
  %v848 = vpack.c.b16 %v809, %v808
  %v849 = vpack.c.b16 %v811, %v810
  %v850 = vpack.c.b16 %v813, %v812
  %v851 = vpack.c.b16 %v815, %v814
  %v852 = vpack.c.b16 %v817, %v816
  %v853 = vpack.c.b16 %v819, %v818
  %v854 = vpack.c.b16 %v821, %v820
  %v855 = vpack.c.b16 %v823, %v822
  %888 = vmatprep.subr.bf16.mxu0 0
  %889 = vmatpush1.bf16.msra.mxu0 %v824
  %890 = vmatprep.subr.bf16.mxu0 0
  %891 = vmatpush1.bf16.msra.mxu0 %v825
  %892 = vmatprep.subr.bf16.mxu0 0
  %893 = vmatpush1.bf16.msra.mxu0 %v826
  %894 = vmatprep.subr.bf16.mxu0 0
  %895 = vmatpush1.bf16.msra.mxu0 %v827
  %896 = vmatprep.subr.bf16.mxu0 0
  %897 = vmatpush1.bf16.msra.mxu0 %v828
  %898 = vmatprep.subr.bf16.mxu0 0
  %899 = vmatpush1.bf16.msra.mxu0 %v829
  %900 = vmatprep.subr.bf16.mxu0 0
  %901 = vmatpush1.bf16.msra.mxu0 %v830
  %902 = vmatprep.subr.bf16.mxu0 0
  %903 = vmatpush1.bf16.msra.mxu0 %v831
  %904 = vmatprep.subr.bf16.mxu0 0
  %905 = vmatpush1.bf16.msra.mxu0 %v832
  %906 = vmatprep.subr.bf16.mxu0 0
  %907 = vmatpush1.bf16.msra.mxu0 %v833
  %908 = vmatprep.subr.bf16.mxu0 0
  %909 = vmatpush1.bf16.msra.mxu0 %v834
  %910 = vmatprep.subr.bf16.mxu0 0
  %911 = vmatpush1.bf16.msra.mxu0 %v835
  %912 = vmatprep.subr.bf16.mxu0 0
  %913 = vmatpush1.bf16.msra.mxu0 %v836
  %914 = vmatprep.subr.bf16.mxu0 0
  %915 = vmatpush1.bf16.msra.mxu0 %v837
  %916 = vmatprep.subr.bf16.mxu0 0
  %917 = vmatpush1.bf16.msra.mxu0 %v838
  %918 = vmatprep.subr.bf16.mxu0 0
  %919 = vmatpush1.bf16.msra.mxu0 %v839
  %920 = vmatprep.mubr.bf16.mxu0 %v497
  %921 = vmatmul.mubr.bf16.gmra.mrb[0].mxu0 %v496
  %v922 = vpop.f32.mrb[0].mxu0
  %v923 = vadd.f32 %v200, %v922
  %v924 = vpop.f32.mrb[0].mxu0
  %v925 = vpop.f32.mrb[0].mxu0
  %v926 = vadd.f32 %v200, %v925
  %v927 = vpop.f32.mrb[0].mxu0
  %928 = vmatprep.mubr.bf16.mxu0 %v501
  %929 = vmatmul.mubr.bf16.gmra.mrb[0].mxu0 %v500
  %v930 = vpop.f32.mrb[0].mxu0
  %v931 = vadd.f32 %v200, %v930
  %v932 = vpop.f32.mrb[0].mxu0
  %v933 = vpop.f32.mrb[0].mxu0
  %v934 = vadd.f32 %v200, %v933
  %v935 = vpop.f32.mrb[0].mxu0
  %936 = vmatprep.mubr.bf16.mxu0 %v505
  %937 = vmatmul.mubr.bf16.gmra.mrb[0].mxu0 %v504
  %v938 = vpop.f32.mrb[0].mxu0
  %v939 = vadd.f32 %v200, %v938
  %v940 = vpop.f32.mrb[0].mxu0
  %v941 = vpop.f32.mrb[0].mxu0
  %v942 = vadd.f32 %v200, %v941
  %v943 = vpop.f32.mrb[0].mxu0
  %944 = vmatprep.mubr.bf16.mxu0 %v509
  %945 = vmatmul.mubr.bf16.gmra.mrb[0].mxu0 %v508
  %v946 = vpop.f32.mrb[0].mxu0
  %v947 = vadd.f32 %v200, %v946
  %v948 = vpop.f32.mrb[0].mxu0
  %v949 = vpop.f32.mrb[0].mxu0
  %v950 = vadd.f32 %v200, %v949
  %v951 = vpop.f32.mrb[0].mxu0
  %952 = vmatprep.mubr.bf16.mxu0 %v513
  %953 = vmatmul.mubr.bf16.gmra.mrb[0].mxu0 %v512
  %v954 = vpop.f32.mrb[0].mxu0
  %v955 = vadd.f32 %v200, %v954
  %v956 = vpop.f32.mrb[0].mxu0
  %v957 = vpop.f32.mrb[0].mxu0
  %v958 = vadd.f32 %v200, %v957
  %v959 = vpop.f32.mrb[0].mxu0
  %960 = vmatprep.mubr.bf16.mxu0 %v517
  %961 = vmatmul.mubr.bf16.gmra.mrb[0].mxu0 %v516
  %v962 = vpop.f32.mrb[0].mxu0
  %v963 = vadd.f32 %v200, %v962
  %v964 = vpop.f32.mrb[0].mxu0
  %v965 = vpop.f32.mrb[0].mxu0
  %v966 = vadd.f32 %v200, %v965
  %v967 = vpop.f32.mrb[0].mxu0
  %968 = vmatprep.mubr.bf16.mxu0 %v521
  %969 = vmatmul.mubr.bf16.gmra.mrb[0].mxu0 %v520
  %v970 = vpop.f32.mrb[0].mxu0
  %v971 = vadd.f32 %v200, %v970
  %v972 = vpop.f32.mrb[0].mxu0
  %v973 = vpop.f32.mrb[0].mxu0
  %v974 = vadd.f32 %v200, %v973
  %v975 = vpop.f32.mrb[0].mxu0
  %976 = vmatprep.mubr.bf16.mxu0 %v525
  %977 = vmatmul.mubr.bf16.gmra.mrb[0].mxu0 %v524
  %v978 = vpop.f32.mrb[0].mxu0
  %v979 = vadd.f32 %v200, %v978
  %v980 = vpop.f32.mrb[0].mxu0
  %v981 = vpop.f32.mrb[0].mxu0
  %v982 = vadd.f32 %v200, %v981
  %v983 = vpop.f32.mrb[0].mxu0
  %984 = vmatprep.mubr.bf16.mxu0 %v529
  %985 = vmatmul.mubr.bf16.gmra.mrb[0].mxu0 %v528
  %v986 = vpop.f32.mrb[0].mxu0
  %v987 = vadd.f32 %v200, %v986
  %v988 = vpop.f32.mrb[0].mxu0
  %v989 = vpop.f32.mrb[0].mxu0
  %v990 = vadd.f32 %v200, %v989
  %v991 = vpop.f32.mrb[0].mxu0
  %992 = vmatprep.mubr.bf16.mxu0 %v533
  %993 = vmatmul.mubr.bf16.gmra.mrb[0].mxu0 %v532
  %v994 = vpop.f32.mrb[0].mxu0
  %v995 = vadd.f32 %v200, %v994
  %v996 = vpop.f32.mrb[0].mxu0
  %v997 = vpop.f32.mrb[0].mxu0
  %v998 = vadd.f32 %v200, %v997
  %v999 = vpop.f32.mrb[0].mxu0
  %1000 = vmatprep.mubr.bf16.mxu0 %v537
  %1001 = vmatmul.mubr.bf16.gmra.mrb[0].mxu0 %v536
  %v1002 = vpop.f32.mrb[0].mxu0
  %v1003 = vadd.f32 %v200, %v1002
  %v1004 = vpop.f32.mrb[0].mxu0
  %v1005 = vpop.f32.mrb[0].mxu0
  %v1006 = vadd.f32 %v200, %v1005
  %v1007 = vpop.f32.mrb[0].mxu0
  %1008 = vmatprep.mubr.bf16.mxu0 %v541
  %1009 = vmatmul.mubr.bf16.gmra.mrb[0].mxu0 %v540
  %v1010 = vpop.f32.mrb[0].mxu0
  %v1011 = vadd.f32 %v200, %v1010
  %v1012 = vpop.f32.mrb[0].mxu0
  %v1013 = vpop.f32.mrb[0].mxu0
  %v1014 = vadd.f32 %v200, %v1013
  %v1015 = vpop.f32.mrb[0].mxu0
  %1016 = vmatprep.mubr.bf16.mxu0 %v545
  %1017 = vmatmul.mubr.bf16.gmra.mrb[0].mxu0 %v544
  %v1018 = vpop.f32.mrb[0].mxu0
  %v1019 = vadd.f32 %v200, %v1018
  %v1020 = vpop.f32.mrb[0].mxu0
  %v1021 = vpop.f32.mrb[0].mxu0
  %v1022 = vadd.f32 %v200, %v1021
  %v1023 = vpop.f32.mrb[0].mxu0
  %1024 = vmatprep.mubr.bf16.mxu0 %v549
  %1025 = vmatmul.mubr.bf16.gmra.mrb[0].mxu0 %v548
  %v1026 = vpop.f32.mrb[0].mxu0
  %v1027 = vadd.f32 %v200, %v1026
  %v1028 = vpop.f32.mrb[0].mxu0
  %v1029 = vpop.f32.mrb[0].mxu0
  %v1030 = vadd.f32 %v200, %v1029
  %v1031 = vpop.f32.mrb[0].mxu0
  %1032 = vmatprep.mubr.bf16.mxu0 %v553
  %1033 = vmatmul.mubr.bf16.gmra.mrb[0].mxu0 %v552
  %v1034 = vpop.f32.mrb[0].mxu0
  %v1035 = vadd.f32 %v200, %v1034
  %v1036 = vpop.f32.mrb[0].mxu0
  %v1037 = vpop.f32.mrb[0].mxu0
  %v1038 = vadd.f32 %v200, %v1037
  %v1039 = vpop.f32.mrb[0].mxu0
  %1040 = vmatprep.mubr.bf16.mxu0 %v557
  %1041 = vmatmul.mubr.bf16.gmra.mrb[0].mxu0 %v556
  %v1042 = vpop.f32.mrb[0].mxu0
  %v1043 = vadd.f32 %v200, %v1042
  %v1044 = vpop.f32.mrb[0].mxu0
  %v1045 = vpop.f32.mrb[0].mxu0
  %v1046 = vadd.f32 %v200, %v1045
  %v1047 = vpop.f32.mrb[0].mxu0
  %1048 = vmatprep.mubr.bf16.mxu0 %v561
  %1049 = vmatmul.mubr.bf16.gmra.mrb[0].mxu0 %v560
  %v1050 = vpop.f32.mrb[0].mxu0
  %v1051 = vadd.f32 %v200, %v1050
  %v1052 = vpop.f32.mrb[0].mxu0
  %v1053 = vpop.f32.mrb[0].mxu0
  %v1054 = vadd.f32 %v200, %v1053
  %v1055 = vpop.f32.mrb[0].mxu0
  %1056 = vmatprep.mubr.bf16.mxu0 %v565
  %1057 = vmatmul.mubr.bf16.gmra.mrb[0].mxu0 %v564
  %v1058 = vpop.f32.mrb[0].mxu0
  %v1059 = vadd.f32 %v200, %v1058
  %v1060 = vpop.f32.mrb[0].mxu0
  %v1061 = vpop.f32.mrb[0].mxu0
  %v1062 = vadd.f32 %v200, %v1061
  %v1063 = vpop.f32.mrb[0].mxu0
  %1064 = vmatprep.mubr.bf16.mxu0 %v569
  %1065 = vmatmul.mubr.bf16.gmra.mrb[0].mxu0 %v568
  %v1066 = vpop.f32.mrb[0].mxu0
  %v1067 = vadd.f32 %v200, %v1066
  %v1068 = vpop.f32.mrb[0].mxu0
  %v1069 = vpop.f32.mrb[0].mxu0
  %v1070 = vadd.f32 %v200, %v1069
  %v1071 = vpop.f32.mrb[0].mxu0
  %1072 = vmatprep.mubr.bf16.mxu0 %v573
  %1073 = vmatmul.mubr.bf16.gmra.mrb[0].mxu0 %v572
  %v1074 = vpop.f32.mrb[0].mxu0
  %v1075 = vadd.f32 %v200, %v1074
  %v1076 = vpop.f32.mrb[0].mxu0
  %v1077 = vpop.f32.mrb[0].mxu0
  %v1078 = vadd.f32 %v200, %v1077
  %v1079 = vpop.f32.mrb[0].mxu0
  %1080 = vmatprep.mubr.bf16.mxu0 %v577
  %1081 = vmatmul.mubr.bf16.gmra.mrb[0].mxu0 %v576
  %v1082 = vpop.f32.mrb[0].mxu0
  %v1083 = vadd.f32 %v200, %v1082
  %v1084 = vpop.f32.mrb[0].mxu0
  %v1085 = vpop.f32.mrb[0].mxu0
  %v1086 = vadd.f32 %v200, %v1085
  %v1087 = vpop.f32.mrb[0].mxu0
  %1088 = vmatprep.mubr.bf16.mxu0 %v581
  %1089 = vmatmul.mubr.bf16.gmra.mrb[0].mxu0 %v580
  %v1090 = vpop.f32.mrb[0].mxu0
  %v1091 = vadd.f32 %v200, %v1090
  %v1092 = vpop.f32.mrb[0].mxu0
  %v1093 = vpop.f32.mrb[0].mxu0
  %v1094 = vadd.f32 %v200, %v1093
  %v1095 = vpop.f32.mrb[0].mxu0
  %1096 = vmatprep.mubr.bf16.mxu0 %v585
  %1097 = vmatmul.mubr.bf16.gmra.mrb[0].mxu0 %v584
  %v1098 = vpop.f32.mrb[0].mxu0
  %v1099 = vadd.f32 %v200, %v1098
  %v1100 = vpop.f32.mrb[0].mxu0
  %v1101 = vpop.f32.mrb[0].mxu0
  %v1102 = vadd.f32 %v200, %v1101
  %v1103 = vpop.f32.mrb[0].mxu0
  %1104 = vmatprep.mubr.bf16.mxu0 %v589
  %1105 = vmatmul.mubr.bf16.gmra.mrb[0].mxu0 %v588
  %v1106 = vpop.f32.mrb[0].mxu0
  %v1107 = vadd.f32 %v200, %v1106
  %v1108 = vpop.f32.mrb[0].mxu0
  %v1109 = vpop.f32.mrb[0].mxu0
  %v1110 = vadd.f32 %v200, %v1109
  %v1111 = vpop.f32.mrb[0].mxu0
  %1112 = vmatprep.mubr.bf16.mxu0 %v593
  %1113 = vmatmul.mubr.bf16.gmra.mrb[0].mxu0 %v592
  %v1114 = vpop.f32.mrb[0].mxu0
  %v1115 = vadd.f32 %v200, %v1114
  %v1116 = vpop.f32.mrb[0].mxu0
  %v1117 = vpop.f32.mrb[0].mxu0
  %v1118 = vpop.f32.mrb[0].mxu0
  %1119 = vdwg.mxu0
  %1120 = vmatprep.subr.bf16.mxu0 0
  %1121 = vmatpush1.bf16.msra.mxu0 %v840
  %1122 = vmatprep.subr.bf16.mxu0 0
  %1123 = vmatpush1.bf16.msra.mxu0 %v841
  %1124 = vmatprep.subr.bf16.mxu0 0
  %1125 = vmatpush1.bf16.msra.mxu0 %v842
  %1126 = vmatprep.subr.bf16.mxu0 0
  %1127 = vmatpush1.bf16.msra.mxu0 %v843
  %1128 = vmatprep.subr.bf16.mxu0 0
  %1129 = vmatpush1.bf16.msra.mxu0 %v844
  %1130 = vmatprep.subr.bf16.mxu0 0
  %1131 = vmatpush1.bf16.msra.mxu0 %v845
  %1132 = vmatprep.subr.bf16.mxu0 0
  %1133 = vmatpush1.bf16.msra.mxu0 %v846
  %1134 = vmatprep.subr.bf16.mxu0 0
  %1135 = vmatpush1.bf16.msra.mxu0 %v847
  %1136 = vmatprep.subr.bf16.mxu0 0
  %1137 = vmatpush1.bf16.msra.mxu0 %v848
  %1138 = vmatprep.subr.bf16.mxu0 0
  %1139 = vmatpush1.bf16.msra.mxu0 %v849
  %1140 = vmatprep.subr.bf16.mxu0 0
  %1141 = vmatpush1.bf16.msra.mxu0 %v850
  %1142 = vmatprep.subr.bf16.mxu0 0
  %1143 = vmatpush1.bf16.msra.mxu0 %v851
  %1144 = vmatprep.subr.bf16.mxu0 0
  %1145 = vmatpush1.bf16.msra.mxu0 %v852
  %1146 = vmatprep.subr.bf16.mxu0 0
  %1147 = vmatpush1.bf16.msra.mxu0 %v853
  %1148 = vmatprep.subr.bf16.mxu0 0
  %1149 = vmatpush1.bf16.msra.mxu0 %v854
  %1150 = vmatprep.subr.bf16.mxu0 0
  %1151 = vmatpush1.bf16.msra.mxu0 %v855
  %1152 = vmatprep.mubr.bf16.mxu0 %v499
  %1153 = vmatmul.mubr.bf16.gmra.mrb[0].mxu0 %v498
  %v1154 = vpop.f32.mrb[0].mxu0
  %v1155 = vadd.f32 %v923, %v1154
  %v1156 = vpop.f32.mrb[0].mxu0
  %v1157 = vpop.f32.mrb[0].mxu0
  %v1158 = vadd.f32 %v926, %v1157
  %v1159 = vpop.f32.mrb[0].mxu0
  %1160 = vmatprep.mubr.bf16.mxu0 %v503
  %1161 = vmatmul.mubr.bf16.gmra.mrb[0].mxu0 %v502
  %v1162 = vpop.f32.mrb[0].mxu0
  %v1163 = vadd.f32 %v931, %v1162
  %v1164 = vpop.f32.mrb[0].mxu0
  %v1165 = vpop.f32.mrb[0].mxu0
  %v1166 = vadd.f32 %v934, %v1165
  %v1167 = vpop.f32.mrb[0].mxu0
  %1168 = vmatprep.mubr.bf16.mxu0 %v507
  %1169 = vmatmul.mubr.bf16.gmra.mrb[0].mxu0 %v506
  %v1170 = vpop.f32.mrb[0].mxu0
  %v1171 = vadd.f32 %v939, %v1170
  %v1172 = vpop.f32.mrb[0].mxu0
  %v1173 = vpop.f32.mrb[0].mxu0
  %v1174 = vadd.f32 %v942, %v1173
  %v1175 = vpop.f32.mrb[0].mxu0
  %1176 = vmatprep.mubr.bf16.mxu0 %v511
  %1177 = vmatmul.mubr.bf16.gmra.mrb[0].mxu0 %v510
  %v1178 = vpop.f32.mrb[0].mxu0
  %v1179 = vadd.f32 %v947, %v1178
  %v1180 = vpop.f32.mrb[0].mxu0
  %v1181 = vpop.f32.mrb[0].mxu0
  %v1182 = vadd.f32 %v950, %v1181
  %v1183 = vpop.f32.mrb[0].mxu0
  %1184 = vmatprep.mubr.bf16.mxu0 %v515
  %1185 = vmatmul.mubr.bf16.gmra.mrb[0].mxu0 %v514
  %v1186 = vpop.f32.mrb[0].mxu0
  %v1187 = vadd.f32 %v955, %v1186
  %v1188 = vpop.f32.mrb[0].mxu0
  %v1189 = vpop.f32.mrb[0].mxu0
  %v1190 = vadd.f32 %v958, %v1189
  %v1191 = vpop.f32.mrb[0].mxu0
  %1192 = vmatprep.mubr.bf16.mxu0 %v519
  %1193 = vmatmul.mubr.bf16.gmra.mrb[0].mxu0 %v518
  %v1194 = vpop.f32.mrb[0].mxu0
  %v1195 = vadd.f32 %v963, %v1194
  %v1196 = vpop.f32.mrb[0].mxu0
  %v1197 = vpop.f32.mrb[0].mxu0
  %v1198 = vadd.f32 %v966, %v1197
  %v1199 = vpop.f32.mrb[0].mxu0
  %1200 = vmatprep.mubr.bf16.mxu0 %v523
  %1201 = vmatmul.mubr.bf16.gmra.mrb[0].mxu0 %v522
  %v1202 = vpop.f32.mrb[0].mxu0
  %v1203 = vadd.f32 %v971, %v1202
  %v1204 = vpop.f32.mrb[0].mxu0
  %v1205 = vpop.f32.mrb[0].mxu0
  %v1206 = vadd.f32 %v974, %v1205
  %v1207 = vpop.f32.mrb[0].mxu0
  %1208 = vmatprep.mubr.bf16.mxu0 %v527
  %1209 = vmatmul.mubr.bf16.gmra.mrb[0].mxu0 %v526
  %v1210 = vpop.f32.mrb[0].mxu0
  %v1211 = vadd.f32 %v979, %v1210
  %v1212 = vpop.f32.mrb[0].mxu0
  %v1213 = vpop.f32.mrb[0].mxu0
  %v1214 = vadd.f32 %v982, %v1213
  %v1215 = vpop.f32.mrb[0].mxu0
  %1216 = vmatprep.mubr.bf16.mxu0 %v531
  %1217 = vmatmul.mubr.bf16.gmra.mrb[0].mxu0 %v530
  %v1218 = vpop.f32.mrb[0].mxu0
  %v1219 = vadd.f32 %v987, %v1218
  %v1220 = vpop.f32.mrb[0].mxu0
  %v1221 = vpop.f32.mrb[0].mxu0
  %v1222 = vadd.f32 %v990, %v1221
  %v1223 = vpop.f32.mrb[0].mxu0
  %1224 = vmatprep.mubr.bf16.mxu0 %v535
  %1225 = vmatmul.mubr.bf16.gmra.mrb[0].mxu0 %v534
  %v1226 = vpop.f32.mrb[0].mxu0
  %v1227 = vadd.f32 %v995, %v1226
  %v1228 = vpop.f32.mrb[0].mxu0
  %v1229 = vpop.f32.mrb[0].mxu0
  %v1230 = vadd.f32 %v998, %v1229
  %v1231 = vpop.f32.mrb[0].mxu0
  %1232 = vmatprep.mubr.bf16.mxu0 %v539
  %1233 = vmatmul.mubr.bf16.gmra.mrb[0].mxu0 %v538
  %v1234 = vpop.f32.mrb[0].mxu0
  %v1235 = vadd.f32 %v1003, %v1234
  %v1236 = vpop.f32.mrb[0].mxu0
  %v1237 = vpop.f32.mrb[0].mxu0
  %v1238 = vadd.f32 %v1006, %v1237
  %v1239 = vpop.f32.mrb[0].mxu0
  %1240 = vmatprep.mubr.bf16.mxu0 %v543
  %1241 = vmatmul.mubr.bf16.gmra.mrb[0].mxu0 %v542
  %v1242 = vpop.f32.mrb[0].mxu0
  %v1243 = vadd.f32 %v1011, %v1242
  %v1244 = vpop.f32.mrb[0].mxu0
  %v1245 = vpop.f32.mrb[0].mxu0
  %v1246 = vadd.f32 %v1014, %v1245
  %v1247 = vpop.f32.mrb[0].mxu0
  %1248 = vmatprep.mubr.bf16.mxu0 %v547
  %1249 = vmatmul.mubr.bf16.gmra.mrb[0].mxu0 %v546
  %v1250 = vpop.f32.mrb[0].mxu0
  %v1251 = vadd.f32 %v1019, %v1250
  %v1252 = vpop.f32.mrb[0].mxu0
  %v1253 = vpop.f32.mrb[0].mxu0
  %v1254 = vadd.f32 %v1022, %v1253
  %v1255 = vpop.f32.mrb[0].mxu0
  %1256 = vmatprep.mubr.bf16.mxu0 %v551
  %1257 = vmatmul.mubr.bf16.gmra.mrb[0].mxu0 %v550
  %v1258 = vpop.f32.mrb[0].mxu0
  %v1259 = vadd.f32 %v1027, %v1258
  %v1260 = vpop.f32.mrb[0].mxu0
  %v1261 = vpop.f32.mrb[0].mxu0
  %v1262 = vadd.f32 %v1030, %v1261
  %v1263 = vpop.f32.mrb[0].mxu0
  %1264 = vmatprep.mubr.bf16.mxu0 %v555
  %1265 = vmatmul.mubr.bf16.gmra.mrb[0].mxu0 %v554
  %v1266 = vpop.f32.mrb[0].mxu0
  %v1267 = vadd.f32 %v1035, %v1266
  %v1268 = vpop.f32.mrb[0].mxu0
  %v1269 = vpop.f32.mrb[0].mxu0
  %v1270 = vadd.f32 %v1038, %v1269
  %v1271 = vpop.f32.mrb[0].mxu0
  %1272 = vmatprep.mubr.bf16.mxu0 %v559
  %1273 = vmatmul.mubr.bf16.gmra.mrb[0].mxu0 %v558
  %v1274 = vpop.f32.mrb[0].mxu0
  %v1275 = vadd.f32 %v1043, %v1274
  %v1276 = vpop.f32.mrb[0].mxu0
  %v1277 = vpop.f32.mrb[0].mxu0
  %v1278 = vadd.f32 %v1046, %v1277
  %v1279 = vpop.f32.mrb[0].mxu0
  %1280 = vmatprep.mubr.bf16.mxu0 %v563
  %1281 = vmatmul.mubr.bf16.gmra.mrb[0].mxu0 %v562
  %v1282 = vpop.f32.mrb[0].mxu0
  %v1283 = vadd.f32 %v1051, %v1282
  %v1284 = vpop.f32.mrb[0].mxu0
  %v1285 = vpop.f32.mrb[0].mxu0
  %v1286 = vadd.f32 %v1054, %v1285
  %v1287 = vpop.f32.mrb[0].mxu0
  %1288 = vmatprep.mubr.bf16.mxu0 %v567
  %1289 = vmatmul.mubr.bf16.gmra.mrb[0].mxu0 %v566
  %v1290 = vpop.f32.mrb[0].mxu0
  %v1291 = vadd.f32 %v1059, %v1290
  %v1292 = vpop.f32.mrb[0].mxu0
  %v1293 = vpop.f32.mrb[0].mxu0
  %v1294 = vadd.f32 %v1062, %v1293
  %v1295 = vpop.f32.mrb[0].mxu0
  %1296 = vmatprep.mubr.bf16.mxu0 %v571
  %1297 = vmatmul.mubr.bf16.gmra.mrb[0].mxu0 %v570
  %v1298 = vpop.f32.mrb[0].mxu0
  %v1299 = vadd.f32 %v1067, %v1298
  %v1300 = vpop.f32.mrb[0].mxu0
  %v1301 = vpop.f32.mrb[0].mxu0
  %v1302 = vadd.f32 %v1070, %v1301
  %v1303 = vpop.f32.mrb[0].mxu0
  %1304 = vmatprep.mubr.bf16.mxu0 %v575
  %1305 = vmatmul.mubr.bf16.gmra.mrb[0].mxu0 %v574
  %v1306 = vpop.f32.mrb[0].mxu0
  %v1307 = vadd.f32 %v1075, %v1306
  %v1308 = vpop.f32.mrb[0].mxu0
  %v1309 = vpop.f32.mrb[0].mxu0
  %v1310 = vadd.f32 %v1078, %v1309
  %v1311 = vpop.f32.mrb[0].mxu0
  %1312 = vmatprep.mubr.bf16.mxu0 %v579
  %1313 = vmatmul.mubr.bf16.gmra.mrb[0].mxu0 %v578
  %v1314 = vpop.f32.mrb[0].mxu0
  %v1315 = vadd.f32 %v1083, %v1314
  %v1316 = vpop.f32.mrb[0].mxu0
  %v1317 = vpop.f32.mrb[0].mxu0
  %v1318 = vadd.f32 %v1086, %v1317
  %v1319 = vpop.f32.mrb[0].mxu0
  %1320 = vmatprep.mubr.bf16.mxu0 %v583
  %1321 = vmatmul.mubr.bf16.gmra.mrb[0].mxu0 %v582
  %v1322 = vpop.f32.mrb[0].mxu0
  %v1323 = vadd.f32 %v1091, %v1322
  %v1324 = vpop.f32.mrb[0].mxu0
  %v1325 = vpop.f32.mrb[0].mxu0
  %v1326 = vadd.f32 %v1094, %v1325
  %v1327 = vpop.f32.mrb[0].mxu0
  %1328 = vmatprep.mubr.bf16.mxu0 %v587
  %1329 = vmatmul.mubr.bf16.gmra.mrb[0].mxu0 %v586
  %v1330 = vpop.f32.mrb[0].mxu0
  %v1331 = vadd.f32 %v1099, %v1330
  %v1332 = vpop.f32.mrb[0].mxu0
  %v1333 = vpop.f32.mrb[0].mxu0
  %v1334 = vadd.f32 %v1102, %v1333
  %v1335 = vpop.f32.mrb[0].mxu0
  %1336 = vmatprep.mubr.bf16.mxu0 %v591
  %1337 = vmatmul.mubr.bf16.gmra.mrb[0].mxu0 %v590
  %v1338 = vpop.f32.mrb[0].mxu0
  %v1339 = vadd.f32 %v1107, %v1338
  %v1340 = vpop.f32.mrb[0].mxu0
  %v1341 = vpop.f32.mrb[0].mxu0
  %v1342 = vadd.f32 %v1110, %v1341
  %v1343 = vpop.f32.mrb[0].mxu0
  %1344 = vmatprep.mubr.bf16.mxu0 %v595
  %1345 = vmatmul.mubr.bf16.gmra.mrb[0].mxu0 %v594
  %v1346 = vpop.f32.mrb[0].mxu0
  %v1347 = vadd.f32 %v1115, %v1346
  %v1348 = vpop.f32.mrb[0].mxu0
  %v1349 = vpop.f32.mrb[0].mxu0
  %v1350 = vpop.f32.mrb[0].mxu0
  %1351 = vdwg.mxu0
  %v1352 = vmax.f32 %v1155, 0.0
  %v1353 = vmax.f32 %v1158, 0.0
  %v1354 = vmax.f32 %v1163, 0.0
  %v1355 = vmax.f32 %v1166, 0.0
  %v1356 = vmax.f32 %v1171, 0.0
  %v1357 = vmax.f32 %v1174, 0.0
  %v1358 = vmax.f32 %v1179, 0.0
  %v1359 = vmax.f32 %v1182, 0.0
  %v1360 = vmax.f32 %v1187, 0.0
  %v1361 = vmax.f32 %v1190, 0.0
  %v1362 = vmax.f32 %v1195, 0.0
  %v1363 = vmax.f32 %v1198, 0.0
  %v1364 = vmax.f32 %v1203, 0.0
  %v1365 = vmax.f32 %v1206, 0.0
  %v1366 = vmax.f32 %v1211, 0.0
  %v1367 = vmax.f32 %v1214, 0.0
  %v1368 = vmax.f32 %v1219, 0.0
  %v1369 = vmax.f32 %v1222, 0.0
  %v1370 = vmax.f32 %v1227, 0.0
  %v1371 = vmax.f32 %v1230, 0.0
  %v1372 = vmax.f32 %v1235, 0.0
  %v1373 = vmax.f32 %v1238, 0.0
  %v1374 = vmax.f32 %v1243, 0.0
  %v1375 = vmax.f32 %v1246, 0.0
  %v1376 = vmax.f32 %v1251, 0.0
  %v1377 = vmax.f32 %v1254, 0.0
  %v1378 = vmax.f32 %v1259, 0.0
  %v1379 = vmax.f32 %v1262, 0.0
  %v1380 = vmax.f32 %v1267, 0.0
  %v1381 = vmax.f32 %v1270, 0.0
  %v1382 = vmax.f32 %v1275, 0.0
  %v1383 = vmax.f32 %v1278, 0.0
  %v1384 = vmax.f32 %v1283, 0.0
  %v1385 = vmax.f32 %v1286, 0.0
  %v1386 = vmax.f32 %v1291, 0.0
  %v1387 = vmax.f32 %v1294, 0.0
  %v1388 = vmax.f32 %v1299, 0.0
  %v1389 = vmax.f32 %v1302, 0.0
  %v1390 = vmax.f32 %v1307, 0.0
  %v1391 = vmax.f32 %v1310, 0.0
  %v1392 = vmax.f32 %v1315, 0.0
  %v1393 = vmax.f32 %v1318, 0.0
  %v1394 = vmax.f32 %v1323, 0.0
  %v1395 = vmax.f32 %v1326, 0.0
  %v1396 = vmax.f32 %v1331, 0.0
  %v1397 = vmax.f32 %v1334, 0.0
  %v1398 = vmax.f32 %v1339, 0.0
  %v1399 = vmax.f32 %v1342, 0.0
  %v1400 = vmax.f32 %v1347, 0.0
  %v1401 = vpack.c.bf16 %v1353, %v1352
  %v1402 = vpack.c.bf16 %v1355, %v1354
  %v1403 = vpack.c.bf16 %v1359, %v1356
  %v1404 = vpack.c.bf16 %v1361, %v1360
  %v1405 = vpack.c.bf16 %v1363, %v1362
  %v1406 = vpack.c.bf16 %v1367, %v1366
  %v1407 = vpack.c.bf16 %v1369, %v1368
  %v1408 = vpack.c.bf16 %v1373, %v1370
  %v1409 = vpack.c.bf16 %v1375, %v1374
  %v1410 = vpack.c.bf16 %v1377, %v1376
  %v1411 = vpack.c.bf16 %v1381, %v1380
  %v1412 = vpack.c.bf16 %v1383, %v1382
  %v1413 = vpack.c.bf16 %v1384, %v1384
  %v1414 = vld [vmem:[%s3] sm:$0xf]
  %v1415 = vld [vmem:[%s3 + $0x4] sm:$0xf]
  %v1416 = vld [vmem:[%s3 + $0x8] sm:$0xf]
  %v1417 = vld [vmem:[%s3 + $0xc] sm:$0xf]
  %v1418 = vld [vmem:[%s3 + $0x10] sm:$0xf]
  %v1419 = vld [vmem:[%s3 + $0x14] sm:$0xf]
  %v1420 = vld [vmem:[%s3 + $0x18] sm:$0xf]
  %v1421 = vld [vmem:[%s3 + $0x1c] sm:$0xf]
  %v1422 = vld [vmem:[%s3 + $0x20] sm:$0xf]
  %v1423 = vld [vmem:[%s3 + $0x24] sm:$0xf]
  %v1424 = vld [vmem:[%s3 + $0x28] sm:$0xf]
  %v1425 = vld [vmem:[%s3 + $0x2c] sm:$0xf]
  %v1426 = vld [vmem:[%s3 + $0x30] sm:$0xf]
  %v1427 = vld [vmem:[%s3 + $0x34] sm:$0xf]
  %v1428 = vld [vmem:[%s3 + $0x38] sm:$0xf]
  %v1429 = vld [vmem:[%s3 + $0x3c] sm:$0xf]
  %v1430 = vpack.c.bf16 %v1354, %v1353
  %v1431 = vpack.c.bf16 %v1356, %v1355
  %v1432 = vpack.c.bf16 %v1360, %v1357
  %v1433 = vpack.c.bf16 %v1362, %v1361
  %v1434 = vpack.c.bf16 %v1364, %v1363
  %v1435 = vpack.c.bf16 %v1368, %v1367
  %v1436 = vpack.c.bf16 %v1370, %v1369
  %v1437 = vpack.c.bf16 %v1374, %v1371
  %v1438 = vpack.c.bf16 %v1376, %v1375
  %v1439 = vpack.c.bf16 %v1378, %v1377
  %v1440 = vpack.c.bf16 %v1382, %v1381
  %v1441 = vpack.c.bf16 %v1384, %v1383
  %v1442 = vpack.c.bf16 %v1385, %v1385
  %s1443 = scalar_lea.vmem %s3, 64
  %v1444 = vld [vmem:[%s1443] sm:$0xf]
  %v1445 = vld [vmem:[%s1443 + $0x4] sm:$0xf]
  %v1446 = vld [vmem:[%s1443 + $0x8] sm:$0xf]
  %v1447 = vld [vmem:[%s1443 + $0xc] sm:$0xf]
  %v1448 = vld [vmem:[%s1443 + $0x10] sm:$0xf]
  %v1449 = vld [vmem:[%s1443 + $0x14] sm:$0xf]
  %v1450 = vld [vmem:[%s1443 + $0x18] sm:$0xf]
  %v1451 = vld [vmem:[%s1443 + $0x1c] sm:$0xf]
  %v1452 = vld [vmem:[%s1443 + $0x20] sm:$0xf]
  %v1453 = vld [vmem:[%s1443 + $0x24] sm:$0xf]
  %v1454 = vld [vmem:[%s1443 + $0x28] sm:$0xf]
  %v1455 = vld [vmem:[%s1443 + $0x2c] sm:$0xf]
  %v1456 = vld [vmem:[%s1443 + $0x30] sm:$0xf]
  %v1457 = vld [vmem:[%s1443 + $0x34] sm:$0xf]
  %v1458 = vld [vmem:[%s1443 + $0x38] sm:$0xf]
  %v1459 = vld [vmem:[%s1443 + $0x3c] sm:$0xf]
  %v1476 = vunpack.c.l.b16 %v1444
  %v1477 = vunpack.c.l.b16 %v1445
  %v1478 = vunpack.c.l.b16 %v1446
  %v1479 = vunpack.c.l.b16 %v1447
  %v1480 = vunpack.c.l.b16 %v1448
  %v1481 = vunpack.c.l.b16 %v1449
  %v1482 = vunpack.c.l.b16 %v1450
  %v1483 = vunpack.c.l.b16 %v1451
  %v1484 = vunpack.c.l.b16 %v1452
  %v1485 = vunpack.c.l.b16 %v1453
  %v1486 = vunpack.c.l.b16 %v1454
  %v1487 = vunpack.c.l.b16 %v1455
  %v1488 = vunpack.c.l.b16 %v1456
  %v1489 = vunpack.c.l.b16 %v1457
  %v1490 = vunpack.c.l.b16 %v1458
  %v1491 = vunpack.c.l.b16 %v1459
  %v1492 = vpack.c.b16 %v1477, %v1476
  %v1493 = vpack.c.b16 %v1479, %v1478
  %v1494 = vpack.c.b16 %v1481, %v1480
  %v1495 = vpack.c.b16 %v1483, %v1482
  %v1496 = vpack.c.b16 %v1485, %v1484
  %v1497 = vpack.c.b16 %v1487, %v1486
  %v1498 = vpack.c.b16 %v1489, %v1488
  %v1499 = vpack.c.b16 %v1491, %v1490
  %1508 = vmatprep.subr.bf16.mxu0 0
  %1509 = vmatpush1.bf16.msra.mxu0 %v1492
  %1510 = vmatprep.subr.bf16.mxu0 0
  %1511 = vmatpush1.bf16.msra.mxu0 %v1493
  %1512 = vmatprep.subr.bf16.mxu0 0
  %1513 = vmatpush1.bf16.msra.mxu0 %v1494
  %1514 = vmatprep.subr.bf16.mxu0 0
  %1515 = vmatpush1.bf16.msra.mxu0 %v1495
  %1516 = vmatprep.subr.bf16.mxu0 0
  %1517 = vmatpush1.bf16.msra.mxu0 %v1496
  %1518 = vmatprep.subr.bf16.mxu0 0
  %1519 = vmatpush1.bf16.msra.mxu0 %v1497
  %1520 = vmatprep.subr.bf16.mxu0 0
  %1521 = vmatpush1.bf16.msra.mxu0 %v1498
  %1522 = vmatprep.subr.bf16.mxu0 0
  %1523 = vmatpush1.bf16.msra.mxu0 %v1499
  %1524 = vmatprep.subr.bf16.mxu0 0
  %1525 = vmatpush1.bf16.msra.mxu0 0
  %1526 = vmatprep.subr.bf16.mxu0 0
  %1527 = vmatpush1.bf16.msra.mxu0 0
  %1528 = vmatprep.subr.bf16.mxu0 0
  %1529 = vmatpush1.bf16.msra.mxu0 0
  %1530 = vmatprep.subr.bf16.mxu0 0
  %1531 = vmatpush1.bf16.msra.mxu0 0
  %1532 = vmatprep.subr.bf16.mxu0 0
  %1533 = vmatpush1.bf16.msra.mxu0 0
  %1534 = vmatprep.subr.bf16.mxu0 0
  %1535 = vmatpush1.bf16.msra.mxu0 0
  %1536 = vmatprep.subr.bf16.mxu0 0
  %1537 = vmatpush1.bf16.msra.mxu0 0
  %1538 = vmatprep.subr.bf16.mxu0 0
  %1539 = vmatpush1.bf16.msra.mxu0 0
  %1540 = vmatprep.mubr.bf16.mxu0 0
  %1541 = vmatmul.mubr.bf16.gmra.mrb[0].mxu0 %v1430
  %v1542 = vpop.f32.mrb[0].mxu0
  %v1543 = vadd.f32 0.0, %v1542
  %v1544 = vpop.f32.mrb[0].mxu0
  %v1545 = vpop.f32.mrb[0].mxu0
  %v1546 = vadd.f32 0.0, %v1545
  %v1547 = vpop.f32.mrb[0].mxu0
  %1548 = vmatprep.mubr.bf16.mxu0 0
  %1549 = vmatmul.mubr.bf16.gmra.mrb[0].mxu0 %v1431
  %v1550 = vpop.f32.mrb[0].mxu0
  %v1551 = vadd.f32 0.0, %v1550
  %v1552 = vpop.f32.mrb[0].mxu0
  %v1553 = vpop.f32.mrb[0].mxu0
  %v1554 = vadd.f32 0.0, %v1553
  %v1555 = vpop.f32.mrb[0].mxu0
  %1556 = vmatprep.mubr.bf16.mxu0 0
  %1557 = vmatmul.mubr.bf16.gmra.mrb[0].mxu0 %v1432
  %v1558 = vpop.f32.mrb[0].mxu0
  %v1559 = vadd.f32 0.0, %v1558
  %v1560 = vpop.f32.mrb[0].mxu0
  %v1561 = vpop.f32.mrb[0].mxu0
  %v1562 = vadd.f32 0.0, %v1561
  %v1563 = vpop.f32.mrb[0].mxu0
  %1564 = vmatprep.mubr.bf16.mxu0 0
  %1565 = vmatmul.mubr.bf16.gmra.mrb[0].mxu0 %v1433
  %v1566 = vpop.f32.mrb[0].mxu0
  %v1567 = vadd.f32 0.0, %v1566
  %v1568 = vpop.f32.mrb[0].mxu0
  %v1569 = vpop.f32.mrb[0].mxu0
  %v1570 = vadd.f32 0.0, %v1569
  %v1571 = vpop.f32.mrb[0].mxu0
  %1572 = vmatprep.mubr.bf16.mxu0 0
  %1573 = vmatmul.mubr.bf16.gmra.mrb[0].mxu0 %v1434
  %v1574 = vpop.f32.mrb[0].mxu0
  %v1575 = vadd.f32 0.0, %v1574
  %v1576 = vpop.f32.mrb[0].mxu0
  %v1577 = vpop.f32.mrb[0].mxu0
  %v1578 = vadd.f32 0.0, %v1577
  %v1579 = vpop.f32.mrb[0].mxu0
  %1580 = vmatprep.mubr.bf16.mxu0 0
  %1581 = vmatmul.mubr.bf16.gmra.mrb[0].mxu0 %v1435
  %v1582 = vpop.f32.mrb[0].mxu0
  %v1583 = vadd.f32 0.0, %v1582
  %v1584 = vpop.f32.mrb[0].mxu0
  %v1585 = vpop.f32.mrb[0].mxu0
  %v1586 = vadd.f32 0.0, %v1585
  %v1587 = vpop.f32.mrb[0].mxu0
  %1588 = vmatprep.mubr.bf16.mxu0 0
  %1589 = vmatmul.mubr.bf16.gmra.mrb[0].mxu0 %v1436
  %v1590 = vpop.f32.mrb[0].mxu0
  %v1591 = vadd.f32 0.0, %v1590
  %v1592 = vpop.f32.mrb[0].mxu0
  %v1593 = vpop.f32.mrb[0].mxu0
  %v1594 = vadd.f32 0.0, %v1593
  %v1595 = vpop.f32.mrb[0].mxu0
  %1596 = vmatprep.mubr.bf16.mxu0 0
  %1597 = vmatmul.mubr.bf16.gmra.mrb[0].mxu0 %v1437
  %v1598 = vpop.f32.mrb[0].mxu0
  %v1599 = vadd.f32 0.0, %v1598
  %v1600 = vpop.f32.mrb[0].mxu0
  %v1601 = vpop.f32.mrb[0].mxu0
  %v1602 = vadd.f32 0.0, %v1601
  %v1603 = vpop.f32.mrb[0].mxu0
  %1604 = vmatprep.mubr.bf16.mxu0 0
  %1605 = vmatmul.mubr.bf16.gmra.mrb[0].mxu0 %v1438
  %v1606 = vpop.f32.mrb[0].mxu0
  %v1607 = vadd.f32 0.0, %v1606
  %v1608 = vpop.f32.mrb[0].mxu0
  %v1609 = vpop.f32.mrb[0].mxu0
  %v1610 = vadd.f32 0.0, %v1609
  %v1611 = vpop.f32.mrb[0].mxu0
  %1612 = vmatprep.mubr.bf16.mxu0 0
  %1613 = vmatmul.mubr.bf16.gmra.mrb[0].mxu0 %v1439
  %v1614 = vpop.f32.mrb[0].mxu0
  %v1615 = vadd.f32 0.0, %v1614
  %v1616 = vpop.f32.mrb[0].mxu0
  %v1617 = vpop.f32.mrb[0].mxu0
  %v1618 = vadd.f32 0.0, %v1617
  %v1619 = vpop.f32.mrb[0].mxu0
  %1620 = vmatprep.mubr.bf16.mxu0 0
  %1621 = vmatmul.mubr.bf16.gmra.mrb[0].mxu0 %v1440
  %v1622 = vpop.f32.mrb[0].mxu0
  %v1623 = vadd.f32 0.0, %v1622
  %v1624 = vpop.f32.mrb[0].mxu0
  %v1625 = vpop.f32.mrb[0].mxu0
  %v1626 = vadd.f32 0.0, %v1625
  %v1627 = vpop.f32.mrb[0].mxu0
  %1628 = vmatprep.mubr.bf16.mxu0 0
  %1629 = vmatmul.mubr.bf16.gmra.mrb[0].mxu0 %v1441
  %v1630 = vpop.f32.mrb[0].mxu0
  %v1631 = vadd.f32 0.0, %v1630
  %v1632 = vpop.f32.mrb[0].mxu0
  %v1633 = vpop.f32.mrb[0].mxu0
  %v1634 = vadd.f32 0.0, %v1633
  %v1635 = vpop.f32.mrb[0].mxu0
  %1636 = vmatprep.mubr.bf16.mxu0 0
  %1637 = vmatmul.mubr.bf16.gmra.mrb[0].mxu0 %v1442
  %v1638 = vpop.f32.mrb[0].mxu0
  %v1639 = vadd.f32 0.0, %v1638
  %v1640 = vpop.f32.mrb[0].mxu0
  %v1641 = vpop.f32.mrb[0].mxu0
  %v1642 = vpop.f32.mrb[0].mxu0
  %1643 = vdwg.mxu0
  %v1660 = vunpack.c.l.b16 %v1414
  %v1661 = vunpack.c.l.b16 %v1415
  %v1662 = vunpack.c.l.b16 %v1416
  %v1663 = vunpack.c.l.b16 %v1417
  %v1664 = vunpack.c.l.b16 %v1418
  %v1665 = vunpack.c.l.b16 %v1419
  %v1666 = vunpack.c.l.b16 %v1420
  %v1667 = vunpack.c.l.b16 %v1421
  %v1668 = vunpack.c.l.b16 %v1422
  %v1669 = vunpack.c.l.b16 %v1423
  %v1670 = vunpack.c.l.b16 %v1424
  %v1671 = vunpack.c.l.b16 %v1425
  %v1672 = vunpack.c.l.b16 %v1426
  %v1673 = vunpack.c.l.b16 %v1427
  %v1674 = vunpack.c.l.b16 %v1428
  %v1675 = vunpack.c.l.b16 %v1429
  %v1676 = vpack.c.b16 %v1661, %v1660
  %v1677 = vpack.c.b16 %v1663, %v1662
  %v1678 = vpack.c.b16 %v1665, %v1664
  %v1679 = vpack.c.b16 %v1667, %v1666
  %v1680 = vpack.c.b16 %v1669, %v1668
  %v1681 = vpack.c.b16 %v1671, %v1670
  %v1682 = vpack.c.b16 %v1673, %v1672
  %v1683 = vpack.c.b16 %v1675, %v1674
  %1692 = vmatprep.subr.bf16.mxu0 0
  %1693 = vmatpush1.bf16.msra.mxu0 %v1676
  %1694 = vmatprep.subr.bf16.mxu0 0
  %1695 = vmatpush1.bf16.msra.mxu0 %v1677
  %1696 = vmatprep.subr.bf16.mxu0 0
  %1697 = vmatpush1.bf16.msra.mxu0 %v1678
  %1698 = vmatprep.subr.bf16.mxu0 0
  %1699 = vmatpush1.bf16.msra.mxu0 %v1679
  %1700 = vmatprep.subr.bf16.mxu0 0
  %1701 = vmatpush1.bf16.msra.mxu0 %v1680
  %1702 = vmatprep.subr.bf16.mxu0 0
  %1703 = vmatpush1.bf16.msra.mxu0 %v1681
  %1704 = vmatprep.subr.bf16.mxu0 0
  %1705 = vmatpush1.bf16.msra.mxu0 %v1682
  %1706 = vmatprep.subr.bf16.mxu0 0
  %1707 = vmatpush1.bf16.msra.mxu0 %v1683
  %1708 = vmatprep.subr.bf16.mxu0 0
  %1709 = vmatpush1.bf16.msra.mxu0 0
  %1710 = vmatprep.subr.bf16.mxu0 0
  %1711 = vmatpush1.bf16.msra.mxu0 0
  %1712 = vmatprep.subr.bf16.mxu0 0
  %1713 = vmatpush1.bf16.msra.mxu0 0
  %1714 = vmatprep.subr.bf16.mxu0 0
  %1715 = vmatpush1.bf16.msra.mxu0 0
  %1716 = vmatprep.subr.bf16.mxu0 0
  %1717 = vmatpush1.bf16.msra.mxu0 0
  %1718 = vmatprep.subr.bf16.mxu0 0
  %1719 = vmatpush1.bf16.msra.mxu0 0
  %1720 = vmatprep.subr.bf16.mxu0 0
  %1721 = vmatpush1.bf16.msra.mxu0 0
  %1722 = vmatprep.subr.bf16.mxu0 0
  %1723 = vmatpush1.bf16.msra.mxu0 0
  %1724 = vmatprep.mubr.bf16.mxu0 0
  %1725 = vmatmul.mubr.bf16.gmra.mrb[0].mxu0 %v1401
  %v1726 = vpop.f32.mrb[0].mxu0
  %v1727 = vadd.f32 %v1543, %v1726
  %v1728 = vpop.f32.mrb[0].mxu0
  %v1729 = vpop.f32.mrb[0].mxu0
  %v1730 = vadd.f32 %v1546, %v1729
  %v1731 = vpop.f32.mrb[0].mxu0
  %1732 = vmatprep.mubr.bf16.mxu0 0
  %1733 = vmatmul.mubr.bf16.gmra.mrb[0].mxu0 %v1402
  %v1734 = vpop.f32.mrb[0].mxu0
  %v1735 = vadd.f32 %v1551, %v1734
  %v1736 = vpop.f32.mrb[0].mxu0
  %v1737 = vpop.f32.mrb[0].mxu0
  %v1738 = vadd.f32 %v1554, %v1737
  %v1739 = vpop.f32.mrb[0].mxu0
  %1740 = vmatprep.mubr.bf16.mxu0 0
  %1741 = vmatmul.mubr.bf16.gmra.mrb[0].mxu0 %v1403
  %v1742 = vpop.f32.mrb[0].mxu0
  %v1743 = vadd.f32 %v1559, %v1742
  %v1744 = vpop.f32.mrb[0].mxu0
  %v1745 = vpop.f32.mrb[0].mxu0
  %v1746 = vadd.f32 %v1562, %v1745
  %v1747 = vpop.f32.mrb[0].mxu0
  %1748 = vmatprep.mubr.bf16.mxu0 0
  %1749 = vmatmul.mubr.bf16.gmra.mrb[0].mxu0 %v1404
  %v1750 = vpop.f32.mrb[0].mxu0
  %v1751 = vadd.f32 %v1567, %v1750
  %v1752 = vpop.f32.mrb[0].mxu0
  %v1753 = vpop.f32.mrb[0].mxu0
  %v1754 = vadd.f32 %v1570, %v1753
  %v1755 = vpop.f32.mrb[0].mxu0
  %1756 = vmatprep.mubr.bf16.mxu0 0
  %1757 = vmatmul.mubr.bf16.gmra.mrb[0].mxu0 %v1405
  %v1758 = vpop.f32.mrb[0].mxu0
  %v1759 = vadd.f32 %v1575, %v1758
  %v1760 = vpop.f32.mrb[0].mxu0
  %v1761 = vpop.f32.mrb[0].mxu0
  %v1762 = vadd.f32 %v1578, %v1761
  %v1763 = vpop.f32.mrb[0].mxu0
  %1764 = vmatprep.mubr.bf16.mxu0 0
  %1765 = vmatmul.mubr.bf16.gmra.mrb[0].mxu0 %v1406
  %v1766 = vpop.f32.mrb[0].mxu0
  %v1767 = vadd.f32 %v1583, %v1766
  %v1768 = vpop.f32.mrb[0].mxu0
  %v1769 = vpop.f32.mrb[0].mxu0
  %v1770 = vadd.f32 %v1586, %v1769
  %v1771 = vpop.f32.mrb[0].mxu0
  %1772 = vmatprep.mubr.bf16.mxu0 0
  %1773 = vmatmul.mubr.bf16.gmra.mrb[0].mxu0 %v1407
  %v1774 = vpop.f32.mrb[0].mxu0
  %v1775 = vadd.f32 %v1591, %v1774
  %v1776 = vpop.f32.mrb[0].mxu0
  %v1777 = vpop.f32.mrb[0].mxu0
  %v1778 = vadd.f32 %v1594, %v1777
  %v1779 = vpop.f32.mrb[0].mxu0
  %1780 = vmatprep.mubr.bf16.mxu0 0
  %1781 = vmatmul.mubr.bf16.gmra.mrb[0].mxu0 %v1408
  %v1782 = vpop.f32.mrb[0].mxu0
  %v1783 = vadd.f32 %v1599, %v1782
  %v1784 = vpop.f32.mrb[0].mxu0
  %v1785 = vpop.f32.mrb[0].mxu0
  %v1786 = vadd.f32 %v1602, %v1785
  %v1787 = vpop.f32.mrb[0].mxu0
  %1788 = vmatprep.mubr.bf16.mxu0 0
  %1789 = vmatmul.mubr.bf16.gmra.mrb[0].mxu0 %v1409
  %v1790 = vpop.f32.mrb[0].mxu0
  %v1791 = vadd.f32 %v1607, %v1790
  %v1792 = vpop.f32.mrb[0].mxu0
  %v1793 = vpop.f32.mrb[0].mxu0
  %v1794 = vadd.f32 %v1610, %v1793
  %v1795 = vpop.f32.mrb[0].mxu0
  %1796 = vmatprep.mubr.bf16.mxu0 0
  %1797 = vmatmul.mubr.bf16.gmra.mrb[0].mxu0 %v1410
  %v1798 = vpop.f32.mrb[0].mxu0
  %v1799 = vadd.f32 %v1615, %v1798
  %v1800 = vpop.f32.mrb[0].mxu0
  %v1801 = vpop.f32.mrb[0].mxu0
  %v1802 = vadd.f32 %v1618, %v1801
  %v1803 = vpop.f32.mrb[0].mxu0
  %1804 = vmatprep.mubr.bf16.mxu0 0
  %1805 = vmatmul.mubr.bf16.gmra.mrb[0].mxu0 %v1411
  %v1806 = vpop.f32.mrb[0].mxu0
  %v1807 = vadd.f32 %v1623, %v1806
  %v1808 = vpop.f32.mrb[0].mxu0
  %v1809 = vpop.f32.mrb[0].mxu0
  %v1810 = vadd.f32 %v1626, %v1809
  %v1811 = vpop.f32.mrb[0].mxu0
  %1812 = vmatprep.mubr.bf16.mxu0 0
  %1813 = vmatmul.mubr.bf16.gmra.mrb[0].mxu0 %v1412
  %v1814 = vpop.f32.mrb[0].mxu0
  %v1815 = vadd.f32 %v1631, %v1814
  %v1816 = vpop.f32.mrb[0].mxu0
  %v1817 = vpop.f32.mrb[0].mxu0
  %v1818 = vadd.f32 %v1634, %v1817
  %v1819 = vpop.f32.mrb[0].mxu0
  %1820 = vmatprep.mubr.bf16.mxu0 0
  %1821 = vmatmul.mubr.bf16.gmra.mrb[0].mxu0 %v1413
  %v1822 = vpop.f32.mrb[0].mxu0
  %v1823 = vadd.f32 %v1639, %v1822
  %v1824 = vpop.f32.mrb[0].mxu0
  %v1825 = vpop.f32.mrb[0].mxu0
  %v1826 = vpop.f32.mrb[0].mxu0
  %1827 = vdwg.mxu0
  %v1828 = vpack.c.bf16 %v1357, %v1356
  %v1829 = vpack.c.bf16 %v1361, %v1358
  %v1830 = vpack.c.bf16 %v1365, %v1364
  %v1831 = vpack.c.bf16 %v1371, %v1370
  %v1832 = vpack.c.bf16 %v1375, %v1372
  %v1833 = vpack.c.bf16 %v1379, %v1378
  %v1834 = vpack.c.bf16 %v1385, %v1384
  %v1835 = vpack.c.bf16 %v1386, %v1386
  %s1836 = scalar_lea.vmem %s3, 128
  %v1837 = vld [vmem:[%s1836] sm:$0xf]
  %v1838 = vld [vmem:[%s1836 + $0x4] sm:$0xf]
  %v1839 = vld [vmem:[%s1836 + $0x8] sm:$0xf]
  %v1840 = vld [vmem:[%s1836 + $0xc] sm:$0xf]
  %v1841 = vld [vmem:[%s1836 + $0x10] sm:$0xf]
  %v1842 = vld [vmem:[%s1836 + $0x14] sm:$0xf]
  %v1843 = vld [vmem:[%s1836 + $0x18] sm:$0xf]
  %v1844 = vld [vmem:[%s1836 + $0x1c] sm:$0xf]
  %v1845 = vld [vmem:[%s1836 + $0x20] sm:$0xf]
  %v1846 = vld [vmem:[%s1836 + $0x24] sm:$0xf]
  %v1847 = vld [vmem:[%s1836 + $0x28] sm:$0xf]
  %v1848 = vld [vmem:[%s1836 + $0x2c] sm:$0xf]
  %v1849 = vld [vmem:[%s1836 + $0x30] sm:$0xf]
  %v1850 = vld [vmem:[%s1836 + $0x34] sm:$0xf]
  %v1851 = vld [vmem:[%s1836 + $0x38] sm:$0xf]
  %v1852 = vld [vmem:[%s1836 + $0x3c] sm:$0xf]
  %v1869 = vunpack.c.l.b16 %v1837
  %v1870 = vunpack.c.l.b16 %v1838
  %v1871 = vunpack.c.l.b16 %v1839
  %v1872 = vunpack.c.l.b16 %v1840
  %v1873 = vunpack.c.l.b16 %v1841
  %v1874 = vunpack.c.l.b16 %v1842
  %v1875 = vunpack.c.l.b16 %v1843
  %v1876 = vunpack.c.l.b16 %v1844
  %v1877 = vunpack.c.l.b16 %v1845
  %v1878 = vunpack.c.l.b16 %v1846
  %v1879 = vunpack.c.l.b16 %v1847
  %v1880 = vunpack.c.l.b16 %v1848
  %v1881 = vunpack.c.l.b16 %v1849
  %v1882 = vunpack.c.l.b16 %v1850
  %v1883 = vunpack.c.l.b16 %v1851
  %v1884 = vunpack.c.l.b16 %v1852
  %v1885 = vpack.c.b16 %v1870, %v1869
  %v1886 = vpack.c.b16 %v1872, %v1871
  %v1887 = vpack.c.b16 %v1874, %v1873
  %v1888 = vpack.c.b16 %v1876, %v1875
  %v1889 = vpack.c.b16 %v1878, %v1877
  %v1890 = vpack.c.b16 %v1880, %v1879
  %v1891 = vpack.c.b16 %v1882, %v1881
  %v1892 = vpack.c.b16 %v1884, %v1883
  %1901 = vmatprep.subr.bf16.mxu0 0
  %1902 = vmatpush1.bf16.msra.mxu0 %v1885
  %1903 = vmatprep.subr.bf16.mxu0 0
  %1904 = vmatpush1.bf16.msra.mxu0 %v1886
  %1905 = vmatprep.subr.bf16.mxu0 0
  %1906 = vmatpush1.bf16.msra.mxu0 %v1887
  %1907 = vmatprep.subr.bf16.mxu0 0
  %1908 = vmatpush1.bf16.msra.mxu0 %v1888
  %1909 = vmatprep.subr.bf16.mxu0 0
  %1910 = vmatpush1.bf16.msra.mxu0 %v1889
  %1911 = vmatprep.subr.bf16.mxu0 0
  %1912 = vmatpush1.bf16.msra.mxu0 %v1890
  %1913 = vmatprep.subr.bf16.mxu0 0
  %1914 = vmatpush1.bf16.msra.mxu0 %v1891
  %1915 = vmatprep.subr.bf16.mxu0 0
  %1916 = vmatpush1.bf16.msra.mxu0 %v1892
  %1917 = vmatprep.subr.bf16.mxu0 0
  %1918 = vmatpush1.bf16.msra.mxu0 0
  %1919 = vmatprep.subr.bf16.mxu0 0
  %1920 = vmatpush1.bf16.msra.mxu0 0
  %1921 = vmatprep.subr.bf16.mxu0 0
  %1922 = vmatpush1.bf16.msra.mxu0 0
  %1923 = vmatprep.subr.bf16.mxu0 0
  %1924 = vmatpush1.bf16.msra.mxu0 0
  %1925 = vmatprep.subr.bf16.mxu0 0
  %1926 = vmatpush1.bf16.msra.mxu0 0
  %1927 = vmatprep.subr.bf16.mxu0 0
  %1928 = vmatpush1.bf16.msra.mxu0 0
  %1929 = vmatprep.subr.bf16.mxu0 0
  %1930 = vmatpush1.bf16.msra.mxu0 0
  %1931 = vmatprep.subr.bf16.mxu0 0
  %1932 = vmatpush1.bf16.msra.mxu0 0
  %1933 = vmatprep.mubr.bf16.mxu0 0
  %1934 = vmatmul.mubr.bf16.gmra.mrb[0].mxu0 %v1402
  %v1935 = vpop.f32.mrb[0].mxu0
  %v1936 = vadd.f32 0.0, %v1935
  %v1937 = vpop.f32.mrb[0].mxu0
  %v1938 = vpop.f32.mrb[0].mxu0
  %v1939 = vadd.f32 0.0, %v1938
  %v1940 = vpop.f32.mrb[0].mxu0
  %1941 = vmatprep.mubr.bf16.mxu0 0
  %1942 = vmatmul.mubr.bf16.gmra.mrb[0].mxu0 %v1828
  %v1943 = vpop.f32.mrb[0].mxu0
  %v1944 = vadd.f32 0.0, %v1943
  %v1945 = vpop.f32.mrb[0].mxu0
  %v1946 = vpop.f32.mrb[0].mxu0
  %v1947 = vadd.f32 0.0, %v1946
  %v1948 = vpop.f32.mrb[0].mxu0
  %1949 = vmatprep.mubr.bf16.mxu0 0
  %1950 = vmatmul.mubr.bf16.gmra.mrb[0].mxu0 %v1829
  %v1951 = vpop.f32.mrb[0].mxu0
  %v1952 = vadd.f32 0.0, %v1951
  %v1953 = vpop.f32.mrb[0].mxu0
  %v1954 = vpop.f32.mrb[0].mxu0
  %v1955 = vadd.f32 0.0, %v1954
  %v1956 = vpop.f32.mrb[0].mxu0
  %1957 = vmatprep.mubr.bf16.mxu0 0
  %1958 = vmatmul.mubr.bf16.gmra.mrb[0].mxu0 %v1405
  %v1959 = vpop.f32.mrb[0].mxu0
  %v1960 = vadd.f32 0.0, %v1959
  %v1961 = vpop.f32.mrb[0].mxu0
  %v1962 = vpop.f32.mrb[0].mxu0
  %v1963 = vadd.f32 0.0, %v1962
  %v1964 = vpop.f32.mrb[0].mxu0
  %1965 = vmatprep.mubr.bf16.mxu0 0
  %1966 = vmatmul.mubr.bf16.gmra.mrb[0].mxu0 %v1830
  %v1967 = vpop.f32.mrb[0].mxu0
  %v1968 = vadd.f32 0.0, %v1967
  %v1969 = vpop.f32.mrb[0].mxu0
  %v1970 = vpop.f32.mrb[0].mxu0
  %v1971 = vadd.f32 0.0, %v1970
  %v1972 = vpop.f32.mrb[0].mxu0
  %1973 = vmatprep.mubr.bf16.mxu0 0
  %1974 = vmatmul.mubr.bf16.gmra.mrb[0].mxu0 %v1407
  %v1975 = vpop.f32.mrb[0].mxu0
  %v1976 = vadd.f32 0.0, %v1975
  %v1977 = vpop.f32.mrb[0].mxu0
  %v1978 = vpop.f32.mrb[0].mxu0
  %v1979 = vadd.f32 0.0, %v1978
  %v1980 = vpop.f32.mrb[0].mxu0
  %1981 = vmatprep.mubr.bf16.mxu0 0
  %1982 = vmatmul.mubr.bf16.gmra.mrb[0].mxu0 %v1831
  %v1983 = vpop.f32.mrb[0].mxu0
  %v1984 = vadd.f32 0.0, %v1983
  %v1985 = vpop.f32.mrb[0].mxu0
  %v1986 = vpop.f32.mrb[0].mxu0
  %v1987 = vadd.f32 0.0, %v1986
  %v1988 = vpop.f32.mrb[0].mxu0
  %1989 = vmatprep.mubr.bf16.mxu0 0
  %1990 = vmatmul.mubr.bf16.gmra.mrb[0].mxu0 %v1832
  %v1991 = vpop.f32.mrb[0].mxu0
  %v1992 = vadd.f32 0.0, %v1991
  %v1993 = vpop.f32.mrb[0].mxu0
  %v1994 = vpop.f32.mrb[0].mxu0
  %v1995 = vadd.f32 0.0, %v1994
  %v1996 = vpop.f32.mrb[0].mxu0
  %1997 = vmatprep.mubr.bf16.mxu0 0
  %1998 = vmatmul.mubr.bf16.gmra.mrb[0].mxu0 %v1410
  %v1999 = vpop.f32.mrb[0].mxu0
  %v2000 = vadd.f32 0.0, %v1999
  %v2001 = vpop.f32.mrb[0].mxu0
  %v2002 = vpop.f32.mrb[0].mxu0
  %v2003 = vadd.f32 0.0, %v2002
  %v2004 = vpop.f32.mrb[0].mxu0
  %2005 = vmatprep.mubr.bf16.mxu0 0
  %2006 = vmatmul.mubr.bf16.gmra.mrb[0].mxu0 %v1833
  %v2007 = vpop.f32.mrb[0].mxu0
  %v2008 = vadd.f32 0.0, %v2007
  %v2009 = vpop.f32.mrb[0].mxu0
  %v2010 = vpop.f32.mrb[0].mxu0
  %v2011 = vadd.f32 0.0, %v2010
  %v2012 = vpop.f32.mrb[0].mxu0
  %2013 = vmatprep.mubr.bf16.mxu0 0
  %2014 = vmatmul.mubr.bf16.gmra.mrb[0].mxu0 %v1412
  %v2015 = vpop.f32.mrb[0].mxu0
  %v2016 = vadd.f32 0.0, %v2015
  %v2017 = vpop.f32.mrb[0].mxu0
  %v2018 = vpop.f32.mrb[0].mxu0
  %v2019 = vadd.f32 0.0, %v2018
  %v2020 = vpop.f32.mrb[0].mxu0
  %2021 = vmatprep.mubr.bf16.mxu0 0
  %2022 = vmatmul.mubr.bf16.gmra.mrb[0].mxu0 %v1834
  %v2023 = vpop.f32.mrb[0].mxu0
  %v2024 = vadd.f32 0.0, %v2023
  %v2025 = vpop.f32.mrb[0].mxu0
  %v2026 = vpop.f32.mrb[0].mxu0
  %v2027 = vadd.f32 0.0, %v2026
  %v2028 = vpop.f32.mrb[0].mxu0
  %2029 = vmatprep.mubr.bf16.mxu0 0
  %2030 = vmatmul.mubr.bf16.gmra.mrb[0].mxu0 %v1835
  %v2031 = vpop.f32.mrb[0].mxu0
  %v2032 = vadd.f32 0.0, %v2031
  %v2033 = vpop.f32.mrb[0].mxu0
  %v2034 = vpop.f32.mrb[0].mxu0
  %v2035 = vpop.f32.mrb[0].mxu0
  %2036 = vdwg.mxu0
  %v2037 = vadd.f32 %v1727, %v1936
  %v2038 = vadd.f32 %v1730, %v1939
  %v2039 = vadd.f32 %v1735, %v1944
  %v2040 = vadd.f32 %v1738, %v1947
  %v2041 = vadd.f32 %v1743, %v1952
  %v2042 = vadd.f32 %v1746, %v1955
  %v2043 = vadd.f32 %v1751, %v1960
  %v2044 = vadd.f32 %v1754, %v1963
  %v2045 = vadd.f32 %v1759, %v1968
  %v2046 = vadd.f32 %v1762, %v1971
  %v2047 = vadd.f32 %v1767, %v1976
  %v2048 = vadd.f32 %v1770, %v1979
  %v2049 = vadd.f32 %v1775, %v1984
  %v2050 = vadd.f32 %v1778, %v1987
  %v2051 = vadd.f32 %v1783, %v1992
  %v2052 = vadd.f32 %v1786, %v1995
  %v2053 = vadd.f32 %v1791, %v2000
  %v2054 = vadd.f32 %v1794, %v2003
  %v2055 = vadd.f32 %v1799, %v2008
  %v2056 = vadd.f32 %v1802, %v2011
  %v2057 = vadd.f32 %v1807, %v2016
  %v2058 = vadd.f32 %v1810, %v2019
  %v2059 = vadd.f32 %v1815, %v2024
  %v2060 = vadd.f32 %v1818, %v2027
  %v2061 = vadd.f32 %v1823, %v2032
  %v2062 = vpack.c.bf16 %v1360, %v1359
  %v2063 = vpack.c.bf16 %v1366, %v1363
  %v2064 = vpack.c.bf16 %v1374, %v1373
  %v2065 = vpack.c.bf16 %v1380, %v1377
  %v2066 = vpack.c.bf16 %v1388, %v1387
  %v2067 = vpack.c.bf16 %v1390, %v1389
  %v2068 = vpack.c.bf16 %v1391, %v1391
  %s2069 = scalar_lea.vmem %s3, 192
  %v2070 = vld [vmem:[%s2069] sm:$0xf]
  %v2071 = vld [vmem:[%s2069 + $0x4] sm:$0xf]
  %v2072 = vld [vmem:[%s2069 + $0x8] sm:$0xf]
  %v2073 = vld [vmem:[%s2069 + $0xc] sm:$0xf]
  %v2074 = vld [vmem:[%s2069 + $0x10] sm:$0xf]
  %v2075 = vld [vmem:[%s2069 + $0x14] sm:$0xf]
  %v2076 = vld [vmem:[%s2069 + $0x18] sm:$0xf]
  %v2077 = vld [vmem:[%s2069 + $0x1c] sm:$0xf]
  %v2078 = vld [vmem:[%s2069 + $0x20] sm:$0xf]
  %v2079 = vld [vmem:[%s2069 + $0x24] sm:$0xf]
  %v2080 = vld [vmem:[%s2069 + $0x28] sm:$0xf]
  %v2081 = vld [vmem:[%s2069 + $0x2c] sm:$0xf]
  %v2082 = vld [vmem:[%s2069 + $0x30] sm:$0xf]
  %v2083 = vld [vmem:[%s2069 + $0x34] sm:$0xf]
  %v2084 = vld [vmem:[%s2069 + $0x38] sm:$0xf]
  %v2085 = vld [vmem:[%s2069 + $0x3c] sm:$0xf]
  %v2102 = vunpack.c.l.b16 %v2070
  %v2103 = vunpack.c.l.b16 %v2071
  %v2104 = vunpack.c.l.b16 %v2072
  %v2105 = vunpack.c.l.b16 %v2073
  %v2106 = vunpack.c.l.b16 %v2074
  %v2107 = vunpack.c.l.b16 %v2075
  %v2108 = vunpack.c.l.b16 %v2076
  %v2109 = vunpack.c.l.b16 %v2077
  %v2110 = vunpack.c.l.b16 %v2078
  %v2111 = vunpack.c.l.b16 %v2079
  %v2112 = vunpack.c.l.b16 %v2080
  %v2113 = vunpack.c.l.b16 %v2081
  %v2114 = vunpack.c.l.b16 %v2082
  %v2115 = vunpack.c.l.b16 %v2083
  %v2116 = vunpack.c.l.b16 %v2084
  %v2117 = vunpack.c.l.b16 %v2085
  %v2118 = vpack.c.b16 %v2103, %v2102
  %v2119 = vpack.c.b16 %v2105, %v2104
  %v2120 = vpack.c.b16 %v2107, %v2106
  %v2121 = vpack.c.b16 %v2109, %v2108
  %v2122 = vpack.c.b16 %v2111, %v2110
  %v2123 = vpack.c.b16 %v2113, %v2112
  %v2124 = vpack.c.b16 %v2115, %v2114
  %v2125 = vpack.c.b16 %v2117, %v2116
  %2134 = vmatprep.subr.bf16.mxu0 0
  %2135 = vmatpush1.bf16.msra.mxu0 %v2118
  %2136 = vmatprep.subr.bf16.mxu0 0
  %2137 = vmatpush1.bf16.msra.mxu0 %v2119
  %2138 = vmatprep.subr.bf16.mxu0 0
  %2139 = vmatpush1.bf16.msra.mxu0 %v2120
  %2140 = vmatprep.subr.bf16.mxu0 0
  %2141 = vmatpush1.bf16.msra.mxu0 %v2121
  %2142 = vmatprep.subr.bf16.mxu0 0
  %2143 = vmatpush1.bf16.msra.mxu0 %v2122
  %2144 = vmatprep.subr.bf16.mxu0 0
  %2145 = vmatpush1.bf16.msra.mxu0 %v2123
  %2146 = vmatprep.subr.bf16.mxu0 0
  %2147 = vmatpush1.bf16.msra.mxu0 %v2124
  %2148 = vmatprep.subr.bf16.mxu0 0
  %2149 = vmatpush1.bf16.msra.mxu0 %v2125
  %2150 = vmatprep.subr.bf16.mxu0 0
  %2151 = vmatpush1.bf16.msra.mxu0 0
  %2152 = vmatprep.subr.bf16.mxu0 0
  %2153 = vmatpush1.bf16.msra.mxu0 0
  %2154 = vmatprep.subr.bf16.mxu0 0
  %2155 = vmatpush1.bf16.msra.mxu0 0
  %2156 = vmatprep.subr.bf16.mxu0 0
  %2157 = vmatpush1.bf16.msra.mxu0 0
  %2158 = vmatprep.subr.bf16.mxu0 0
  %2159 = vmatpush1.bf16.msra.mxu0 0
  %2160 = vmatprep.subr.bf16.mxu0 0
  %2161 = vmatpush1.bf16.msra.mxu0 0
  %2162 = vmatprep.subr.bf16.mxu0 0
  %2163 = vmatpush1.bf16.msra.mxu0 0
  %2164 = vmatprep.subr.bf16.mxu0 0
  %2165 = vmatpush1.bf16.msra.mxu0 0
  %2166 = vmatprep.mubr.bf16.mxu0 0
  %2167 = vmatmul.mubr.bf16.gmra.mrb[0].mxu0 %v2062
  %v2168 = vpop.f32.mrb[0].mxu0
  %v2169 = vadd.f32 0.0, %v2168
  %v2170 = vpop.f32.mrb[0].mxu0
  %v2171 = vpop.f32.mrb[0].mxu0
  %v2172 = vadd.f32 0.0, %v2171
  %v2173 = vpop.f32.mrb[0].mxu0
  %2174 = vmatprep.mubr.bf16.mxu0 0
  %2175 = vmatmul.mubr.bf16.gmra.mrb[0].mxu0 %v1433
  %v2176 = vpop.f32.mrb[0].mxu0
  %v2177 = vadd.f32 0.0, %v2176
  %v2178 = vpop.f32.mrb[0].mxu0
  %v2179 = vpop.f32.mrb[0].mxu0
  %v2180 = vadd.f32 0.0, %v2179
  %v2181 = vpop.f32.mrb[0].mxu0
  %2182 = vmatprep.mubr.bf16.mxu0 0
  %2183 = vmatmul.mubr.bf16.gmra.mrb[0].mxu0 %v2063
  %v2184 = vpop.f32.mrb[0].mxu0
  %v2185 = vadd.f32 0.0, %v2184
  %v2186 = vpop.f32.mrb[0].mxu0
  %v2187 = vpop.f32.mrb[0].mxu0
  %v2188 = vadd.f32 0.0, %v2187
  %v2189 = vpop.f32.mrb[0].mxu0
  %2190 = vmatprep.mubr.bf16.mxu0 0
  %2191 = vmatmul.mubr.bf16.gmra.mrb[0].mxu0 %v1435
  %v2192 = vpop.f32.mrb[0].mxu0
  %v2193 = vadd.f32 0.0, %v2192
  %v2194 = vpop.f32.mrb[0].mxu0
  %v2195 = vpop.f32.mrb[0].mxu0
  %v2196 = vadd.f32 0.0, %v2195
  %v2197 = vpop.f32.mrb[0].mxu0
  %2198 = vmatprep.mubr.bf16.mxu0 0
  %2199 = vmatmul.mubr.bf16.gmra.mrb[0].mxu0 %v1436
  %v2200 = vpop.f32.mrb[0].mxu0
  %v2201 = vadd.f32 0.0, %v2200
  %v2202 = vpop.f32.mrb[0].mxu0
  %v2203 = vpop.f32.mrb[0].mxu0
  %v2204 = vadd.f32 0.0, %v2203
  %v2205 = vpop.f32.mrb[0].mxu0
  %2206 = vmatprep.mubr.bf16.mxu0 0
  %2207 = vmatmul.mubr.bf16.gmra.mrb[0].mxu0 %v2064
  %v2208 = vpop.f32.mrb[0].mxu0
  %v2209 = vadd.f32 0.0, %v2208
  %v2210 = vpop.f32.mrb[0].mxu0
  %v2211 = vpop.f32.mrb[0].mxu0
  %v2212 = vadd.f32 0.0, %v2211
  %v2213 = vpop.f32.mrb[0].mxu0
  %2214 = vmatprep.mubr.bf16.mxu0 0
  %2215 = vmatmul.mubr.bf16.gmra.mrb[0].mxu0 %v1438
  %v2216 = vpop.f32.mrb[0].mxu0
  %v2217 = vadd.f32 0.0, %v2216
  %v2218 = vpop.f32.mrb[0].mxu0
  %v2219 = vpop.f32.mrb[0].mxu0
  %v2220 = vadd.f32 0.0, %v2219
  %v2221 = vpop.f32.mrb[0].mxu0
  %2222 = vmatprep.mubr.bf16.mxu0 0
  %2223 = vmatmul.mubr.bf16.gmra.mrb[0].mxu0 %v2065
  %v2224 = vpop.f32.mrb[0].mxu0
  %v2225 = vadd.f32 0.0, %v2224
  %v2226 = vpop.f32.mrb[0].mxu0
  %v2227 = vpop.f32.mrb[0].mxu0
  %v2228 = vadd.f32 0.0, %v2227
  %v2229 = vpop.f32.mrb[0].mxu0
  %2230 = vmatprep.mubr.bf16.mxu0 0
  %2231 = vmatmul.mubr.bf16.gmra.mrb[0].mxu0 %v1440
  %v2232 = vpop.f32.mrb[0].mxu0
  %v2233 = vadd.f32 0.0, %v2232
  %v2234 = vpop.f32.mrb[0].mxu0
  %v2235 = vpop.f32.mrb[0].mxu0
  %v2236 = vadd.f32 0.0, %v2235
  %v2237 = vpop.f32.mrb[0].mxu0
  %2238 = vmatprep.mubr.bf16.mxu0 0
  %2239 = vmatmul.mubr.bf16.gmra.mrb[0].mxu0 %v1441
  %v2240 = vpop.f32.mrb[0].mxu0
  %v2241 = vadd.f32 0.0, %v2240
  %v2242 = vpop.f32.mrb[0].mxu0
  %v2243 = vpop.f32.mrb[0].mxu0
  %v2244 = vadd.f32 0.0, %v2243
  %v2245 = vpop.f32.mrb[0].mxu0
  %2246 = vmatprep.mubr.bf16.mxu0 0
  %2247 = vmatmul.mubr.bf16.gmra.mrb[0].mxu0 %v2066
  %v2248 = vpop.f32.mrb[0].mxu0
  %v2249 = vadd.f32 0.0, %v2248
  %v2250 = vpop.f32.mrb[0].mxu0
  %v2251 = vpop.f32.mrb[0].mxu0
  %v2252 = vadd.f32 0.0, %v2251
  %v2253 = vpop.f32.mrb[0].mxu0
  %2254 = vmatprep.mubr.bf16.mxu0 0
  %2255 = vmatmul.mubr.bf16.gmra.mrb[0].mxu0 %v2067
  %v2256 = vpop.f32.mrb[0].mxu0
  %v2257 = vadd.f32 0.0, %v2256
  %v2258 = vpop.f32.mrb[0].mxu0
  %v2259 = vpop.f32.mrb[0].mxu0
  %v2260 = vadd.f32 0.0, %v2259
  %v2261 = vpop.f32.mrb[0].mxu0
  %2262 = vmatprep.mubr.bf16.mxu0 0
  %2263 = vmatmul.mubr.bf16.gmra.mrb[0].mxu0 %v2068
  %v2264 = vpop.f32.mrb[0].mxu0
  %v2265 = vadd.f32 0.0, %v2264
  %v2266 = vpop.f32.mrb[0].mxu0
  %v2267 = vpop.f32.mrb[0].mxu0
  %v2268 = vpop.f32.mrb[0].mxu0
  %2269 = vdwg.mxu0
  %v2270 = vadd.f32 %v2037, %v2169
  %v2271 = vadd.f32 %v2038, %v2172
  %v2272 = vadd.f32 %v2039, %v2177
  %v2273 = vadd.f32 %v2040, %v2180
  %v2274 = vadd.f32 %v2041, %v2185
  %v2275 = vadd.f32 %v2042, %v2188
  %v2276 = vadd.f32 %v2043, %v2193
  %v2277 = vadd.f32 %v2044, %v2196
  %v2278 = vadd.f32 %v2045, %v2201
  %v2279 = vadd.f32 %v2046, %v2204
  %v2280 = vadd.f32 %v2047, %v2209
  %v2281 = vadd.f32 %v2048, %v2212
  %v2282 = vadd.f32 %v2049, %v2217
  %v2283 = vadd.f32 %v2050, %v2220
  %v2284 = vadd.f32 %v2051, %v2225
  %v2285 = vadd.f32 %v2052, %v2228
  %v2286 = vadd.f32 %v2053, %v2233
  %v2287 = vadd.f32 %v2054, %v2236
  %v2288 = vadd.f32 %v2055, %v2241
  %v2289 = vadd.f32 %v2056, %v2244
  %v2290 = vadd.f32 %v2057, %v2249
  %v2291 = vadd.f32 %v2058, %v2252
  %v2292 = vadd.f32 %v2059, %v2257
  %v2293 = vadd.f32 %v2060, %v2260
  %v2294 = vadd.f32 %v2061, %v2265
  %v2295 = vpack.c.bf16 %v1367, %v1364
  %v2296 = vpack.c.bf16 %v1381, %v1378
  %v2297 = vpack.c.bf16 %v1389, %v1388
  %v2298 = vpack.c.bf16 %v1391, %v1390
  %v2299 = vpack.c.bf16 %v1392, %v1392
  %s2300 = scalar_lea.vmem %s3, 256
  %v2301 = vld [vmem:[%s2300] sm:$0xf]
  %v2302 = vld [vmem:[%s2300 + $0x4] sm:$0xf]
  %v2303 = vld [vmem:[%s2300 + $0x8] sm:$0xf]
  %v2304 = vld [vmem:[%s2300 + $0xc] sm:$0xf]
  %v2305 = vld [vmem:[%s2300 + $0x10] sm:$0xf]
  %v2306 = vld [vmem:[%s2300 + $0x14] sm:$0xf]
  %v2307 = vld [vmem:[%s2300 + $0x18] sm:$0xf]
  %v2308 = vld [vmem:[%s2300 + $0x1c] sm:$0xf]
  %v2309 = vld [vmem:[%s2300 + $0x20] sm:$0xf]
  %v2310 = vld [vmem:[%s2300 + $0x24] sm:$0xf]
  %v2311 = vld [vmem:[%s2300 + $0x28] sm:$0xf]
  %v2312 = vld [vmem:[%s2300 + $0x2c] sm:$0xf]
  %v2313 = vld [vmem:[%s2300 + $0x30] sm:$0xf]
  %v2314 = vld [vmem:[%s2300 + $0x34] sm:$0xf]
  %v2315 = vld [vmem:[%s2300 + $0x38] sm:$0xf]
  %v2316 = vld [vmem:[%s2300 + $0x3c] sm:$0xf]
  %v2333 = vunpack.c.l.b16 %v2301
  %v2334 = vunpack.c.l.b16 %v2302
  %v2335 = vunpack.c.l.b16 %v2303
  %v2336 = vunpack.c.l.b16 %v2304
  %v2337 = vunpack.c.l.b16 %v2305
  %v2338 = vunpack.c.l.b16 %v2306
  %v2339 = vunpack.c.l.b16 %v2307
  %v2340 = vunpack.c.l.b16 %v2308
  %v2341 = vunpack.c.l.b16 %v2309
  %v2342 = vunpack.c.l.b16 %v2310
  %v2343 = vunpack.c.l.b16 %v2311
  %v2344 = vunpack.c.l.b16 %v2312
  %v2345 = vunpack.c.l.b16 %v2313
  %v2346 = vunpack.c.l.b16 %v2314
  %v2347 = vunpack.c.l.b16 %v2315
  %v2348 = vunpack.c.l.b16 %v2316
  %v2349 = vpack.c.b16 %v2334, %v2333
  %v2350 = vpack.c.b16 %v2336, %v2335
  %v2351 = vpack.c.b16 %v2338, %v2337
  %v2352 = vpack.c.b16 %v2340, %v2339
  %v2353 = vpack.c.b16 %v2342, %v2341
  %v2354 = vpack.c.b16 %v2344, %v2343
  %v2355 = vpack.c.b16 %v2346, %v2345
  %v2356 = vpack.c.b16 %v2348, %v2347
  %2365 = vmatprep.subr.bf16.mxu0 0
  %2366 = vmatpush1.bf16.msra.mxu0 %v2349
  %2367 = vmatprep.subr.bf16.mxu0 0
  %2368 = vmatpush1.bf16.msra.mxu0 %v2350
  %2369 = vmatprep.subr.bf16.mxu0 0
  %2370 = vmatpush1.bf16.msra.mxu0 %v2351
  %2371 = vmatprep.subr.bf16.mxu0 0
  %2372 = vmatpush1.bf16.msra.mxu0 %v2352
  %2373 = vmatprep.subr.bf16.mxu0 0
  %2374 = vmatpush1.bf16.msra.mxu0 %v2353
  %2375 = vmatprep.subr.bf16.mxu0 0
  %2376 = vmatpush1.bf16.msra.mxu0 %v2354
  %2377 = vmatprep.subr.bf16.mxu0 0
  %2378 = vmatpush1.bf16.msra.mxu0 %v2355
  %2379 = vmatprep.subr.bf16.mxu0 0
  %2380 = vmatpush1.bf16.msra.mxu0 %v2356
  %2381 = vmatprep.subr.bf16.mxu0 0
  %2382 = vmatpush1.bf16.msra.mxu0 0
  %2383 = vmatprep.subr.bf16.mxu0 0
  %2384 = vmatpush1.bf16.msra.mxu0 0
  %2385 = vmatprep.subr.bf16.mxu0 0
  %2386 = vmatpush1.bf16.msra.mxu0 0
  %2387 = vmatprep.subr.bf16.mxu0 0
  %2388 = vmatpush1.bf16.msra.mxu0 0
  %2389 = vmatprep.subr.bf16.mxu0 0
  %2390 = vmatpush1.bf16.msra.mxu0 0
  %2391 = vmatprep.subr.bf16.mxu0 0
  %2392 = vmatpush1.bf16.msra.mxu0 0
  %2393 = vmatprep.subr.bf16.mxu0 0
  %2394 = vmatpush1.bf16.msra.mxu0 0
  %2395 = vmatprep.subr.bf16.mxu0 0
  %2396 = vmatpush1.bf16.msra.mxu0 0
  %2397 = vmatprep.mubr.bf16.mxu0 0
  %2398 = vmatmul.mubr.bf16.gmra.mrb[0].mxu0 %v1404
  %v2399 = vpop.f32.mrb[0].mxu0
  %v2400 = vadd.f32 0.0, %v2399
  %v2401 = vpop.f32.mrb[0].mxu0
  %v2402 = vpop.f32.mrb[0].mxu0
  %v2403 = vadd.f32 0.0, %v2402
  %v2404 = vpop.f32.mrb[0].mxu0
  %2405 = vmatprep.mubr.bf16.mxu0 0
  %2406 = vmatmul.mubr.bf16.gmra.mrb[0].mxu0 %v1405
  %v2407 = vpop.f32.mrb[0].mxu0
  %v2408 = vadd.f32 0.0, %v2407
  %v2409 = vpop.f32.mrb[0].mxu0
  %v2410 = vpop.f32.mrb[0].mxu0
  %v2411 = vadd.f32 0.0, %v2410
  %v2412 = vpop.f32.mrb[0].mxu0
  %2413 = vmatprep.mubr.bf16.mxu0 0
  %2414 = vmatmul.mubr.bf16.gmra.mrb[0].mxu0 %v2295
  %v2415 = vpop.f32.mrb[0].mxu0
  %v2416 = vadd.f32 0.0, %v2415
  %v2417 = vpop.f32.mrb[0].mxu0
  %v2418 = vpop.f32.mrb[0].mxu0
  %v2419 = vadd.f32 0.0, %v2418
  %v2420 = vpop.f32.mrb[0].mxu0
  %2421 = vmatprep.mubr.bf16.mxu0 0
  %2422 = vmatmul.mubr.bf16.gmra.mrb[0].mxu0 %v1407
  %v2423 = vpop.f32.mrb[0].mxu0
  %v2424 = vadd.f32 0.0, %v2423
  %v2425 = vpop.f32.mrb[0].mxu0
  %v2426 = vpop.f32.mrb[0].mxu0
  %v2427 = vadd.f32 0.0, %v2426
  %v2428 = vpop.f32.mrb[0].mxu0
  %2429 = vmatprep.mubr.bf16.mxu0 0
  %2430 = vmatmul.mubr.bf16.gmra.mrb[0].mxu0 %v1831
  %v2431 = vpop.f32.mrb[0].mxu0
  %v2432 = vadd.f32 0.0, %v2431
  %v2433 = vpop.f32.mrb[0].mxu0
  %v2434 = vpop.f32.mrb[0].mxu0
  %v2435 = vadd.f32 0.0, %v2434
  %v2436 = vpop.f32.mrb[0].mxu0
  %2437 = vmatprep.mubr.bf16.mxu0 0
  %2438 = vmatmul.mubr.bf16.gmra.mrb[0].mxu0 %v1409
  %v2439 = vpop.f32.mrb[0].mxu0
  %v2440 = vadd.f32 0.0, %v2439
  %v2441 = vpop.f32.mrb[0].mxu0
  %v2442 = vpop.f32.mrb[0].mxu0
  %v2443 = vadd.f32 0.0, %v2442
  %v2444 = vpop.f32.mrb[0].mxu0
  %2445 = vmatprep.mubr.bf16.mxu0 0
  %2446 = vmatmul.mubr.bf16.gmra.mrb[0].mxu0 %v1410
  %v2447 = vpop.f32.mrb[0].mxu0
  %v2448 = vadd.f32 0.0, %v2447
  %v2449 = vpop.f32.mrb[0].mxu0
  %v2450 = vpop.f32.mrb[0].mxu0
  %v2451 = vadd.f32 0.0, %v2450
  %v2452 = vpop.f32.mrb[0].mxu0
  %2453 = vmatprep.mubr.bf16.mxu0 0
  %2454 = vmatmul.mubr.bf16.gmra.mrb[0].mxu0 %v2296
  %v2455 = vpop.f32.mrb[0].mxu0
  %v2456 = vadd.f32 0.0, %v2455
  %v2457 = vpop.f32.mrb[0].mxu0
  %v2458 = vpop.f32.mrb[0].mxu0
  %v2459 = vadd.f32 0.0, %v2458
  %v2460 = vpop.f32.mrb[0].mxu0
  %2461 = vmatprep.mubr.bf16.mxu0 0
  %2462 = vmatmul.mubr.bf16.gmra.mrb[0].mxu0 %v1412
  %v2463 = vpop.f32.mrb[0].mxu0
  %v2464 = vadd.f32 0.0, %v2463
  %v2465 = vpop.f32.mrb[0].mxu0
  %v2466 = vpop.f32.mrb[0].mxu0
  %v2467 = vadd.f32 0.0, %v2466
  %v2468 = vpop.f32.mrb[0].mxu0
  %2469 = vmatprep.mubr.bf16.mxu0 0
  %2470 = vmatmul.mubr.bf16.gmra.mrb[0].mxu0 %v1834
  %v2471 = vpop.f32.mrb[0].mxu0
  %v2472 = vadd.f32 0.0, %v2471
  %v2473 = vpop.f32.mrb[0].mxu0
  %v2474 = vpop.f32.mrb[0].mxu0
  %v2475 = vadd.f32 0.0, %v2474
  %v2476 = vpop.f32.mrb[0].mxu0
  %2477 = vmatprep.mubr.bf16.mxu0 0
  %2478 = vmatmul.mubr.bf16.gmra.mrb[0].mxu0 %v2297
  %v2479 = vpop.f32.mrb[0].mxu0
  %v2480 = vadd.f32 0.0, %v2479
  %v2481 = vpop.f32.mrb[0].mxu0
  %v2482 = vpop.f32.mrb[0].mxu0
  %v2483 = vadd.f32 0.0, %v2482
  %v2484 = vpop.f32.mrb[0].mxu0
  %2485 = vmatprep.mubr.bf16.mxu0 0
  %2486 = vmatmul.mubr.bf16.gmra.mrb[0].mxu0 %v2298
  %v2487 = vpop.f32.mrb[0].mxu0
  %v2488 = vadd.f32 0.0, %v2487
  %v2489 = vpop.f32.mrb[0].mxu0
  %v2490 = vpop.f32.mrb[0].mxu0
  %v2491 = vadd.f32 0.0, %v2490
  %v2492 = vpop.f32.mrb[0].mxu0
  %2493 = vmatprep.mubr.bf16.mxu0 0
  %2494 = vmatmul.mubr.bf16.gmra.mrb[0].mxu0 %v2299
  %v2495 = vpop.f32.mrb[0].mxu0
  %v2496 = vadd.f32 0.0, %v2495
  %v2497 = vpop.f32.mrb[0].mxu0
  %v2498 = vpop.f32.mrb[0].mxu0
  %v2499 = vpop.f32.mrb[0].mxu0
  %2500 = vdwg.mxu0
  %v2501 = vadd.f32 %v2270, %v2400
  %v2502 = vadd.f32 %v2271, %v2403
  %v2503 = vadd.f32 %v2272, %v2408
  %v2504 = vadd.f32 %v2273, %v2411
  %v2505 = vadd.f32 %v2274, %v2416
  %v2506 = vadd.f32 %v2275, %v2419
  %v2507 = vadd.f32 %v2276, %v2424
  %v2508 = vadd.f32 %v2277, %v2427
  %v2509 = vadd.f32 %v2278, %v2432
  %v2510 = vadd.f32 %v2279, %v2435
  %v2511 = vadd.f32 %v2280, %v2440
  %v2512 = vadd.f32 %v2281, %v2443
  %v2513 = vadd.f32 %v2282, %v2448
  %v2514 = vadd.f32 %v2283, %v2451
  %v2515 = vadd.f32 %v2284, %v2456
  %v2516 = vadd.f32 %v2285, %v2459
  %v2517 = vadd.f32 %v2286, %v2464
  %v2518 = vadd.f32 %v2287, %v2467
  %v2519 = vadd.f32 %v2288, %v2472
  %v2520 = vadd.f32 %v2289, %v2475
  %v2521 = vadd.f32 %v2290, %v2480
  %v2522 = vadd.f32 %v2291, %v2483
  %v2523 = vadd.f32 %v2292, %v2488
  %v2524 = vadd.f32 %v2293, %v2491
  %v2525 = vadd.f32 %v2294, %v2496
  %v2526 = vpack.c.bf16 %v1368, %v1365
  %v2527 = vpack.c.bf16 %v1372, %v1371
  %v2528 = vpack.c.bf16 %v1382, %v1379
  %v2529 = vpack.c.bf16 %v1386, %v1385
  %v2530 = vpack.c.bf16 %v1392, %v1391
  %v2531 = vpack.c.bf16 %v1393, %v1393
  %s2532 = scalar_lea.vmem %s3, 320
  %v2533 = vld [vmem:[%s2532] sm:$0xf]
  %v2534 = vld [vmem:[%s2532 + $0x4] sm:$0xf]
  %v2535 = vld [vmem:[%s2532 + $0x8] sm:$0xf]
  %v2536 = vld [vmem:[%s2532 + $0xc] sm:$0xf]
  %v2537 = vld [vmem:[%s2532 + $0x10] sm:$0xf]
  %v2538 = vld [vmem:[%s2532 + $0x14] sm:$0xf]
  %v2539 = vld [vmem:[%s2532 + $0x18] sm:$0xf]
  %v2540 = vld [vmem:[%s2532 + $0x1c] sm:$0xf]
  %v2541 = vld [vmem:[%s2532 + $0x20] sm:$0xf]
  %v2542 = vld [vmem:[%s2532 + $0x24] sm:$0xf]
  %v2543 = vld [vmem:[%s2532 + $0x28] sm:$0xf]
  %v2544 = vld [vmem:[%s2532 + $0x2c] sm:$0xf]
  %v2545 = vld [vmem:[%s2532 + $0x30] sm:$0xf]
  %v2546 = vld [vmem:[%s2532 + $0x34] sm:$0xf]
  %v2547 = vld [vmem:[%s2532 + $0x38] sm:$0xf]
  %v2548 = vld [vmem:[%s2532 + $0x3c] sm:$0xf]
  %v2565 = vunpack.c.l.b16 %v2533
  %v2566 = vunpack.c.l.b16 %v2534
  %v2567 = vunpack.c.l.b16 %v2535
  %v2568 = vunpack.c.l.b16 %v2536
  %v2569 = vunpack.c.l.b16 %v2537
  %v2570 = vunpack.c.l.b16 %v2538
  %v2571 = vunpack.c.l.b16 %v2539
  %v2572 = vunpack.c.l.b16 %v2540
  %v2573 = vunpack.c.l.b16 %v2541
  %v2574 = vunpack.c.l.b16 %v2542
  %v2575 = vunpack.c.l.b16 %v2543
  %v2576 = vunpack.c.l.b16 %v2544
  %v2577 = vunpack.c.l.b16 %v2545
  %v2578 = vunpack.c.l.b16 %v2546
  %v2579 = vunpack.c.l.b16 %v2547
  %v2580 = vunpack.c.l.b16 %v2548
  %v2581 = vpack.c.b16 %v2566, %v2565
  %v2582 = vpack.c.b16 %v2568, %v2567
  %v2583 = vpack.c.b16 %v2570, %v2569
  %v2584 = vpack.c.b16 %v2572, %v2571
  %v2585 = vpack.c.b16 %v2574, %v2573
  %v2586 = vpack.c.b16 %v2576, %v2575
  %v2587 = vpack.c.b16 %v2578, %v2577
  %v2588 = vpack.c.b16 %v2580, %v2579
  %2597 = vmatprep.subr.bf16.mxu0 0
  %2598 = vmatpush1.bf16.msra.mxu0 %v2581
  %2599 = vmatprep.subr.bf16.mxu0 0
  %2600 = vmatpush1.bf16.msra.mxu0 %v2582
  %2601 = vmatprep.subr.bf16.mxu0 0
  %2602 = vmatpush1.bf16.msra.mxu0 %v2583
  %2603 = vmatprep.subr.bf16.mxu0 0
  %2604 = vmatpush1.bf16.msra.mxu0 %v2584
  %2605 = vmatprep.subr.bf16.mxu0 0
  %2606 = vmatpush1.bf16.msra.mxu0 %v2585
  %2607 = vmatprep.subr.bf16.mxu0 0
  %2608 = vmatpush1.bf16.msra.mxu0 %v2586
  %2609 = vmatprep.subr.bf16.mxu0 0
  %2610 = vmatpush1.bf16.msra.mxu0 %v2587
  %2611 = vmatprep.subr.bf16.mxu0 0
  %2612 = vmatpush1.bf16.msra.mxu0 %v2588
  %2613 = vmatprep.subr.bf16.mxu0 0
  %2614 = vmatpush1.bf16.msra.mxu0 0
  %2615 = vmatprep.subr.bf16.mxu0 0
  %2616 = vmatpush1.bf16.msra.mxu0 0
  %2617 = vmatprep.subr.bf16.mxu0 0
  %2618 = vmatpush1.bf16.msra.mxu0 0
  %2619 = vmatprep.subr.bf16.mxu0 0
  %2620 = vmatpush1.bf16.msra.mxu0 0
  %2621 = vmatprep.subr.bf16.mxu0 0
  %2622 = vmatpush1.bf16.msra.mxu0 0
  %2623 = vmatprep.subr.bf16.mxu0 0
  %2624 = vmatpush1.bf16.msra.mxu0 0
  %2625 = vmatprep.subr.bf16.mxu0 0
  %2626 = vmatpush1.bf16.msra.mxu0 0
  %2627 = vmatprep.subr.bf16.mxu0 0
  %2628 = vmatpush1.bf16.msra.mxu0 0
  %2629 = vmatprep.mubr.bf16.mxu0 0
  %2630 = vmatmul.mubr.bf16.gmra.mrb[0].mxu0 %v1433
  %v2631 = vpop.f32.mrb[0].mxu0
  %v2632 = vadd.f32 0.0, %v2631
  %v2633 = vpop.f32.mrb[0].mxu0
  %v2634 = vpop.f32.mrb[0].mxu0
  %v2635 = vadd.f32 0.0, %v2634
  %v2636 = vpop.f32.mrb[0].mxu0
  %2637 = vmatprep.mubr.bf16.mxu0 0
  %2638 = vmatmul.mubr.bf16.gmra.mrb[0].mxu0 %v1434
  %v2639 = vpop.f32.mrb[0].mxu0
  %v2640 = vadd.f32 0.0, %v2639
  %v2641 = vpop.f32.mrb[0].mxu0
  %v2642 = vpop.f32.mrb[0].mxu0
  %v2643 = vadd.f32 0.0, %v2642
  %v2644 = vpop.f32.mrb[0].mxu0
  %2645 = vmatprep.mubr.bf16.mxu0 0
  %2646 = vmatmul.mubr.bf16.gmra.mrb[0].mxu0 %v2526
  %v2647 = vpop.f32.mrb[0].mxu0
  %v2648 = vadd.f32 0.0, %v2647
  %v2649 = vpop.f32.mrb[0].mxu0
  %v2650 = vpop.f32.mrb[0].mxu0
  %v2651 = vadd.f32 0.0, %v2650
  %v2652 = vpop.f32.mrb[0].mxu0
  %2653 = vmatprep.mubr.bf16.mxu0 0
  %2654 = vmatmul.mubr.bf16.gmra.mrb[0].mxu0 %v1436
  %v2655 = vpop.f32.mrb[0].mxu0
  %v2656 = vadd.f32 0.0, %v2655
  %v2657 = vpop.f32.mrb[0].mxu0
  %v2658 = vpop.f32.mrb[0].mxu0
  %v2659 = vadd.f32 0.0, %v2658
  %v2660 = vpop.f32.mrb[0].mxu0
  %2661 = vmatprep.mubr.bf16.mxu0 0
  %2662 = vmatmul.mubr.bf16.gmra.mrb[0].mxu0 %v2527
  %v2663 = vpop.f32.mrb[0].mxu0
  %v2664 = vadd.f32 0.0, %v2663
  %v2665 = vpop.f32.mrb[0].mxu0
  %v2666 = vpop.f32.mrb[0].mxu0
  %v2667 = vadd.f32 0.0, %v2666
  %v2668 = vpop.f32.mrb[0].mxu0
  %2669 = vmatprep.mubr.bf16.mxu0 0
  %2670 = vmatmul.mubr.bf16.gmra.mrb[0].mxu0 %v1438
  %v2671 = vpop.f32.mrb[0].mxu0
  %v2672 = vadd.f32 0.0, %v2671
  %v2673 = vpop.f32.mrb[0].mxu0
  %v2674 = vpop.f32.mrb[0].mxu0
  %v2675 = vadd.f32 0.0, %v2674
  %v2676 = vpop.f32.mrb[0].mxu0
  %2677 = vmatprep.mubr.bf16.mxu0 0
  %2678 = vmatmul.mubr.bf16.gmra.mrb[0].mxu0 %v1439
  %v2679 = vpop.f32.mrb[0].mxu0
  %v2680 = vadd.f32 0.0, %v2679
  %v2681 = vpop.f32.mrb[0].mxu0
  %v2682 = vpop.f32.mrb[0].mxu0
  %v2683 = vadd.f32 0.0, %v2682
  %v2684 = vpop.f32.mrb[0].mxu0
  %2685 = vmatprep.mubr.bf16.mxu0 0
  %2686 = vmatmul.mubr.bf16.gmra.mrb[0].mxu0 %v2528
  %v2687 = vpop.f32.mrb[0].mxu0
  %v2688 = vadd.f32 0.0, %v2687
  %v2689 = vpop.f32.mrb[0].mxu0
  %v2690 = vpop.f32.mrb[0].mxu0
  %v2691 = vadd.f32 0.0, %v2690
  %v2692 = vpop.f32.mrb[0].mxu0
  %2693 = vmatprep.mubr.bf16.mxu0 0
  %2694 = vmatmul.mubr.bf16.gmra.mrb[0].mxu0 %v1441
  %v2695 = vpop.f32.mrb[0].mxu0
  %v2696 = vadd.f32 0.0, %v2695
  %v2697 = vpop.f32.mrb[0].mxu0
  %v2698 = vpop.f32.mrb[0].mxu0
  %v2699 = vadd.f32 0.0, %v2698
  %v2700 = vpop.f32.mrb[0].mxu0
  %2701 = vmatprep.mubr.bf16.mxu0 0
  %2702 = vmatmul.mubr.bf16.gmra.mrb[0].mxu0 %v2529
  %v2703 = vpop.f32.mrb[0].mxu0
  %v2704 = vadd.f32 0.0, %v2703
  %v2705 = vpop.f32.mrb[0].mxu0
  %v2706 = vpop.f32.mrb[0].mxu0
  %v2707 = vadd.f32 0.0, %v2706
  %v2708 = vpop.f32.mrb[0].mxu0
  %2709 = vmatprep.mubr.bf16.mxu0 0
  %2710 = vmatmul.mubr.bf16.gmra.mrb[0].mxu0 %v2067
  %v2711 = vpop.f32.mrb[0].mxu0
  %v2712 = vadd.f32 0.0, %v2711
  %v2713 = vpop.f32.mrb[0].mxu0
  %v2714 = vpop.f32.mrb[0].mxu0
  %v2715 = vadd.f32 0.0, %v2714
  %v2716 = vpop.f32.mrb[0].mxu0
  %2717 = vmatprep.mubr.bf16.mxu0 0
  %2718 = vmatmul.mubr.bf16.gmra.mrb[0].mxu0 %v2530
  %v2719 = vpop.f32.mrb[0].mxu0
  %v2720 = vadd.f32 0.0, %v2719
  %v2721 = vpop.f32.mrb[0].mxu0
  %v2722 = vpop.f32.mrb[0].mxu0
  %v2723 = vadd.f32 0.0, %v2722
  %v2724 = vpop.f32.mrb[0].mxu0
  %2725 = vmatprep.mubr.bf16.mxu0 0
  %2726 = vmatmul.mubr.bf16.gmra.mrb[0].mxu0 %v2531
  %v2727 = vpop.f32.mrb[0].mxu0
  %v2728 = vadd.f32 0.0, %v2727
  %v2729 = vpop.f32.mrb[0].mxu0
  %v2730 = vpop.f32.mrb[0].mxu0
  %v2731 = vpop.f32.mrb[0].mxu0
  %2732 = vdwg.mxu0
  %v2733 = vadd.f32 %v2501, %v2632
  %v2734 = vadd.f32 %v2502, %v2635
  %v2735 = vadd.f32 %v2503, %v2640
  %v2736 = vadd.f32 %v2504, %v2643
  %v2737 = vadd.f32 %v2505, %v2648
  %v2738 = vadd.f32 %v2506, %v2651
  %v2739 = vadd.f32 %v2507, %v2656
  %v2740 = vadd.f32 %v2508, %v2659
  %v2741 = vadd.f32 %v2509, %v2664
  %v2742 = vadd.f32 %v2510, %v2667
  %v2743 = vadd.f32 %v2511, %v2672
  %v2744 = vadd.f32 %v2512, %v2675
  %v2745 = vadd.f32 %v2513, %v2680
  %v2746 = vadd.f32 %v2514, %v2683
  %v2747 = vadd.f32 %v2515, %v2688
  %v2748 = vadd.f32 %v2516, %v2691
  %v2749 = vadd.f32 %v2517, %v2696
  %v2750 = vadd.f32 %v2518, %v2699
  %v2751 = vadd.f32 %v2519, %v2704
  %v2752 = vadd.f32 %v2520, %v2707
  %v2753 = vadd.f32 %v2521, %v2712
  %v2754 = vadd.f32 %v2522, %v2715
  %v2755 = vadd.f32 %v2523, %v2720
  %v2756 = vadd.f32 %v2524, %v2723
  %v2757 = vadd.f32 %v2525, %v2728
  %v2758 = vpack.c.bf16 %v1387, %v1384
  %v2759 = vpack.c.bf16 %v1395, %v1394
  %v2760 = vpack.c.bf16 %v1397, %v1396
  %v2761 = vpack.c.bf16 %v1398, %v1398
  %s2762 = scalar_lea.vmem %s3, 384
  %v2763 = vld [vmem:[%s2762] sm:$0xf]
  %v2764 = vld [vmem:[%s2762 + $0x4] sm:$0xf]
  %v2765 = vld [vmem:[%s2762 + $0x8] sm:$0xf]
  %v2766 = vld [vmem:[%s2762 + $0xc] sm:$0xf]
  %v2767 = vld [vmem:[%s2762 + $0x10] sm:$0xf]
  %v2768 = vld [vmem:[%s2762 + $0x14] sm:$0xf]
  %v2769 = vld [vmem:[%s2762 + $0x18] sm:$0xf]
  %v2770 = vld [vmem:[%s2762 + $0x1c] sm:$0xf]
  %v2771 = vld [vmem:[%s2762 + $0x20] sm:$0xf]
  %v2772 = vld [vmem:[%s2762 + $0x24] sm:$0xf]
  %v2773 = vld [vmem:[%s2762 + $0x28] sm:$0xf]
  %v2774 = vld [vmem:[%s2762 + $0x2c] sm:$0xf]
  %v2775 = vld [vmem:[%s2762 + $0x30] sm:$0xf]
  %v2776 = vld [vmem:[%s2762 + $0x34] sm:$0xf]
  %v2777 = vld [vmem:[%s2762 + $0x38] sm:$0xf]
  %v2778 = vld [vmem:[%s2762 + $0x3c] sm:$0xf]
  %v2795 = vunpack.c.l.b16 %v2763
  %v2796 = vunpack.c.l.b16 %v2764
  %v2797 = vunpack.c.l.b16 %v2765
  %v2798 = vunpack.c.l.b16 %v2766
  %v2799 = vunpack.c.l.b16 %v2767
  %v2800 = vunpack.c.l.b16 %v2768
  %v2801 = vunpack.c.l.b16 %v2769
  %v2802 = vunpack.c.l.b16 %v2770
  %v2803 = vunpack.c.l.b16 %v2771
  %v2804 = vunpack.c.l.b16 %v2772
  %v2805 = vunpack.c.l.b16 %v2773
  %v2806 = vunpack.c.l.b16 %v2774
  %v2807 = vunpack.c.l.b16 %v2775
  %v2808 = vunpack.c.l.b16 %v2776
  %v2809 = vunpack.c.l.b16 %v2777
  %v2810 = vunpack.c.l.b16 %v2778
  %v2811 = vpack.c.b16 %v2796, %v2795
  %v2812 = vpack.c.b16 %v2798, %v2797
  %v2813 = vpack.c.b16 %v2800, %v2799
  %v2814 = vpack.c.b16 %v2802, %v2801
  %v2815 = vpack.c.b16 %v2804, %v2803
  %v2816 = vpack.c.b16 %v2806, %v2805
  %v2817 = vpack.c.b16 %v2808, %v2807
  %v2818 = vpack.c.b16 %v2810, %v2809
  %2827 = vmatprep.subr.bf16.mxu0 0
  %2828 = vmatpush1.bf16.msra.mxu0 %v2811
  %2829 = vmatprep.subr.bf16.mxu0 0
  %2830 = vmatpush1.bf16.msra.mxu0 %v2812
  %2831 = vmatprep.subr.bf16.mxu0 0
  %2832 = vmatpush1.bf16.msra.mxu0 %v2813
  %2833 = vmatprep.subr.bf16.mxu0 0
  %2834 = vmatpush1.bf16.msra.mxu0 %v2814
  %2835 = vmatprep.subr.bf16.mxu0 0
  %2836 = vmatpush1.bf16.msra.mxu0 %v2815
  %2837 = vmatprep.subr.bf16.mxu0 0
  %2838 = vmatpush1.bf16.msra.mxu0 %v2816
  %2839 = vmatprep.subr.bf16.mxu0 0
  %2840 = vmatpush1.bf16.msra.mxu0 %v2817
  %2841 = vmatprep.subr.bf16.mxu0 0
  %2842 = vmatpush1.bf16.msra.mxu0 %v2818
  %2843 = vmatprep.subr.bf16.mxu0 0
  %2844 = vmatpush1.bf16.msra.mxu0 0
  %2845 = vmatprep.subr.bf16.mxu0 0
  %2846 = vmatpush1.bf16.msra.mxu0 0
  %2847 = vmatprep.subr.bf16.mxu0 0
  %2848 = vmatpush1.bf16.msra.mxu0 0
  %2849 = vmatprep.subr.bf16.mxu0 0
  %2850 = vmatpush1.bf16.msra.mxu0 0
  %2851 = vmatprep.subr.bf16.mxu0 0
  %2852 = vmatpush1.bf16.msra.mxu0 0
  %2853 = vmatprep.subr.bf16.mxu0 0
  %2854 = vmatpush1.bf16.msra.mxu0 0
  %2855 = vmatprep.subr.bf16.mxu0 0
  %2856 = vmatpush1.bf16.msra.mxu0 0
  %2857 = vmatprep.subr.bf16.mxu0 0
  %2858 = vmatpush1.bf16.msra.mxu0 0
  %2859 = vmatprep.mubr.bf16.mxu0 0
  %2860 = vmatmul.mubr.bf16.gmra.mrb[0].mxu0 %v1406
  %v2861 = vpop.f32.mrb[0].mxu0
  %v2862 = vadd.f32 0.0, %v2861
  %v2863 = vpop.f32.mrb[0].mxu0
  %v2864 = vpop.f32.mrb[0].mxu0
  %v2865 = vadd.f32 0.0, %v2864
  %v2866 = vpop.f32.mrb[0].mxu0
  %2867 = vmatprep.mubr.bf16.mxu0 0
  %2868 = vmatmul.mubr.bf16.gmra.mrb[0].mxu0 %v1407
  %v2869 = vpop.f32.mrb[0].mxu0
  %v2870 = vadd.f32 0.0, %v2869
  %v2871 = vpop.f32.mrb[0].mxu0
  %v2872 = vpop.f32.mrb[0].mxu0
  %v2873 = vadd.f32 0.0, %v2872
  %v2874 = vpop.f32.mrb[0].mxu0
  %2875 = vmatprep.mubr.bf16.mxu0 0
  %2876 = vmatmul.mubr.bf16.gmra.mrb[0].mxu0 %v1408
  %v2877 = vpop.f32.mrb[0].mxu0
  %v2878 = vadd.f32 0.0, %v2877
  %v2879 = vpop.f32.mrb[0].mxu0
  %v2880 = vpop.f32.mrb[0].mxu0
  %v2881 = vadd.f32 0.0, %v2880
  %v2882 = vpop.f32.mrb[0].mxu0
  %2883 = vmatprep.mubr.bf16.mxu0 0
  %2884 = vmatmul.mubr.bf16.gmra.mrb[0].mxu0 %v1409
  %v2885 = vpop.f32.mrb[0].mxu0
  %v2886 = vadd.f32 0.0, %v2885
  %v2887 = vpop.f32.mrb[0].mxu0
  %v2888 = vpop.f32.mrb[0].mxu0
  %v2889 = vadd.f32 0.0, %v2888
  %v2890 = vpop.f32.mrb[0].mxu0
  %2891 = vmatprep.mubr.bf16.mxu0 0
  %2892 = vmatmul.mubr.bf16.gmra.mrb[0].mxu0 %v1410
  %v2893 = vpop.f32.mrb[0].mxu0
  %v2894 = vadd.f32 0.0, %v2893
  %v2895 = vpop.f32.mrb[0].mxu0
  %v2896 = vpop.f32.mrb[0].mxu0
  %v2897 = vadd.f32 0.0, %v2896
  %v2898 = vpop.f32.mrb[0].mxu0
  %2899 = vmatprep.mubr.bf16.mxu0 0
  %2900 = vmatmul.mubr.bf16.gmra.mrb[0].mxu0 %v1411
  %v2901 = vpop.f32.mrb[0].mxu0
  %v2902 = vadd.f32 0.0, %v2901
  %v2903 = vpop.f32.mrb[0].mxu0
  %v2904 = vpop.f32.mrb[0].mxu0
  %v2905 = vadd.f32 0.0, %v2904
  %v2906 = vpop.f32.mrb[0].mxu0
  %2907 = vmatprep.mubr.bf16.mxu0 0
  %2908 = vmatmul.mubr.bf16.gmra.mrb[0].mxu0 %v1412
  %v2909 = vpop.f32.mrb[0].mxu0
  %v2910 = vadd.f32 0.0, %v2909
  %v2911 = vpop.f32.mrb[0].mxu0
  %v2912 = vpop.f32.mrb[0].mxu0
  %v2913 = vadd.f32 0.0, %v2912
  %v2914 = vpop.f32.mrb[0].mxu0
  %2915 = vmatprep.mubr.bf16.mxu0 0
  %2916 = vmatmul.mubr.bf16.gmra.mrb[0].mxu0 %v2758
  %v2917 = vpop.f32.mrb[0].mxu0
  %v2918 = vadd.f32 0.0, %v2917
  %v2919 = vpop.f32.mrb[0].mxu0
  %v2920 = vpop.f32.mrb[0].mxu0
  %v2921 = vadd.f32 0.0, %v2920
  %v2922 = vpop.f32.mrb[0].mxu0
  %2923 = vmatprep.mubr.bf16.mxu0 0
  %2924 = vmatmul.mubr.bf16.gmra.mrb[0].mxu0 %v2297
  %v2925 = vpop.f32.mrb[0].mxu0
  %v2926 = vadd.f32 0.0, %v2925
  %v2927 = vpop.f32.mrb[0].mxu0
  %v2928 = vpop.f32.mrb[0].mxu0
  %v2929 = vadd.f32 0.0, %v2928
  %v2930 = vpop.f32.mrb[0].mxu0
  %2931 = vmatprep.mubr.bf16.mxu0 0
  %2932 = vmatmul.mubr.bf16.gmra.mrb[0].mxu0 %v2298
  %v2933 = vpop.f32.mrb[0].mxu0
  %v2934 = vadd.f32 0.0, %v2933
  %v2935 = vpop.f32.mrb[0].mxu0
  %v2936 = vpop.f32.mrb[0].mxu0
  %v2937 = vadd.f32 0.0, %v2936
  %v2938 = vpop.f32.mrb[0].mxu0
  %2939 = vmatprep.mubr.bf16.mxu0 0
  %2940 = vmatmul.mubr.bf16.gmra.mrb[0].mxu0 %v2759
  %v2941 = vpop.f32.mrb[0].mxu0
  %v2942 = vadd.f32 0.0, %v2941
  %v2943 = vpop.f32.mrb[0].mxu0
  %v2944 = vpop.f32.mrb[0].mxu0
  %v2945 = vadd.f32 0.0, %v2944
  %v2946 = vpop.f32.mrb[0].mxu0
  %2947 = vmatprep.mubr.bf16.mxu0 0
  %2948 = vmatmul.mubr.bf16.gmra.mrb[0].mxu0 %v2760
  %v2949 = vpop.f32.mrb[0].mxu0
  %v2950 = vadd.f32 0.0, %v2949
  %v2951 = vpop.f32.mrb[0].mxu0
  %v2952 = vpop.f32.mrb[0].mxu0
  %v2953 = vadd.f32 0.0, %v2952
  %v2954 = vpop.f32.mrb[0].mxu0
  %2955 = vmatprep.mubr.bf16.mxu0 0
  %2956 = vmatmul.mubr.bf16.gmra.mrb[0].mxu0 %v2761
  %v2957 = vpop.f32.mrb[0].mxu0
  %v2958 = vadd.f32 0.0, %v2957
  %v2959 = vpop.f32.mrb[0].mxu0
  %v2960 = vpop.f32.mrb[0].mxu0
  %v2961 = vpop.f32.mrb[0].mxu0
  %2962 = vdwg.mxu0
  %v2963 = vadd.f32 %v2733, %v2862
  %v2964 = vadd.f32 %v2734, %v2865
  %v2965 = vadd.f32 %v2735, %v2870
  %v2966 = vadd.f32 %v2736, %v2873
  %v2967 = vadd.f32 %v2737, %v2878
  %v2968 = vadd.f32 %v2738, %v2881
  %v2969 = vadd.f32 %v2739, %v2886
  %v2970 = vadd.f32 %v2740, %v2889
  %v2971 = vadd.f32 %v2741, %v2894
  %v2972 = vadd.f32 %v2742, %v2897
  %v2973 = vadd.f32 %v2743, %v2902
  %v2974 = vadd.f32 %v2744, %v2905
  %v2975 = vadd.f32 %v2745, %v2910
  %v2976 = vadd.f32 %v2746, %v2913
  %v2977 = vadd.f32 %v2747, %v2918
  %v2978 = vadd.f32 %v2748, %v2921
  %v2979 = vadd.f32 %v2749, %v2926
  %v2980 = vadd.f32 %v2750, %v2929
  %v2981 = vadd.f32 %v2751, %v2934
  %v2982 = vadd.f32 %v2752, %v2937
  %v2983 = vadd.f32 %v2753, %v2942
  %v2984 = vadd.f32 %v2754, %v2945
  %v2985 = vadd.f32 %v2755, %v2950
  %v2986 = vadd.f32 %v2756, %v2953
  %v2987 = vadd.f32 %v2757, %v2958
  %v2988 = vpack.c.bf16 %v1388, %v1385
  %v2989 = vpack.c.bf16 %v1396, %v1395
  %v2990 = vpack.c.bf16 %v1398, %v1397
  %v2991 = vpack.c.bf16 %v1399, %v1399
  %s2992 = scalar_lea.vmem %s3, 448
  %v2993 = vld [vmem:[%s2992] sm:$0xf]
  %v2994 = vld [vmem:[%s2992 + $0x4] sm:$0xf]
  %v2995 = vld [vmem:[%s2992 + $0x8] sm:$0xf]
  %v2996 = vld [vmem:[%s2992 + $0xc] sm:$0xf]
  %v2997 = vld [vmem:[%s2992 + $0x10] sm:$0xf]
  %v2998 = vld [vmem:[%s2992 + $0x14] sm:$0xf]
  %v2999 = vld [vmem:[%s2992 + $0x18] sm:$0xf]
  %v3000 = vld [vmem:[%s2992 + $0x1c] sm:$0xf]
  %v3001 = vld [vmem:[%s2992 + $0x20] sm:$0xf]
  %v3002 = vld [vmem:[%s2992 + $0x24] sm:$0xf]
  %v3003 = vld [vmem:[%s2992 + $0x28] sm:$0xf]
  %v3004 = vld [vmem:[%s2992 + $0x2c] sm:$0xf]
  %v3005 = vld [vmem:[%s2992 + $0x30] sm:$0xf]
  %v3006 = vld [vmem:[%s2992 + $0x34] sm:$0xf]
  %v3007 = vld [vmem:[%s2992 + $0x38] sm:$0xf]
  %v3008 = vld [vmem:[%s2992 + $0x3c] sm:$0xf]
  %v3025 = vunpack.c.l.b16 %v2993
  %v3026 = vunpack.c.l.b16 %v2994
  %v3027 = vunpack.c.l.b16 %v2995
  %v3028 = vunpack.c.l.b16 %v2996
  %v3029 = vunpack.c.l.b16 %v2997
  %v3030 = vunpack.c.l.b16 %v2998
  %v3031 = vunpack.c.l.b16 %v2999
  %v3032 = vunpack.c.l.b16 %v3000
  %v3033 = vunpack.c.l.b16 %v3001
  %v3034 = vunpack.c.l.b16 %v3002
  %v3035 = vunpack.c.l.b16 %v3003
  %v3036 = vunpack.c.l.b16 %v3004
  %v3037 = vunpack.c.l.b16 %v3005
  %v3038 = vunpack.c.l.b16 %v3006
  %v3039 = vunpack.c.l.b16 %v3007
  %v3040 = vunpack.c.l.b16 %v3008
  %v3041 = vpack.c.b16 %v3026, %v3025
  %v3042 = vpack.c.b16 %v3028, %v3027
  %v3043 = vpack.c.b16 %v3030, %v3029
  %v3044 = vpack.c.b16 %v3032, %v3031
  %v3045 = vpack.c.b16 %v3034, %v3033
  %v3046 = vpack.c.b16 %v3036, %v3035
  %v3047 = vpack.c.b16 %v3038, %v3037
  %v3048 = vpack.c.b16 %v3040, %v3039
  %3057 = vmatprep.subr.bf16.mxu0 0
  %3058 = vmatpush1.bf16.msra.mxu0 %v3041
  %3059 = vmatprep.subr.bf16.mxu0 0
  %3060 = vmatpush1.bf16.msra.mxu0 %v3042
  %3061 = vmatprep.subr.bf16.mxu0 0
  %3062 = vmatpush1.bf16.msra.mxu0 %v3043
  %3063 = vmatprep.subr.bf16.mxu0 0
  %3064 = vmatpush1.bf16.msra.mxu0 %v3044
  %3065 = vmatprep.subr.bf16.mxu0 0
  %3066 = vmatpush1.bf16.msra.mxu0 %v3045
  %3067 = vmatprep.subr.bf16.mxu0 0
  %3068 = vmatpush1.bf16.msra.mxu0 %v3046
  %3069 = vmatprep.subr.bf16.mxu0 0
  %3070 = vmatpush1.bf16.msra.mxu0 %v3047
  %3071 = vmatprep.subr.bf16.mxu0 0
  %3072 = vmatpush1.bf16.msra.mxu0 %v3048
  %3073 = vmatprep.subr.bf16.mxu0 0
  %3074 = vmatpush1.bf16.msra.mxu0 0
  %3075 = vmatprep.subr.bf16.mxu0 0
  %3076 = vmatpush1.bf16.msra.mxu0 0
  %3077 = vmatprep.subr.bf16.mxu0 0
  %3078 = vmatpush1.bf16.msra.mxu0 0
  %3079 = vmatprep.subr.bf16.mxu0 0
  %3080 = vmatpush1.bf16.msra.mxu0 0
  %3081 = vmatprep.subr.bf16.mxu0 0
  %3082 = vmatpush1.bf16.msra.mxu0 0
  %3083 = vmatprep.subr.bf16.mxu0 0
  %3084 = vmatpush1.bf16.msra.mxu0 0
  %3085 = vmatprep.subr.bf16.mxu0 0
  %3086 = vmatpush1.bf16.msra.mxu0 0
  %3087 = vmatprep.subr.bf16.mxu0 0
  %3088 = vmatpush1.bf16.msra.mxu0 0
  %3089 = vmatprep.mubr.bf16.mxu0 0
  %3090 = vmatmul.mubr.bf16.gmra.mrb[0].mxu0 %v1435
  %v3091 = vpop.f32.mrb[0].mxu0
  %v3092 = vadd.f32 0.0, %v3091
  %v3093 = vpop.f32.mrb[0].mxu0
  %v3094 = vpop.f32.mrb[0].mxu0
  %v3095 = vadd.f32 0.0, %v3094
  %v3096 = vpop.f32.mrb[0].mxu0
  %3097 = vmatprep.mubr.bf16.mxu0 0
  %3098 = vmatmul.mubr.bf16.gmra.mrb[0].mxu0 %v1436
  %v3099 = vpop.f32.mrb[0].mxu0
  %v3100 = vadd.f32 0.0, %v3099
  %v3101 = vpop.f32.mrb[0].mxu0
  %v3102 = vpop.f32.mrb[0].mxu0
  %v3103 = vadd.f32 0.0, %v3102
  %v3104 = vpop.f32.mrb[0].mxu0
  %3105 = vmatprep.mubr.bf16.mxu0 0
  %3106 = vmatmul.mubr.bf16.gmra.mrb[0].mxu0 %v1437
  %v3107 = vpop.f32.mrb[0].mxu0
  %v3108 = vadd.f32 0.0, %v3107
  %v3109 = vpop.f32.mrb[0].mxu0
  %v3110 = vpop.f32.mrb[0].mxu0
  %v3111 = vadd.f32 0.0, %v3110
  %v3112 = vpop.f32.mrb[0].mxu0
  %3113 = vmatprep.mubr.bf16.mxu0 0
  %3114 = vmatmul.mubr.bf16.gmra.mrb[0].mxu0 %v1438
  %v3115 = vpop.f32.mrb[0].mxu0
  %v3116 = vadd.f32 0.0, %v3115
  %v3117 = vpop.f32.mrb[0].mxu0
  %v3118 = vpop.f32.mrb[0].mxu0
  %v3119 = vadd.f32 0.0, %v3118
  %v3120 = vpop.f32.mrb[0].mxu0
  %3121 = vmatprep.mubr.bf16.mxu0 0
  %3122 = vmatmul.mubr.bf16.gmra.mrb[0].mxu0 %v1439
  %v3123 = vpop.f32.mrb[0].mxu0
  %v3124 = vadd.f32 0.0, %v3123
  %v3125 = vpop.f32.mrb[0].mxu0
  %v3126 = vpop.f32.mrb[0].mxu0
  %v3127 = vadd.f32 0.0, %v3126
  %v3128 = vpop.f32.mrb[0].mxu0
  %3129 = vmatprep.mubr.bf16.mxu0 0
  %3130 = vmatmul.mubr.bf16.gmra.mrb[0].mxu0 %v1440
  %v3131 = vpop.f32.mrb[0].mxu0
  %v3132 = vadd.f32 0.0, %v3131
  %v3133 = vpop.f32.mrb[0].mxu0
  %v3134 = vpop.f32.mrb[0].mxu0
  %v3135 = vadd.f32 0.0, %v3134
  %v3136 = vpop.f32.mrb[0].mxu0
  %3137 = vmatprep.mubr.bf16.mxu0 0
  %3138 = vmatmul.mubr.bf16.gmra.mrb[0].mxu0 %v1441
  %v3139 = vpop.f32.mrb[0].mxu0
  %v3140 = vadd.f32 0.0, %v3139
  %v3141 = vpop.f32.mrb[0].mxu0
  %v3142 = vpop.f32.mrb[0].mxu0
  %v3143 = vadd.f32 0.0, %v3142
  %v3144 = vpop.f32.mrb[0].mxu0
  %3145 = vmatprep.mubr.bf16.mxu0 0
  %3146 = vmatmul.mubr.bf16.gmra.mrb[0].mxu0 %v2988
  %v3147 = vpop.f32.mrb[0].mxu0
  %v3148 = vadd.f32 0.0, %v3147
  %v3149 = vpop.f32.mrb[0].mxu0
  %v3150 = vpop.f32.mrb[0].mxu0
  %v3151 = vadd.f32 0.0, %v3150
  %v3152 = vpop.f32.mrb[0].mxu0
  %3153 = vmatprep.mubr.bf16.mxu0 0
  %3154 = vmatmul.mubr.bf16.gmra.mrb[0].mxu0 %v2067
  %v3155 = vpop.f32.mrb[0].mxu0
  %v3156 = vadd.f32 0.0, %v3155
  %v3157 = vpop.f32.mrb[0].mxu0
  %v3158 = vpop.f32.mrb[0].mxu0
  %v3159 = vadd.f32 0.0, %v3158
  %v3160 = vpop.f32.mrb[0].mxu0
  %3161 = vmatprep.mubr.bf16.mxu0 0
  %3162 = vmatmul.mubr.bf16.gmra.mrb[0].mxu0 %v2530
  %v3163 = vpop.f32.mrb[0].mxu0
  %v3164 = vadd.f32 0.0, %v3163
  %v3165 = vpop.f32.mrb[0].mxu0
  %v3166 = vpop.f32.mrb[0].mxu0
  %v3167 = vadd.f32 0.0, %v3166
  %v3168 = vpop.f32.mrb[0].mxu0
  %3169 = vmatprep.mubr.bf16.mxu0 0
  %3170 = vmatmul.mubr.bf16.gmra.mrb[0].mxu0 %v2989
  %v3171 = vpop.f32.mrb[0].mxu0
  %v3172 = vadd.f32 0.0, %v3171
  %v3173 = vpop.f32.mrb[0].mxu0
  %v3174 = vpop.f32.mrb[0].mxu0
  %v3175 = vadd.f32 0.0, %v3174
  %v3176 = vpop.f32.mrb[0].mxu0
  %3177 = vmatprep.mubr.bf16.mxu0 0
  %3178 = vmatmul.mubr.bf16.gmra.mrb[0].mxu0 %v2990
  %v3179 = vpop.f32.mrb[0].mxu0
  %v3180 = vadd.f32 0.0, %v3179
  %v3181 = vpop.f32.mrb[0].mxu0
  %v3182 = vpop.f32.mrb[0].mxu0
  %v3183 = vadd.f32 0.0, %v3182
  %v3184 = vpop.f32.mrb[0].mxu0
  %3185 = vmatprep.mubr.bf16.mxu0 0
  %3186 = vmatmul.mubr.bf16.gmra.mrb[0].mxu0 %v2991
  %v3187 = vpop.f32.mrb[0].mxu0
  %v3188 = vadd.f32 0.0, %v3187
  %v3189 = vpop.f32.mrb[0].mxu0
  %v3190 = vpop.f32.mrb[0].mxu0
  %v3191 = vpop.f32.mrb[0].mxu0
  %3192 = vdwg.mxu0
  %v3193 = vadd.f32 %v2963, %v3092
  %v3194 = vadd.f32 %v2964, %v3095
  %v3195 = vadd.f32 %v2965, %v3100
  %v3196 = vadd.f32 %v2966, %v3103
  %v3197 = vadd.f32 %v2967, %v3108
  %v3198 = vadd.f32 %v2968, %v3111
  %v3199 = vadd.f32 %v2969, %v3116
  %v3200 = vadd.f32 %v2970, %v3119
  %v3201 = vadd.f32 %v2971, %v3124
  %v3202 = vadd.f32 %v2972, %v3127
  %v3203 = vadd.f32 %v2973, %v3132
  %v3204 = vadd.f32 %v2974, %v3135
  %v3205 = vadd.f32 %v2975, %v3140
  %v3206 = vadd.f32 %v2976, %v3143
  %v3207 = vadd.f32 %v2977, %v3148
  %v3208 = vadd.f32 %v2978, %v3151
  %v3209 = vadd.f32 %v2979, %v3156
  %v3210 = vadd.f32 %v2980, %v3159
  %v3211 = vadd.f32 %v2981, %v3164
  %v3212 = vadd.f32 %v2982, %v3167
  %v3213 = vadd.f32 %v2983, %v3172
  %v3214 = vadd.f32 %v2984, %v3175
  %v3215 = vadd.f32 %v2985, %v3180
  %v3216 = vadd.f32 %v2986, %v3183
  %v3217 = vadd.f32 %v2987, %v3188
  %v3218 = vpack.c.bf16 %v1389, %v1386
  %v3219 = vpack.c.bf16 %v1393, %v1392
  %v3220 = vpack.c.bf16 %v1399, %v1398
  %v3221 = vpack.c.bf16 %v1400, %v1400
  %s3222 = scalar_lea.vmem %s3, 512
  %v3223 = vld [vmem:[%s3222] sm:$0xf]
  %v3224 = vld [vmem:[%s3222 + $0x4] sm:$0xf]
  %v3225 = vld [vmem:[%s3222 + $0x8] sm:$0xf]
  %v3226 = vld [vmem:[%s3222 + $0xc] sm:$0xf]
  %v3227 = vld [vmem:[%s3222 + $0x10] sm:$0xf]
  %v3228 = vld [vmem:[%s3222 + $0x14] sm:$0xf]
  %v3229 = vld [vmem:[%s3222 + $0x18] sm:$0xf]
  %v3230 = vld [vmem:[%s3222 + $0x1c] sm:$0xf]
  %v3231 = vld [vmem:[%s3222 + $0x20] sm:$0xf]
  %v3232 = vld [vmem:[%s3222 + $0x24] sm:$0xf]
  %v3233 = vld [vmem:[%s3222 + $0x28] sm:$0xf]
  %v3234 = vld [vmem:[%s3222 + $0x2c] sm:$0xf]
  %v3235 = vld [vmem:[%s3222 + $0x30] sm:$0xf]
  %v3236 = vld [vmem:[%s3222 + $0x34] sm:$0xf]
  %v3237 = vld [vmem:[%s3222 + $0x38] sm:$0xf]
  %v3238 = vld [vmem:[%s3222 + $0x3c] sm:$0xf]
  %v3255 = vunpack.c.l.b16 %v3223
  %v3256 = vunpack.c.l.b16 %v3224
  %v3257 = vunpack.c.l.b16 %v3225
  %v3258 = vunpack.c.l.b16 %v3226
  %v3259 = vunpack.c.l.b16 %v3227
  %v3260 = vunpack.c.l.b16 %v3228
  %v3261 = vunpack.c.l.b16 %v3229
  %v3262 = vunpack.c.l.b16 %v3230
  %v3263 = vunpack.c.l.b16 %v3231
  %v3264 = vunpack.c.l.b16 %v3232
  %v3265 = vunpack.c.l.b16 %v3233
  %v3266 = vunpack.c.l.b16 %v3234
  %v3267 = vunpack.c.l.b16 %v3235
  %v3268 = vunpack.c.l.b16 %v3236
  %v3269 = vunpack.c.l.b16 %v3237
  %v3270 = vunpack.c.l.b16 %v3238
  %v3271 = vpack.c.b16 %v3256, %v3255
  %v3272 = vpack.c.b16 %v3258, %v3257
  %v3273 = vpack.c.b16 %v3260, %v3259
  %v3274 = vpack.c.b16 %v3262, %v3261
  %v3275 = vpack.c.b16 %v3264, %v3263
  %v3276 = vpack.c.b16 %v3266, %v3265
  %v3277 = vpack.c.b16 %v3268, %v3267
  %v3278 = vpack.c.b16 %v3270, %v3269
  %3287 = vmatprep.subr.bf16.mxu0 0
  %3288 = vmatpush1.bf16.msra.mxu0 %v3271
  %3289 = vmatprep.subr.bf16.mxu0 0
  %3290 = vmatpush1.bf16.msra.mxu0 %v3272
  %3291 = vmatprep.subr.bf16.mxu0 0
  %3292 = vmatpush1.bf16.msra.mxu0 %v3273
  %3293 = vmatprep.subr.bf16.mxu0 0
  %3294 = vmatpush1.bf16.msra.mxu0 %v3274
  %3295 = vmatprep.subr.bf16.mxu0 0
  %3296 = vmatpush1.bf16.msra.mxu0 %v3275
  %3297 = vmatprep.subr.bf16.mxu0 0
  %3298 = vmatpush1.bf16.msra.mxu0 %v3276
  %3299 = vmatprep.subr.bf16.mxu0 0
  %3300 = vmatpush1.bf16.msra.mxu0 %v3277
  %3301 = vmatprep.subr.bf16.mxu0 0
  %3302 = vmatpush1.bf16.msra.mxu0 %v3278
  %3303 = vmatprep.subr.bf16.mxu0 0
  %3304 = vmatpush1.bf16.msra.mxu0 0
  %3305 = vmatprep.subr.bf16.mxu0 0
  %3306 = vmatpush1.bf16.msra.mxu0 0
  %3307 = vmatprep.subr.bf16.mxu0 0
  %3308 = vmatpush1.bf16.msra.mxu0 0
  %3309 = vmatprep.subr.bf16.mxu0 0
  %3310 = vmatpush1.bf16.msra.mxu0 0
  %3311 = vmatprep.subr.bf16.mxu0 0
  %3312 = vmatpush1.bf16.msra.mxu0 0
  %3313 = vmatprep.subr.bf16.mxu0 0
  %3314 = vmatpush1.bf16.msra.mxu0 0
  %3315 = vmatprep.subr.bf16.mxu0 0
  %3316 = vmatpush1.bf16.msra.mxu0 0
  %3317 = vmatprep.subr.bf16.mxu0 0
  %3318 = vmatpush1.bf16.msra.mxu0 0
  %3319 = vmatprep.mubr.bf16.mxu0 0
  %3320 = vmatmul.mubr.bf16.gmra.mrb[0].mxu0 %v1407
  %v3321 = vpop.f32.mrb[0].mxu0
  %v3322 = vadd.f32 0.0, %v3321
  %v3323 = vpop.f32.mrb[0].mxu0
  %v3324 = vpop.f32.mrb[0].mxu0
  %v3325 = vadd.f32 0.0, %v3324
  %v3326 = vpop.f32.mrb[0].mxu0
  %3327 = vmatprep.mubr.bf16.mxu0 0
  %3328 = vmatmul.mubr.bf16.gmra.mrb[0].mxu0 %v1831
  %v3329 = vpop.f32.mrb[0].mxu0
  %v3330 = vadd.f32 0.0, %v3329
  %v3331 = vpop.f32.mrb[0].mxu0
  %v3332 = vpop.f32.mrb[0].mxu0
  %v3333 = vadd.f32 0.0, %v3332
  %v3334 = vpop.f32.mrb[0].mxu0
  %3335 = vmatprep.mubr.bf16.mxu0 0
  %3336 = vmatmul.mubr.bf16.gmra.mrb[0].mxu0 %v1832
  %v3337 = vpop.f32.mrb[0].mxu0
  %v3338 = vadd.f32 0.0, %v3337
  %v3339 = vpop.f32.mrb[0].mxu0
  %v3340 = vpop.f32.mrb[0].mxu0
  %v3341 = vadd.f32 0.0, %v3340
  %v3342 = vpop.f32.mrb[0].mxu0
  %3343 = vmatprep.mubr.bf16.mxu0 0
  %3344 = vmatmul.mubr.bf16.gmra.mrb[0].mxu0 %v1410
  %v3345 = vpop.f32.mrb[0].mxu0
  %v3346 = vadd.f32 0.0, %v3345
  %v3347 = vpop.f32.mrb[0].mxu0
  %v3348 = vpop.f32.mrb[0].mxu0
  %v3349 = vadd.f32 0.0, %v3348
  %v3350 = vpop.f32.mrb[0].mxu0
  %3351 = vmatprep.mubr.bf16.mxu0 0
  %3352 = vmatmul.mubr.bf16.gmra.mrb[0].mxu0 %v1833
  %v3353 = vpop.f32.mrb[0].mxu0
  %v3354 = vadd.f32 0.0, %v3353
  %v3355 = vpop.f32.mrb[0].mxu0
  %v3356 = vpop.f32.mrb[0].mxu0
  %v3357 = vadd.f32 0.0, %v3356
  %v3358 = vpop.f32.mrb[0].mxu0
  %3359 = vmatprep.mubr.bf16.mxu0 0
  %3360 = vmatmul.mubr.bf16.gmra.mrb[0].mxu0 %v1412
  %v3361 = vpop.f32.mrb[0].mxu0
  %v3362 = vadd.f32 0.0, %v3361
  %v3363 = vpop.f32.mrb[0].mxu0
  %v3364 = vpop.f32.mrb[0].mxu0
  %v3365 = vadd.f32 0.0, %v3364
  %v3366 = vpop.f32.mrb[0].mxu0
  %3367 = vmatprep.mubr.bf16.mxu0 0
  %3368 = vmatmul.mubr.bf16.gmra.mrb[0].mxu0 %v1834
  %v3369 = vpop.f32.mrb[0].mxu0
  %v3370 = vadd.f32 0.0, %v3369
  %v3371 = vpop.f32.mrb[0].mxu0
  %v3372 = vpop.f32.mrb[0].mxu0
  %v3373 = vadd.f32 0.0, %v3372
  %v3374 = vpop.f32.mrb[0].mxu0
  %3375 = vmatprep.mubr.bf16.mxu0 0
  %3376 = vmatmul.mubr.bf16.gmra.mrb[0].mxu0 %v3218
  %v3377 = vpop.f32.mrb[0].mxu0
  %v3378 = vadd.f32 0.0, %v3377
  %v3379 = vpop.f32.mrb[0].mxu0
  %v3380 = vpop.f32.mrb[0].mxu0
  %v3381 = vadd.f32 0.0, %v3380
  %v3382 = vpop.f32.mrb[0].mxu0
  %3383 = vmatprep.mubr.bf16.mxu0 0
  %3384 = vmatmul.mubr.bf16.gmra.mrb[0].mxu0 %v2298
  %v3385 = vpop.f32.mrb[0].mxu0
  %v3386 = vadd.f32 0.0, %v3385
  %v3387 = vpop.f32.mrb[0].mxu0
  %v3388 = vpop.f32.mrb[0].mxu0
  %v3389 = vadd.f32 0.0, %v3388
  %v3390 = vpop.f32.mrb[0].mxu0
  %3391 = vmatprep.mubr.bf16.mxu0 0
  %3392 = vmatmul.mubr.bf16.gmra.mrb[0].mxu0 %v3219
  %v3393 = vpop.f32.mrb[0].mxu0
  %v3394 = vadd.f32 0.0, %v3393
  %v3395 = vpop.f32.mrb[0].mxu0
  %v3396 = vpop.f32.mrb[0].mxu0
  %v3397 = vadd.f32 0.0, %v3396
  %v3398 = vpop.f32.mrb[0].mxu0
  %3399 = vmatprep.mubr.bf16.mxu0 0
  %3400 = vmatmul.mubr.bf16.gmra.mrb[0].mxu0 %v2760
  %v3401 = vpop.f32.mrb[0].mxu0
  %v3402 = vadd.f32 0.0, %v3401
  %v3403 = vpop.f32.mrb[0].mxu0
  %v3404 = vpop.f32.mrb[0].mxu0
  %v3405 = vadd.f32 0.0, %v3404
  %v3406 = vpop.f32.mrb[0].mxu0
  %3407 = vmatprep.mubr.bf16.mxu0 0
  %3408 = vmatmul.mubr.bf16.gmra.mrb[0].mxu0 %v3220
  %v3409 = vpop.f32.mrb[0].mxu0
  %v3410 = vadd.f32 0.0, %v3409
  %v3411 = vpop.f32.mrb[0].mxu0
  %v3412 = vpop.f32.mrb[0].mxu0
  %v3413 = vadd.f32 0.0, %v3412
  %v3414 = vpop.f32.mrb[0].mxu0
  %3415 = vmatprep.mubr.bf16.mxu0 0
  %3416 = vmatmul.mubr.bf16.gmra.mrb[0].mxu0 %v3221
  %v3417 = vpop.f32.mrb[0].mxu0
  %v3418 = vadd.f32 0.0, %v3417
  %v3419 = vpop.f32.mrb[0].mxu0
  %v3420 = vpop.f32.mrb[0].mxu0
  %v3421 = vpop.f32.mrb[0].mxu0
  %3422 = vdwg.mxu0
  %v3423 = vadd.f32 %v3193, %v3322
  %v3424 = vadd.f32 %v3194, %v3325
  %v3425 = vadd.f32 %v3195, %v3330
  %v3426 = vadd.f32 %v3196, %v3333
  %v3427 = vadd.f32 %v3197, %v3338
  %v3428 = vadd.f32 %v3198, %v3341
  %v3429 = vadd.f32 %v3199, %v3346
  %v3430 = vadd.f32 %v3200, %v3349
  %v3431 = vadd.f32 %v3201, %v3354
  %v3432 = vadd.f32 %v3202, %v3357
  %v3433 = vadd.f32 %v3203, %v3362
  %v3434 = vadd.f32 %v3204, %v3365
  %v3435 = vadd.f32 %v3205, %v3370
  %v3436 = vadd.f32 %v3206, %v3373
  %v3437 = vadd.f32 %v3207, %v3378
  %v3438 = vadd.f32 %v3208, %v3381
  %v3439 = vadd.f32 %v3209, %v3386
  %v3440 = vadd.f32 %v3210, %v3389
  %v3441 = vadd.f32 %v3211, %v3394
  %v3442 = vadd.f32 %v3212, %v3397
  %v3443 = vadd.f32 %v3213, %v3402
  %v3444 = vadd.f32 %v3214, %v3405
  %v3445 = vadd.f32 %v3215, %v3410
  %v3446 = vadd.f32 %v3216, %v3413
  %v3447 = vadd.f32 %v3217, %v3418
  %v3448 = vld [vmem:[%s4] sm:$0x1]
  %v3450 = vlaneseq
  %v3451 = vshrl.u32 %v3450, 7
  %v3452 = vsub.s32 0, %v3451
  %v3453 = vrot.slane %v3448, %v3452
  %v3455 = vadd.f32 %v3423, %v3453
  %v3456 = vadd.f32 %v3424, %v3453
  %v3457 = vadd.f32 %v3425, %v3453
  %v3458 = vadd.f32 %v3426, %v3453
  %v3459 = vadd.f32 %v3427, %v3453
  %v3460 = vadd.f32 %v3428, %v3453
  %v3461 = vadd.f32 %v3429, %v3453
  %v3462 = vadd.f32 %v3430, %v3453
  %v3463 = vadd.f32 %v3431, %v3453
  %v3464 = vadd.f32 %v3432, %v3453
  %v3465 = vadd.f32 %v3433, %v3453
  %v3466 = vadd.f32 %v3434, %v3453
  %v3467 = vadd.f32 %v3435, %v3453
  %v3468 = vadd.f32 %v3436, %v3453
  %v3469 = vadd.f32 %v3437, %v3453
  %v3470 = vadd.f32 %v3438, %v3453
  %v3471 = vadd.f32 %v3439, %v3453
  %v3472 = vadd.f32 %v3440, %v3453
  %v3473 = vadd.f32 %v3441, %v3453
  %v3474 = vadd.f32 %v3442, %v3453
  %v3475 = vadd.f32 %v3443, %v3453
  %v3476 = vadd.f32 %v3444, %v3453
  %v3477 = vadd.f32 %v3445, %v3453
  %v3478 = vadd.f32 %v3446, %v3453
  %v3479 = vadd.f32 %v3447, %v3453
  %v3480 = vmax.f32 %v3455, 0.0
  %v3481 = vmax.f32 %v3456, 0.0
  %v3482 = vmax.f32 %v3457, 0.0
  %v3483 = vmax.f32 %v3458, 0.0
  %v3484 = vmax.f32 %v3459, 0.0
  %v3485 = vmax.f32 %v3460, 0.0
  %v3486 = vmax.f32 %v3461, 0.0
  %v3487 = vmax.f32 %v3462, 0.0
  %v3488 = vmax.f32 %v3463, 0.0
  %v3489 = vmax.f32 %v3464, 0.0
  %v3490 = vmax.f32 %v3465, 0.0
  %v3491 = vmax.f32 %v3466, 0.0
  %v3492 = vmax.f32 %v3467, 0.0
  %v3493 = vmax.f32 %v3468, 0.0
  %v3494 = vmax.f32 %v3469, 0.0
  %v3495 = vmax.f32 %v3470, 0.0
  %v3496 = vmax.f32 %v3471, 0.0
  %v3497 = vmax.f32 %v3472, 0.0
  %v3498 = vmax.f32 %v3473, 0.0
  %v3499 = vmax.f32 %v3474, 0.0
  %v3500 = vmax.f32 %v3475, 0.0
  %v3501 = vmax.f32 %v3476, 0.0
  %v3502 = vmax.f32 %v3477, 0.0
  %v3503 = vmax.f32 %v3478, 0.0
  %v3504 = vmax.f32 %v3479, 0.0
  %3506 = vrot.lane.b32.xlu0 %v3481, 32
  %v3507 = vpop.permute.xlu0 %3506
  %3510 = vrot.lane.b32.xlu0 %v3482, 64
  %v3511 = vpop.permute.xlu0 %3510
  %3514 = vrot.lane.b32.xlu0 %v3483, 96
  %v3515 = vpop.permute.xlu0 %3514
  %3518 = vrot.lane.b32.xlu0 %v3485, 32
  %v3519 = vpop.permute.xlu0 %3518
  %3522 = vrot.lane.b32.xlu0 %v3486, 64
  %v3523 = vpop.permute.xlu0 %3522
  %3526 = vrot.lane.b32.xlu0 %v3487, 96
  %v3527 = vpop.permute.xlu0 %3526
  %3530 = vrot.lane.b32.xlu0 %v3489, 32
  %v3531 = vpop.permute.xlu0 %3530
  %3534 = vrot.lane.b32.xlu0 %v3490, 64
  %v3535 = vpop.permute.xlu0 %3534
  %3538 = vrot.lane.b32.xlu0 %v3491, 96
  %v3539 = vpop.permute.xlu0 %3538
  %3542 = vrot.lane.b32.xlu0 %v3493, 32
  %v3543 = vpop.permute.xlu0 %3542
  %3546 = vrot.lane.b32.xlu0 %v3494, 64
  %v3547 = vpop.permute.xlu0 %3546
  %3550 = vrot.lane.b32.xlu0 %v3495, 96
  %v3551 = vpop.permute.xlu0 %3550
  %vm3553 = vcmask 261120
  %v3554 = vsel %vm3553, %v3480, %v3507
  %vm3555 = vcmask 523264
  %v3556 = vsel %vm3555, %v3554, %v3511
  %vm3557 = vcmask 785408
  %v3558 = vsel %vm3557, %v3556, %v3515
  %v3559 = vsel %vm3553, %v3484, %v3519
  %v3560 = vsel %vm3555, %v3559, %v3523
  %v3561 = vsel %vm3557, %v3560, %v3527
  %v3562 = vsel %vm3553, %v3488, %v3531
  %v3563 = vsel %vm3555, %v3562, %v3535
  %v3564 = vsel %vm3557, %v3563, %v3539
  %v3565 = vsel %vm3553, %v3492, %v3543
  %v3566 = vsel %vm3555, %v3565, %v3547
  %v3567 = vsel %vm3557, %v3566, %v3551
  %3569 = vrot.lane.b32.xlu0 %v3497, 32
  %v3570 = vpop.permute.xlu0 %3569
  %3573 = vrot.lane.b32.xlu0 %v3498, 64
  %v3574 = vpop.permute.xlu0 %3573
  %3577 = vrot.lane.b32.xlu0 %v3499, 96
  %v3578 = vpop.permute.xlu0 %3577
  %3581 = vrot.lane.b32.xlu0 %v3501, 32
  %v3582 = vpop.permute.xlu0 %3581
  %3585 = vrot.lane.b32.xlu0 %v3502, 64
  %v3586 = vpop.permute.xlu0 %3585
  %3589 = vrot.lane.b32.xlu0 %v3503, 96
  %v3590 = vpop.permute.xlu0 %3589
  %v3592 = vsel %vm3553, %v3496, %v3570
  %v3593 = vsel %vm3555, %v3592, %v3574
  %v3594 = vsel %vm3557, %v3593, %v3578
  %v3595 = vsel %vm3553, %v3500, %v3582
  %v3596 = vsel %vm3555, %v3595, %v3586
  %v3597 = vsel %vm3557, %v3596, %v3590
  %v3598 = vpack.c.bf16 %v3558, %v3558
  %v3599 = vpack.c.bf16 %v3561, %v3561
  %v3600 = vpack.c.bf16 %v3564, %v3564
  %v3601 = vpack.c.bf16 %v3567, %v3567
  %v3602 = vpack.c.bf16 %v3594, %v3594
  %v3603 = vpack.c.bf16 %v3597, %v3597
  %v3604 = vpack.c.bf16 %v3504, %v3504
  %v3605 = vld [vmem:[%s5] sm:$0xf]
  %v3606 = vld [vmem:[%s5 + $0x4] sm:$0xf]
  %v3607 = vld [vmem:[%s5 + $0x8] sm:$0xf]
  %v3608 = vld [vmem:[%s5 + $0xc] sm:$0xf]
  %v3609 = vld [vmem:[%s5 + $0x10] sm:$0xf]
  %v3610 = vld [vmem:[%s5 + $0x14] sm:$0xf]
  %v3611 = vld [vmem:[%s5 + $0x18] sm:$0xf]
  %v3612 = vld [vmem:[%s5 + $0x1c] sm:$0xf]
  %v3613 = vld [vmem:[%s5 + $0x20] sm:$0xf]
  %v3614 = vld [vmem:[%s5 + $0x24] sm:$0xf]
  %v3615 = vld [vmem:[%s5 + $0x28] sm:$0xf]
  %v3616 = vld [vmem:[%s5 + $0x2c] sm:$0xf]
  %v3617 = vld [vmem:[%s5 + $0x30] sm:$0xf]
  %v3618 = vld [vmem:[%s5 + $0x34] sm:$0xf]
  %v3619 = vld [vmem:[%s5 + $0x38] sm:$0xf]
  %v3620 = vld [vmem:[%s5 + $0x3c] sm:$0xf]
  %v3621 = vld [vmem:[%s5 + $0x40] sm:$0xf]
  %v3622 = vld [vmem:[%s5 + $0x44] sm:$0xf]
  %v3623 = vld [vmem:[%s5 + $0x48] sm:$0xf]
  %v3624 = vld [vmem:[%s5 + $0x4c] sm:$0xf]
  %v3625 = vld [vmem:[%s5 + $0x50] sm:$0xf]
  %v3626 = vld [vmem:[%s5 + $0x54] sm:$0xf]
  %v3627 = vld [vmem:[%s5 + $0x58] sm:$0xf]
  %v3628 = vld [vmem:[%s5 + $0x5c] sm:$0xf]
  %v3629 = vld [vmem:[%s5 + $0x60] sm:$0xf]
  %v3630 = vld [vmem:[%s5 + $0x64] sm:$0xf]
  %v3631 = vld [vmem:[%s5 + $0x68] sm:$0xf]
  %v3632 = vld [vmem:[%s5 + $0x6c] sm:$0xf]
  %v3633 = vld [vmem:[%s5 + $0x70] sm:$0xf]
  %v3634 = vld [vmem:[%s5 + $0x74] sm:$0xf]
  %v3635 = vld [vmem:[%s5 + $0x78] sm:$0xf]
  %v3636 = vld [vmem:[%s5 + $0x7c] sm:$0xf]
  %v3637 = vld [vmem:[%s5 + $0x80] sm:$0xf]
  %v3638 = vld [vmem:[%s5 + $0x84] sm:$0xf]
  %v3639 = vld [vmem:[%s5 + $0x88] sm:$0xf]
  %v3640 = vld [vmem:[%s5 + $0x8c] sm:$0xf]
  %v3641 = vld [vmem:[%s5 + $0x90] sm:$0xf]
  %v3642 = vld [vmem:[%s5 + $0x94] sm:$0xf]
  %v3643 = vld [vmem:[%s5 + $0x98] sm:$0xf]
  %v3644 = vld [vmem:[%s5 + $0x9c] sm:$0xf]
  %v3645 = vld [vmem:[%s5 + $0xa0] sm:$0xf]
  %v3646 = vld [vmem:[%s5 + $0xa4] sm:$0xf]
  %v3647 = vld [vmem:[%s5 + $0xa8] sm:$0xf]
  %v3648 = vld [vmem:[%s5 + $0xac] sm:$0xf]
  %v3649 = vld [vmem:[%s5 + $0xb0] sm:$0xf]
  %v3650 = vld [vmem:[%s5 + $0xb4] sm:$0xf]
  %v3651 = vld [vmem:[%s5 + $0xb8] sm:$0xf]
  %v3652 = vld [vmem:[%s5 + $0xbc] sm:$0xf]
  %v3653 = vld [vmem:[%s5 + $0xc0] sm:$0xf]
  %v3654 = vld [vmem:[%s5 + $0xc4] sm:$0xf]
  %v3655 = vld [vmem:[%s5 + $0xc8] sm:$0xf]
  %v3656 = vld [vmem:[%s5 + $0xcc] sm:$0xf]
  %v3657 = vld [vmem:[%s5 + $0xd0] sm:$0xf]
  %v3658 = vld [vmem:[%s5 + $0xd4] sm:$0xf]
  %v3659 = vld [vmem:[%s5 + $0xd8] sm:$0xf]
  %v3660 = vld [vmem:[%s5 + $0xdc] sm:$0xf]
  %v3661 = vld [vmem:[%s5 + $0xe0] sm:$0xf]
  %v3662 = vld [vmem:[%s5 + $0xe4] sm:$0xf]
  %v3663 = vld [vmem:[%s5 + $0xe8] sm:$0xf]
  %v3664 = vld [vmem:[%s5 + $0xec] sm:$0xf]
  %v3665 = vld [vmem:[%s5 + $0xf0] sm:$0xf]
  %v3666 = vld [vmem:[%s5 + $0xf4] sm:$0xf]
  %v3667 = vld [vmem:[%s5 + $0xf8] sm:$0xf]
  %v3668 = vld [vmem:[%s5 + $0xfc] sm:$0xf]
  %v3669 = vld [vmem:[%s5 + $0x100] sm:$0xf]
  %v3670 = vld [vmem:[%s5 + $0x104] sm:$0xf]
  %v3671 = vld [vmem:[%s5 + $0x108] sm:$0xf]
  %v3672 = vld [vmem:[%s5 + $0x10c] sm:$0xf]
  %v3673 = vld [vmem:[%s5 + $0x110] sm:$0xf]
  %v3674 = vld [vmem:[%s5 + $0x114] sm:$0xf]
  %v3675 = vld [vmem:[%s5 + $0x118] sm:$0xf]
  %v3676 = vld [vmem:[%s5 + $0x11c] sm:$0xf]
  %v3677 = vld [vmem:[%s5 + $0x120] sm:$0xf]
  %v3678 = vld [vmem:[%s5 + $0x124] sm:$0xf]
  %v3679 = vld [vmem:[%s5 + $0x128] sm:$0xf]
  %v3680 = vld [vmem:[%s5 + $0x12c] sm:$0xf]
  %v3681 = vld [vmem:[%s5 + $0x130] sm:$0xf]
  %v3682 = vld [vmem:[%s5 + $0x134] sm:$0xf]
  %v3683 = vld [vmem:[%s5 + $0x138] sm:$0xf]
  %v3684 = vld [vmem:[%s5 + $0x13c] sm:$0xf]
  %v3685 = vld [vmem:[%s5 + $0x140] sm:$0xf]
  %v3686 = vld [vmem:[%s5 + $0x144] sm:$0xf]
  %v3687 = vld [vmem:[%s5 + $0x148] sm:$0xf]
  %v3688 = vld [vmem:[%s5 + $0x14c] sm:$0xf]
  %v3689 = vld [vmem:[%s5 + $0x150] sm:$0xf]
  %v3690 = vld [vmem:[%s5 + $0x154] sm:$0xf]
  %v3691 = vld [vmem:[%s5 + $0x158] sm:$0xf]
  %v3692 = vld [vmem:[%s5 + $0x15c] sm:$0xf]
  %v3693 = vld [vmem:[%s5 + $0x160] sm:$0xf]
  %v3694 = vld [vmem:[%s5 + $0x164] sm:$0xf]
  %v3695 = vld [vmem:[%s5 + $0x168] sm:$0xf]
  %v3696 = vld [vmem:[%s5 + $0x16c] sm:$0xf]
  %v3697 = vld [vmem:[%s5 + $0x170] sm:$0xf]
  %v3698 = vld [vmem:[%s5 + $0x174] sm:$0xf]
  %v3699 = vld [vmem:[%s5 + $0x178] sm:$0xf]
  %v3700 = vld [vmem:[%s5 + $0x17c] sm:$0xf]
  %v3701 = vld [vmem:[%s5 + $0x180] sm:$0xf]
  %v3702 = vld [vmem:[%s5 + $0x184] sm:$0xf]
  %v3703 = vld [vmem:[%s5 + $0x188] sm:$0xf]
  %v3704 = vld [vmem:[%s5 + $0x18c] sm:$0xf]
  %v3705 = vld [vmem:[%s6] sm:$0x1]
  %v3707 = vlaneseq
  %v3708 = vshrl.u32 %v3707, 7
  %v3709 = vsub.s32 0, %v3708
  %v3710 = vrot.slane %v3705, %v3709
  %v3812 = vunpack.c.l.b16 %v3605
  %v3813 = vunpack.c.l.b16 %v3606
  %v3814 = vunpack.c.l.b16 %v3607
  %v3815 = vunpack.c.l.b16 %v3608
  %v3816 = vunpack.c.l.b16 %v3609
  %v3817 = vunpack.c.l.b16 %v3610
  %v3818 = vunpack.c.l.b16 %v3611
  %v3819 = vunpack.c.l.b16 %v3612
  %v3820 = vunpack.c.l.b16 %v3613
  %v3821 = vunpack.c.l.b16 %v3614
  %v3822 = vunpack.c.l.b16 %v3615
  %v3823 = vunpack.c.l.b16 %v3616
  %v3824 = vunpack.c.l.b16 %v3617
  %v3825 = vunpack.c.l.b16 %v3618
  %v3826 = vunpack.c.l.b16 %v3619
  %v3827 = vunpack.c.l.b16 %v3620
  %v3828 = vunpack.c.l.b16 %v3621
  %v3829 = vunpack.c.l.b16 %v3622
  %v3830 = vunpack.c.l.b16 %v3623
  %v3831 = vunpack.c.l.b16 %v3624
  %v3832 = vunpack.c.l.b16 %v3625
  %v3833 = vunpack.c.l.b16 %v3626
  %v3834 = vunpack.c.l.b16 %v3627
  %v3835 = vunpack.c.l.b16 %v3628
  %v3836 = vunpack.c.l.b16 %v3629
  %v3837 = vunpack.c.l.b16 %v3630
  %v3838 = vunpack.c.l.b16 %v3631
  %v3839 = vunpack.c.l.b16 %v3632
  %v3840 = vunpack.c.l.b16 %v3633
  %v3841 = vunpack.c.l.b16 %v3634
  %v3842 = vunpack.c.l.b16 %v3635
  %v3843 = vunpack.c.l.b16 %v3636
  %v3844 = vunpack.c.l.b16 %v3637
  %v3845 = vunpack.c.l.b16 %v3638
  %v3846 = vunpack.c.l.b16 %v3639
  %v3847 = vunpack.c.l.b16 %v3640
  %v3848 = vunpack.c.l.b16 %v3641
  %v3849 = vunpack.c.l.b16 %v3642
  %v3850 = vunpack.c.l.b16 %v3643
  %v3851 = vunpack.c.l.b16 %v3644
  %v3852 = vunpack.c.l.b16 %v3645
  %v3853 = vunpack.c.l.b16 %v3646
  %v3854 = vunpack.c.l.b16 %v3647
  %v3855 = vunpack.c.l.b16 %v3648
  %v3856 = vunpack.c.l.b16 %v3649
  %v3857 = vunpack.c.l.b16 %v3650
  %v3858 = vunpack.c.l.b16 %v3651
  %v3859 = vunpack.c.l.b16 %v3652
  %v3860 = vunpack.c.l.b16 %v3653
  %v3861 = vunpack.c.l.b16 %v3654
  %v3862 = vunpack.c.l.b16 %v3655
  %v3863 = vunpack.c.l.b16 %v3656
  %v3864 = vunpack.c.l.b16 %v3657
  %v3865 = vunpack.c.l.b16 %v3658
  %v3866 = vunpack.c.l.b16 %v3659
  %v3867 = vunpack.c.l.b16 %v3660
  %v3868 = vunpack.c.l.b16 %v3661
  %v3869 = vunpack.c.l.b16 %v3662
  %v3870 = vunpack.c.l.b16 %v3663
  %v3871 = vunpack.c.l.b16 %v3664
  %v3872 = vunpack.c.l.b16 %v3665
  %v3873 = vunpack.c.l.b16 %v3666
  %v3874 = vunpack.c.l.b16 %v3667
  %v3875 = vunpack.c.l.b16 %v3668
  %v3876 = vunpack.c.l.b16 %v3669
  %v3877 = vunpack.c.l.b16 %v3670
  %v3878 = vunpack.c.l.b16 %v3671
  %v3879 = vunpack.c.l.b16 %v3672
  %v3880 = vunpack.c.l.b16 %v3673
  %v3881 = vunpack.c.l.b16 %v3674
  %v3882 = vunpack.c.l.b16 %v3675
  %v3883 = vunpack.c.l.b16 %v3676
  %v3884 = vunpack.c.l.b16 %v3677
  %v3885 = vunpack.c.l.b16 %v3678
  %v3886 = vunpack.c.l.b16 %v3679
  %v3887 = vunpack.c.l.b16 %v3680
  %v3888 = vunpack.c.l.b16 %v3681
  %v3889 = vunpack.c.l.b16 %v3682
  %v3890 = vunpack.c.l.b16 %v3683
  %v3891 = vunpack.c.l.b16 %v3684
  %v3892 = vunpack.c.l.b16 %v3685
  %v3893 = vunpack.c.l.b16 %v3686
  %v3894 = vunpack.c.l.b16 %v3687
  %v3895 = vunpack.c.l.b16 %v3688
  %v3896 = vunpack.c.l.b16 %v3689
  %v3897 = vunpack.c.l.b16 %v3690
  %v3898 = vunpack.c.l.b16 %v3691
  %v3899 = vunpack.c.l.b16 %v3692
  %v3900 = vunpack.c.l.b16 %v3693
  %v3901 = vunpack.c.l.b16 %v3694
  %v3902 = vunpack.c.l.b16 %v3695
  %v3903 = vunpack.c.l.b16 %v3696
  %v3904 = vunpack.c.l.b16 %v3697
  %v3905 = vunpack.c.l.b16 %v3698
  %v3906 = vunpack.c.l.b16 %v3699
  %v3907 = vunpack.c.l.b16 %v3700
  %v3908 = vunpack.c.l.b16 %v3701
  %v3909 = vunpack.c.l.b16 %v3702
  %v3910 = vunpack.c.l.b16 %v3703
  %v3911 = vunpack.c.l.b16 %v3704
  %v3912 = vpack.c.b16 %v3813, %v3812
  %v3913 = vpack.c.b16 %v3815, %v3814
  %v3914 = vpack.c.b16 %v3817, %v3816
  %v3915 = vpack.c.b16 %v3819, %v3818
  %v3916 = vpack.c.b16 %v3821, %v3820
  %v3917 = vpack.c.b16 %v3823, %v3822
  %v3918 = vpack.c.b16 %v3825, %v3824
  %v3919 = vpack.c.b16 %v3827, %v3826
  %v3920 = vpack.c.b16 %v3829, %v3828
  %v3921 = vpack.c.b16 %v3831, %v3830
  %v3922 = vpack.c.b16 %v3833, %v3832
  %v3923 = vpack.c.b16 %v3835, %v3834
  %v3924 = vpack.c.b16 %v3837, %v3836
  %v3925 = vpack.c.b16 %v3839, %v3838
  %v3926 = vpack.c.b16 %v3841, %v3840
  %v3927 = vpack.c.b16 %v3843, %v3842
  %v3928 = vpack.c.b16 %v3845, %v3844
  %v3929 = vpack.c.b16 %v3847, %v3846
  %v3930 = vpack.c.b16 %v3849, %v3848
  %v3931 = vpack.c.b16 %v3851, %v3850
  %v3932 = vpack.c.b16 %v3853, %v3852
  %v3933 = vpack.c.b16 %v3855, %v3854
  %v3934 = vpack.c.b16 %v3857, %v3856
  %v3935 = vpack.c.b16 %v3859, %v3858
  %v3936 = vpack.c.b16 %v3861, %v3860
  %v3937 = vpack.c.b16 %v3863, %v3862
  %v3938 = vpack.c.b16 %v3865, %v3864
  %v3939 = vpack.c.b16 %v3867, %v3866
  %v3940 = vpack.c.b16 %v3869, %v3868
  %v3941 = vpack.c.b16 %v3871, %v3870
  %v3942 = vpack.c.b16 %v3873, %v3872
  %v3943 = vpack.c.b16 %v3875, %v3874
  %v3944 = vpack.c.b16 %v3877, %v3876
  %v3945 = vpack.c.b16 %v3879, %v3878
  %v3946 = vpack.c.b16 %v3881, %v3880
  %v3947 = vpack.c.b16 %v3883, %v3882
  %v3948 = vpack.c.b16 %v3885, %v3884
  %v3949 = vpack.c.b16 %v3887, %v3886
  %v3950 = vpack.c.b16 %v3889, %v3888
  %v3951 = vpack.c.b16 %v3891, %v3890
  %v3952 = vpack.c.b16 %v3893, %v3892
  %v3953 = vpack.c.b16 %v3895, %v3894
  %v3954 = vpack.c.b16 %v3897, %v3896
  %v3955 = vpack.c.b16 %v3899, %v3898
  %v3956 = vpack.c.b16 %v3901, %v3900
  %v3957 = vpack.c.b16 %v3903, %v3902
  %v3958 = vpack.c.b16 %v3905, %v3904
  %v3959 = vpack.c.b16 %v3907, %v3906
  %v3960 = vpack.c.b16 %v3909, %v3908
  %v3961 = vpack.c.b16 %v3911, %v3910
  %v4013 = vsel %vm3553, %v3604, 0
  %4015 = vmatprep.subr.bf16.mxu0 0
  %4016 = vmatpush1.bf16.msra.mxu0 %v3912
  %4017 = vmatprep.subr.bf16.mxu0 0
  %4018 = vmatpush1.bf16.msra.mxu0 %v3913
  %4019 = vmatprep.subr.bf16.mxu0 0
  %4020 = vmatpush1.bf16.msra.mxu0 %v3914
  %4021 = vmatprep.subr.bf16.mxu0 0
  %4022 = vmatpush1.bf16.msra.mxu0 %v3915
  %4023 = vmatprep.subr.bf16.mxu0 0
  %4024 = vmatpush1.bf16.msra.mxu0 %v3916
  %4025 = vmatprep.subr.bf16.mxu0 0
  %4026 = vmatpush1.bf16.msra.mxu0 %v3917
  %4027 = vmatprep.subr.bf16.mxu0 0
  %4028 = vmatpush1.bf16.msra.mxu0 %v3918
  %4029 = vmatprep.subr.bf16.mxu0 0
  %4030 = vmatpush1.bf16.msra.mxu0 %v3919
  %4031 = vmatprep.subr.bf16.mxu0 0
  %4032 = vmatpush1.bf16.msra.mxu0 %v3920
  %4033 = vmatprep.subr.bf16.mxu0 0
  %4034 = vmatpush1.bf16.msra.mxu0 %v3921
  %4035 = vmatprep.subr.bf16.mxu0 0
  %4036 = vmatpush1.bf16.msra.mxu0 %v3922
  %4037 = vmatprep.subr.bf16.mxu0 0
  %4038 = vmatpush1.bf16.msra.mxu0 %v3923
  %4039 = vmatprep.subr.bf16.mxu0 0
  %4040 = vmatpush1.bf16.msra.mxu0 %v3924
  %4041 = vmatprep.subr.bf16.mxu0 0
  %4042 = vmatpush1.bf16.msra.mxu0 %v3925
  %4043 = vmatprep.subr.bf16.mxu0 0
  %4044 = vmatpush1.bf16.msra.mxu0 %v3926
  %4045 = vmatprep.subr.bf16.mxu0 0
  %4046 = vmatpush1.bf16.msra.mxu0 %v3927
  %4047 = vmatprep.mubr.bf16.mxu0 %v3599
  %4048 = vmatmul.mubr.bf16.gmra.mrb[0].mxu0 %v3598
  %v4049 = vpop.f32.mrb[0].mxu0
  %v4050 = vadd.f32 %v3710, %v4049
  %v4051 = vpop.f32.mrb[0].mxu0
  %v4052 = vpop.f32.mrb[0].mxu0
  %v4053 = vpop.f32.mrb[0].mxu0
  %4054 = vdwg.mxu0
  %4055 = vmatprep.subr.bf16.mxu0 0
  %4056 = vmatpush1.bf16.msra.mxu0 %v3928
  %4057 = vmatprep.subr.bf16.mxu0 0
  %4058 = vmatpush1.bf16.msra.mxu0 %v3929
  %4059 = vmatprep.subr.bf16.mxu0 0
  %4060 = vmatpush1.bf16.msra.mxu0 %v3930
  %4061 = vmatprep.subr.bf16.mxu0 0
  %4062 = vmatpush1.bf16.msra.mxu0 %v3931
  %4063 = vmatprep.subr.bf16.mxu0 0
  %4064 = vmatpush1.bf16.msra.mxu0 %v3932
  %4065 = vmatprep.subr.bf16.mxu0 0
  %4066 = vmatpush1.bf16.msra.mxu0 %v3933
  %4067 = vmatprep.subr.bf16.mxu0 0
  %4068 = vmatpush1.bf16.msra.mxu0 %v3934
  %4069 = vmatprep.subr.bf16.mxu0 0
  %4070 = vmatpush1.bf16.msra.mxu0 %v3935
  %4071 = vmatprep.subr.bf16.mxu0 0
  %4072 = vmatpush1.bf16.msra.mxu0 %v3936
  %4073 = vmatprep.subr.bf16.mxu0 0
  %4074 = vmatpush1.bf16.msra.mxu0 %v3937
  %4075 = vmatprep.subr.bf16.mxu0 0
  %4076 = vmatpush1.bf16.msra.mxu0 %v3938
  %4077 = vmatprep.subr.bf16.mxu0 0
  %4078 = vmatpush1.bf16.msra.mxu0 %v3939
  %4079 = vmatprep.subr.bf16.mxu0 0
  %4080 = vmatpush1.bf16.msra.mxu0 %v3940
  %4081 = vmatprep.subr.bf16.mxu0 0
  %4082 = vmatpush1.bf16.msra.mxu0 %v3941
  %4083 = vmatprep.subr.bf16.mxu0 0
  %4084 = vmatpush1.bf16.msra.mxu0 %v3942
  %4085 = vmatprep.subr.bf16.mxu0 0
  %4086 = vmatpush1.bf16.msra.mxu0 %v3943
  %4087 = vmatprep.mubr.bf16.mxu0 %v3601
  %4088 = vmatmul.mubr.bf16.gmra.mrb[0].mxu0 %v3600
  %v4089 = vpop.f32.mrb[0].mxu0
  %v4090 = vadd.f32 %v4050, %v4089
  %v4091 = vpop.f32.mrb[0].mxu0
  %v4092 = vpop.f32.mrb[0].mxu0
  %v4093 = vpop.f32.mrb[0].mxu0
  %4094 = vdwg.mxu0
  %4095 = vmatprep.subr.bf16.mxu0 0
  %4096 = vmatpush1.bf16.msra.mxu0 %v3944
  %4097 = vmatprep.subr.bf16.mxu0 0
  %4098 = vmatpush1.bf16.msra.mxu0 %v3945
  %4099 = vmatprep.subr.bf16.mxu0 0
  %4100 = vmatpush1.bf16.msra.mxu0 %v3946
  %4101 = vmatprep.subr.bf16.mxu0 0
  %4102 = vmatpush1.bf16.msra.mxu0 %v3947
  %4103 = vmatprep.subr.bf16.mxu0 0
  %4104 = vmatpush1.bf16.msra.mxu0 %v3948
  %4105 = vmatprep.subr.bf16.mxu0 0
  %4106 = vmatpush1.bf16.msra.mxu0 %v3949
  %4107 = vmatprep.subr.bf16.mxu0 0
  %4108 = vmatpush1.bf16.msra.mxu0 %v3950
  %4109 = vmatprep.subr.bf16.mxu0 0
  %4110 = vmatpush1.bf16.msra.mxu0 %v3951
  %4111 = vmatprep.subr.bf16.mxu0 0
  %4112 = vmatpush1.bf16.msra.mxu0 %v3952
  %4113 = vmatprep.subr.bf16.mxu0 0
  %4114 = vmatpush1.bf16.msra.mxu0 %v3953
  %4115 = vmatprep.subr.bf16.mxu0 0
  %4116 = vmatpush1.bf16.msra.mxu0 %v3954
  %4117 = vmatprep.subr.bf16.mxu0 0
  %4118 = vmatpush1.bf16.msra.mxu0 %v3955
  %4119 = vmatprep.subr.bf16.mxu0 0
  %4120 = vmatpush1.bf16.msra.mxu0 %v3956
  %4121 = vmatprep.subr.bf16.mxu0 0
  %4122 = vmatpush1.bf16.msra.mxu0 %v3957
  %4123 = vmatprep.subr.bf16.mxu0 0
  %4124 = vmatpush1.bf16.msra.mxu0 %v3958
  %4125 = vmatprep.subr.bf16.mxu0 0
  %4126 = vmatpush1.bf16.msra.mxu0 %v3959
  %4127 = vmatprep.mubr.bf16.mxu0 %v3603
  %4128 = vmatmul.mubr.bf16.gmra.mrb[0].mxu0 %v3602
  %v4129 = vpop.f32.mrb[0].mxu0
  %v4130 = vadd.f32 %v4090, %v4129
  %v4131 = vpop.f32.mrb[0].mxu0
  %v4132 = vpop.f32.mrb[0].mxu0
  %v4133 = vpop.f32.mrb[0].mxu0
  %4134 = vdwg.mxu0
  %4135 = vmatprep.subr.bf16.mxu0 0
  %4136 = vmatpush1.bf16.msra.mxu0 %v3960
  %4137 = vmatprep.subr.bf16.mxu0 0
  %4138 = vmatpush1.bf16.msra.mxu0 %v3961
  %4139 = vmatprep.subr.bf16.mxu0 0
  %4140 = vmatpush1.bf16.msra.mxu0 0
  %4141 = vmatprep.subr.bf16.mxu0 0
  %4142 = vmatpush1.bf16.msra.mxu0 0
  %4143 = vmatprep.subr.bf16.mxu0 0
  %4144 = vmatpush1.bf16.msra.mxu0 0
  %4145 = vmatprep.subr.bf16.mxu0 0
  %4146 = vmatpush1.bf16.msra.mxu0 0
  %4147 = vmatprep.subr.bf16.mxu0 0
  %4148 = vmatpush1.bf16.msra.mxu0 0
  %4149 = vmatprep.subr.bf16.mxu0 0
  %4150 = vmatpush1.bf16.msra.mxu0 0
  %4151 = vmatprep.subr.bf16.mxu0 0
  %4152 = vmatpush1.bf16.msra.mxu0 0
  %4153 = vmatprep.subr.bf16.mxu0 0
  %4154 = vmatpush1.bf16.msra.mxu0 0
  %4155 = vmatprep.subr.bf16.mxu0 0
  %4156 = vmatpush1.bf16.msra.mxu0 0
  %4157 = vmatprep.subr.bf16.mxu0 0
  %4158 = vmatpush1.bf16.msra.mxu0 0
  %4159 = vmatprep.subr.bf16.mxu0 0
  %4160 = vmatpush1.bf16.msra.mxu0 0
  %4161 = vmatprep.subr.bf16.mxu0 0
  %4162 = vmatpush1.bf16.msra.mxu0 0
  %4163 = vmatprep.subr.bf16.mxu0 0
  %4164 = vmatpush1.bf16.msra.mxu0 0
  %4165 = vmatprep.subr.bf16.mxu0 0
  %4166 = vmatpush1.bf16.msra.mxu0 0
  %4167 = vmatprep.mubr.bf16.mxu0 0
  %4168 = vmatmul.mubr.bf16.gmra.mrb[0].mxu0 %v4013
  %v4169 = vpop.f32.mrb[0].mxu0
  %v4170 = vadd.f32 %v4130, %v4169
  %v4171 = vpop.f32.mrb[0].mxu0
  %v4172 = vpop.f32.mrb[0].mxu0
  %v4173 = vpop.f32.mrb[0].mxu0
  %4174 = vdwg.mxu0
  %v4175 = vmax.f32 %v4170, 0.0
  %v4176 = vpack.c.bf16 %v4175, %v4175
  %v4177 = vld [vmem:[%s7] sm:$0xf]
  %v4178 = vld [vmem:[%s7 + $0x4] sm:$0xf]
  %v4179 = vld [vmem:[%s7 + $0x8] sm:$0xf]
  %v4180 = vld [vmem:[%s7 + $0xc] sm:$0xf]
  %v4181 = vld [vmem:[%s8] sm:$0x1]
  %v4183 = vlaneseq
  %v4184 = vshrl.u32 %v4183, 7
  %v4185 = vsub.s32 0, %v4184
  %v4186 = vrot.slane %v4181, %v4185
  %v4192 = vunpack.c.l.b16 %v4177
  %v4193 = vunpack.c.l.b16 %v4178
  %v4194 = vunpack.c.l.b16 %v4179
  %v4195 = vunpack.c.l.b16 %v4180
  %v4196 = vpack.c.b16 %v4193, %v4192
  %v4197 = vpack.c.b16 %v4195, %v4194
  %v4201 = vsel %vm3553, %v4176, 0
  %4203 = vmatprep.subr.bf16.mxu0 0
  %4204 = vmatpush1.bf16.msra.mxu0 %v4196
  %4205 = vmatprep.subr.bf16.mxu0 0
  %4206 = vmatpush1.bf16.msra.mxu0 %v4197
  %4207 = vmatprep.subr.bf16.mxu0 0
  %4208 = vmatpush1.bf16.msra.mxu0 0
  %4209 = vmatprep.subr.bf16.mxu0 0
  %4210 = vmatpush1.bf16.msra.mxu0 0
  %4211 = vmatprep.subr.bf16.mxu0 0
  %4212 = vmatpush1.bf16.msra.mxu0 0
  %4213 = vmatprep.subr.bf16.mxu0 0
  %4214 = vmatpush1.bf16.msra.mxu0 0
  %4215 = vmatprep.subr.bf16.mxu0 0
  %4216 = vmatpush1.bf16.msra.mxu0 0
  %4217 = vmatprep.subr.bf16.mxu0 0
  %4218 = vmatpush1.bf16.msra.mxu0 0
  %4219 = vmatprep.subr.bf16.mxu0 0
  %4220 = vmatpush1.bf16.msra.mxu0 0
  %4221 = vmatprep.subr.bf16.mxu0 0
  %4222 = vmatpush1.bf16.msra.mxu0 0
  %4223 = vmatprep.subr.bf16.mxu0 0
  %4224 = vmatpush1.bf16.msra.mxu0 0
  %4225 = vmatprep.subr.bf16.mxu0 0
  %4226 = vmatpush1.bf16.msra.mxu0 0
  %4227 = vmatprep.subr.bf16.mxu0 0
  %4228 = vmatpush1.bf16.msra.mxu0 0
  %4229 = vmatprep.subr.bf16.mxu0 0
  %4230 = vmatpush1.bf16.msra.mxu0 0
  %4231 = vmatprep.subr.bf16.mxu0 0
  %4232 = vmatpush1.bf16.msra.mxu0 0
  %4233 = vmatprep.subr.bf16.mxu0 0
  %4234 = vmatpush1.bf16.msra.mxu0 0
  %4235 = vmatprep.mubr.bf16.mxu0 0
  %4236 = vmatmul.mubr.bf16.gmra.mrb[0].mxu0 %v4201
  %v4237 = vpop.f32.mrb[0].mxu0
  %v4238 = vadd.f32 %v4186, %v4237
  %v4239 = vpop.f32.mrb[0].mxu0
  %v4240 = vpop.f32.mrb[0].mxu0
  %v4241 = vpop.f32.mrb[0].mxu0
  %4242 = vdwg.mxu0
  %4243 = vst [vmem:[%s9] sm:$0xff] %v4238
  // Predicated region
  $region38: #{value_net_forward.1} parent=0 // pred_check
    _
  $region39: #{value_net_forward.1} parent=0 // pred_check_branch
    %4245 = sbr.rel (0) target = $region41
  $region40: #{value_net_forward.1} parent=0 // pred_region
    _
  $region41: #{value_net_forward.1} parent=0 // pred_fallthru
    _
  // Predicated region
  $region42: #{value_net_forward.1} parent=0 // pred_check
    _
  $region43: #{value_net_forward.1} parent=0 // pred_check_branch
    %4247 = sbr.rel (0) target = $region45
  $region44: #{value_net_forward.1} parent=0 // pred_region
    _
  $region45: #{value_net_forward.1} parent=0 // pred_fallthru
    _

</llo_original>
